<compile_context>
chip_gen: v5e
topology: v5e:2x2
jax: 0.10.0
libtpu: 0.0.40
codegen_flags: <defaults>
</compile_context>

<pallas_src>
import functools

import numpy as np
import jax
import jax.numpy as jnp
from jax import lax
from jax.experimental import pallas as pl
from jax.experimental.pallas import tpu as pltpu


MXU_DTYPE = jnp.bfloat16      # MXU input dtype; accumulation is always f32.
FEAT_DTYPE = jnp.bfloat16     # per-window (kv, sum-k) features, read 9x in B.
S_ROWS = 16                   # sublane-aligned rows storing the per-window sum(k)


def _round_up(x, m):
    return (x + m - 1) // m * m


# ----------------------------------------------------------------------------
# Kernel A:  per-group (G windows)  x-gather DMA + qkv linear + relu +
#            per-window block-diagonal k^T v  and  sum(k)
#   grid = (M_pad // G,), all output blocks disjoint -> "parallel"
# ----------------------------------------------------------------------------
def _win_qkv_kv_kernel(off_ref, cnt_ref, x_hbm, wqkv_ref, bqkv_ref, mask_ref,
                       q_ref, feat_ref, xbuf, sem, *, c, cin, p_max, g_wins):
    base = pl.program_id(0) * g_wins

    # Gather this group's windows straight out of the (N + p_max, Cin) point
    # buffer in HBM; all G copies are in flight together and the previous grid
    # step's outputs are written back by the normal Pallas pipeline meanwhile.
    copies = []
    for g in range(g_wins):
        off = off_ref[base + g]
        copies.append(pltpu.make_async_copy(
            x_hbm.at[pl.ds(off, p_max)], xbuf.at[g], sem.at[g]))
    for cp in copies:
        cp.start()
    for cp in copies:
        cp.wait()

    # One big qkv matmul for the whole group (fills MXU rows).
    x = xbuf[...].reshape(g_wins * p_max, cin).astype(MXU_DTYPE)
    qkv = (jnp.dot(x, wqkv_ref[...], preferred_element_type=jnp.float32)
           + bqkv_ref[...])                                      # (G*P, 3C) f32
    q = jax.nn.relu(qkv[:, :c]).reshape(g_wins, p_max, c)
    k = jax.nn.relu(qkv[:, c:2 * c]).reshape(g_wins, p_max, c)
    v = qkv[:, 2 * c:].reshape(g_wins, p_max, c)

    # Zero rows past each window's count: k -> kv/s stay exact; q -> padded
    # rows produce finite zeros downstream instead of garbage.
    rows = lax.broadcasted_iota(jnp.int32, (g_wins, p_max, 1), 1)
    valid = rows < cnt_ref[...].reshape(g_wins, 1, 1)
    q = jnp.where(valid, q, 0.0)
    k = jnp.where(valid, k, 0.0)

    # Per-window kv[a, b] = sum_p k[p, a] * v[p, b]  (batched MXU matmul).
    # The per-head block-diagonal mask is applied here (commutes with the
    # linear 3x3 pool) so kernel B never needs it for kv.
    kv = jnp.einsum("gpc,gpe->gce", k.astype(MXU_DTYPE), v.astype(MXU_DTYPE),
                    preferred_element_type=jnp.float32)           # (G, C, C)
    kv = kv * mask_ref[...]
    s = jnp.sum(k, axis=1, keepdims=True)                         # (G, 1, C)

    feat_ref[:, :c, :] = kv.astype(FEAT_DTYPE)
    feat_ref[:, c:, :] = jnp.broadcast_to(
        s, (g_wins, S_ROWS, c)).astype(FEAT_DTYPE)
    q_ref[...] = q.astype(MXU_DTYPE)


def fused_window_kv(x_src, offsets_pad, counts_2d, wqkv, bqkv, head_mask,
                    *, c, p_max, g_wins):
    m_pad = counts_2d.shape[0]
    cin = x_src.shape[1]
    kernel = functools.partial(_win_qkv_kv_kernel, c=c, cin=cin,
                               p_max=p_max, g_wins=g_wins)
    return pl.pallas_call(
        kernel,
        out_shape=(jax.ShapeDtypeStruct((m_pad, p_max, c), MXU_DTYPE),
                   jax.ShapeDtypeStruct((m_pad, c + S_ROWS, c), FEAT_DTYPE)),
        grid_spec=pltpu.PrefetchScalarGridSpec(
            num_scalar_prefetch=1,                 # offsets (SMEM)
            grid=(m_pad // g_wins,),
            in_specs=[
                pl.BlockSpec((g_wins, 1), lambda i, offs: (i, 0)),   # counts
                pl.BlockSpec(memory_space=pl.ANY),                   # x in HBM
                pl.BlockSpec((cin, 3 * c), lambda i, offs: (0, 0)),  # W_qkv
                pl.BlockSpec((1, 3 * c), lambda i, offs: (0, 0)),    # b_qkv
                pl.BlockSpec((c, c), lambda i, offs: (0, 0)),        # head mask
            ],
            out_specs=[
                pl.BlockSpec((g_wins, p_max, c), lambda i, offs: (i, 0, 0)),
                pl.BlockSpec((g_wins, c + S_ROWS, c),
                             lambda i, offs: (i, 0, 0)),
            ],
            scratch_shapes=[pltpu.VMEM((g_wins, p_max, cin), jnp.float32),
                            pltpu.SemaphoreType.DMA((g_wins,))],
        ),
        compiler_params=pltpu.CompilerParams(
            dimension_semantics=("parallel",)),
    )(offsets_pad, counts_2d, x_src, wqkv, bqkv, head_mask)


# ----------------------------------------------------------------------------
# Kernel B:  3x3 sparse sum-pool (9-neighbour gather, summed in one step) +
#            q @ kv + per-head normalisation + output projection
#   grid = (M,), one step per window, all output blocks disjoint -> "parallel"
# ----------------------------------------------------------------------------
def _win_pool_qc_proj_kernel(nbr_ref, q_ref, f0, f1, f2, f3, f4, f5, f6, f7,
                             f8, mask_ref, wproj_ref, bproj_ref, out_ref, *, c):
    del nbr_ref   # only used by the index_maps (data-dependent gather)

    # sparse SumPool2d(3, 1, 1): sum the 9 gathered neighbour features in f32.
    acc = f0[0].astype(jnp.float32)
    for fr in (f1, f2, f3, f4, f5, f6, f7, f8):
        acc = acc + fr[0].astype(jnp.float32)

    kv_bf = acc[:c, :].astype(MXU_DTYPE)        # pooled block-diag kv  (C, C)
    s = acc[c:c + 1, :]                         # pooled sum(k)         (1, C)

    q_bf = q_ref[0]                                              # (P, C) bf16
    y = jnp.dot(q_bf, kv_bf, preferred_element_type=jnp.float32)   # (P, C)

    # z[p, head(a)] = sum_{b in head(a)} q[p, b] * s[b]   (kept in f32)
    prod = q_bf.astype(jnp.float32) * s
    z = jnp.dot(prod, mask_ref[...], preferred_element_type=jnp.float32)

    yn = (y * pl.reciprocal(z + 1e-6, approx=True)).astype(MXU_DTYPE)
    out_ref[0] = (jnp.dot(yn, wproj_ref[...],
                          preferred_element_type=jnp.float32)
                  + bproj_ref[...])


def fused_pool_qc_proj(q_pad, feat, nbrs, head_mask, wproj, bproj,
                       *, c, p_max, m_real):
    def feat_spec(kk):
        return pl.BlockSpec((1, c + S_ROWS, c),
                            lambda i, nb, kk=kk: (nb[i, kk], 0, 0))

    kernel = functools.partial(_win_pool_qc_proj_kernel, c=c)
    return pl.pallas_call(
        kernel,
        out_shape=jax.ShapeDtypeStruct((m_real, p_max, c), jnp.float32),
        grid_spec=pltpu.PrefetchScalarGridSpec(
            num_scalar_prefetch=1,                 # neighbour table (SMEM)
            grid=(m_real,),
            in_specs=([pl.BlockSpec((1, p_max, c), lambda i, nb: (i, 0, 0))]
                      + [feat_spec(kk) for kk in range(9)]
                      + [pl.BlockSpec((c, c), lambda i, nb: (0, 0)),
                         pl.BlockSpec((c, c), lambda i, nb: (0, 0)),
                         pl.BlockSpec((1, c), lambda i, nb: (0, 0))]),
            out_specs=pl.BlockSpec((1, p_max, c), lambda i, nb: (i, 0, 0)),
        ),
        compiler_params=pltpu.CompilerParams(
            dimension_semantics=("parallel",)),
    )(nbrs, q_pad, *([feat] * 9), head_mask, wproj, bproj)


def build_neighbor_table(batch_win_coords, win_bev_shape, batch_size, num_wins):
    """(M, 9) table of 3x3 neighbour window indices; sentinel == num_wins
    (the first padded window, whose features are guaranteed zero)."""
    # TODO(synk): in the real model this comes from spconv's cached indice_dict.
    hbev, wbev = win_bev_shape
    grid = jnp.full((batch_size, hbev + 2, wbev + 2), num_wins, jnp.int32)
    grid = grid.at[batch_win_coords[:, 0],
                   batch_win_coords[:, 1] + 1,
                   batch_win_coords[:, 2] + 1].set(
        jnp.arange(num_wins, dtype=jnp.int32))
    cols = []
    for dy in (-1, 0, 1):
        for dx in (-1, 0, 1):
            cols.append(grid[batch_win_coords[:, 0],
                             batch_win_coords[:, 1] + 1 + dy,
                             batch_win_coords[:, 2] + 1 + dx])
    return jnp.stack(cols, axis=1)


# ----------------------------------------------------------------------------
# ScatterAttention forward (glue + kernels)
# ----------------------------------------------------------------------------
def scatter_attention_forward(params, x, offsets, counts, batch_win_inds,
                              batch_win_coords, win_bev_shape, batch_size,
                              indice_dict=None, *, num_heads, max_pts,
                              win_group=None):
    del indice_dict   # TODO(synk): spconv indice_dict caching not translated
    n, c = x.shape
    d = c // num_heads
    m_wins = offsets.shape[0]
    p_max = max(16, _round_up(int(max_pts), 16))     # bf16 sublane packing

    # group size: aim for ~256 MXU rows per qkv matmul, multiple of 8 windows
    if win_group is None:
        win_group = max(8, _round_up(max(1, 256 // p_max), 8))
    g_wins = win_group
    # >= m_wins + 1 so window index m_wins is a zero-count "sentinel" window
    m_pad = _round_up(m_wins + 1, g_wins)

    # x only needs p_max trailing rows of padding so every per-window DMA
    # (offset + p_max rows) stays in bounds; no (M, P, C) copy is built.
    x_src = jnp.concatenate([x, jnp.zeros((p_max, c), x.dtype)], axis=0)
    offsets_pad = jnp.concatenate(
        [offsets.astype(jnp.int32),
         jnp.zeros((m_pad - m_wins,), jnp.int32)])
    counts_pad = jnp.concatenate(
        [counts.astype(jnp.int32),
         jnp.zeros((m_pad - m_wins,), jnp.int32)])
    counts_2d = counts_pad.reshape(m_pad, 1)

    wqkv = params["qkv_w"].astype(MXU_DTYPE)
    bqkv = params["qkv_b"].reshape(1, -1).astype(jnp.float32)
    wproj = params["proj_w"].astype(MXU_DTYPE)
    bproj = params["proj_b"].reshape(1, -1).astype(jnp.float32)
    head_mask = (jnp.arange(c)[:, None] // d
                 == jnp.arange(c)[None, :] // d).astype(jnp.float32)   # (C, C)

    # kernel A: x gather + qkv linear + relu + per-window kv / s
    q_pad, feat = fused_window_kv(x_src, offsets_pad, counts_2d, wqkv, bqkv,
                                  head_mask, c=c, p_max=p_max, g_wins=g_wins)

    # 3x3 sparse sum pool == 9-neighbour gather (sentinel window has zero feat)
    nbrs = build_neighbor_table(batch_win_coords, win_bev_shape,
                                batch_size, m_wins)

    # kernel B: pool + q @ kv + per-head normalise + proj
    out_pad = fused_pool_qc_proj(q_pad, feat, nbrs, head_mask, wproj, bproj,
                                 c=c, p_max=p_max, m_real=m_wins)

    # scatter padded per-window rows back to the (N, C) point layout
    row_in_win = jnp.arange(n, dtype=jnp.int32) - offsets[batch_win_inds]
    out = out_pad[batch_win_inds, row_in_win]
    return out, None


# ----------------------------------------------------------------------------
# Pure-JAX f32 reference (independent of the kernels)
# ----------------------------------------------------------------------------
def reference_forward(params, x, batch_win_inds, batch_win_coords,
                      win_bev_shape, batch_size, num_heads):
    n, c = x.shape
    d = c // num_heads
    m_wins = batch_win_coords.shape[0]
    qkv = x @ params["qkv_w"] + params["qkv_b"]
    q = jax.nn.relu(qkv[:, :c]).reshape(n, num_heads, d)
    k = jax.nn.relu(qkv[:, c:2 * c]).reshape(n, num_heads, d)
    v = qkv[:, 2 * c:].reshape(n, num_heads, d)
    onehot = (jnp.arange(m_wins)[:, None] == batch_win_inds[None, :]
              ).astype(jnp.float32)
    kv = jnp.einsum("mn,nhi,nhj->mhij", onehot, k, v)
    s = jnp.einsum("mn,nhi->mhi", onehot, k)
    feat = jnp.concatenate([kv.reshape(m_wins, -1), s.reshape(m_wins, -1)], -1)
    hg, wg = win_bev_shape
    dense = jnp.zeros((batch_size, hg, wg, feat.shape[1]), jnp.float32).at[
        batch_win_coords[:, 0], batch_win_coords[:, 1],
        batch_win_coords[:, 2]].set(feat)
    padded = jnp.pad(dense, ((0, 0), (1, 1), (1, 1), (0, 0)))
    pooled_dense = sum(padded[:, a:a + hg, b:b + wg, :]
                       for a in range(3) for b in range(3))
    pooled = pooled_dense[batch_win_coords[:, 0], batch_win_coords[:, 1],
                          batch_win_coords[:, 2]]
    kv_p = pooled[:, :num_heads * d * d].reshape(m_wins, num_heads, d, d)
    s_p = pooled[:, num_heads * d * d:].reshape(m_wins, num_heads, d)
    y = jnp.einsum("nhi,nhij->nhj", q, kv_p[batch_win_inds])
    z = jnp.sum(s_p[batch_win_inds] * q, -1, keepdims=True)
    y = (y / (z + 1e-6)).reshape(n, c)
    return y @ params["proj_w"] + params["proj_b"]


# ----------------------------------------------------------------------------
if __name__ == "__main__":
    dim, num_heads = 128, 4          # head_dim = 32; lane-dense (C = 128)
    N, M, batch_size = 24, 4, 2
    win_bev_shape = (4, 4)

    counts_np = np.array([6, 8, 5, 5], dtype=np.int32)          # sums to N
    offsets_np = np.concatenate([[0], np.cumsum(counts_np)[:-1]]).astype(np.int32)
    batch_win_inds_np = np.repeat(np.arange(M, dtype=np.int32), counts_np)
    batch_win_coords_np = np.array([[0, 1, 1],
                                    [0, 1, 2],
                                    [1, 0, 0],
                                    [1, 2, 3]], dtype=np.int32)

    counts = jnp.asarray(counts_np)
    offsets = jnp.asarray(offsets_np)
    batch_win_inds = jnp.asarray(batch_win_inds_np)
    batch_win_coords = jnp.asarray(batch_win_coords_np)

    key = jax.random.PRNGKey(0)
    kx, kw1, kw2, kb2 = jax.random.split(key, 4)
    x = jax.random.normal(kx, (N, dim), jnp.float32)
    params = {
        # qkv_bias=False in the module default -> zero bias
        "qkv_w": jax.random.normal(kw1, (dim, 3 * dim), jnp.float32) * 0.1,
        "qkv_b": jnp.zeros((3 * dim,), jnp.float32),
        "proj_w": jax.random.normal(kw2, (dim, dim), jnp.float32) * 0.1,
        "proj_b": jax.random.normal(kb2, (dim,), jnp.float32) * 0.1,
    }

    out, _ = scatter_attention_forward(
        params, x, offsets, counts, batch_win_inds, batch_win_coords,
        win_bev_shape, batch_size, None,
        num_heads=num_heads, max_pts=int(counts_np.max()))
    out = jax.block_until_ready(out)

    ref = reference_forward(params, x, batch_win_inds, batch_win_coords,
                            win_bev_shape, batch_size, num_heads)
    ref = jax.block_until_ready(ref)

    # bf16 MXU inputs / bf16 feat storage (f32 accumulation everywhere)
    np.testing.assert_allclose(np.asarray(out), np.asarray(ref),
                               rtol=3e-2, atol=3e-2)
    print("KERNEL_OK")
</pallas_src>

<mosaic_0001>
module attributes {stable_mosaic.version = 11 : i64} {
  func.func @_win_qkv_kv_kernel(%arg0: i32, %arg1: memref<16xi32, #tpu.memory_space<smem>>, %arg2: memref<16x1xi32, #tpu.memory_space<vmem>>, %arg3: memref<40x128xf32, #tpu.memory_space<any>>, %arg4: memref<128x384xbf16, #tpu.memory_space<vmem>>, %arg5: memref<1x384xf32, #tpu.memory_space<vmem>>, %arg6: memref<128x128xf32, #tpu.memory_space<vmem>>, %arg7: memref<16x16x128xbf16, #tpu.memory_space<vmem>>, %arg8: memref<16x144x128xbf16, #tpu.memory_space<vmem>>, %arg9: memref<16x16x128xf32, #tpu.memory_space<vmem>>, %arg10: memref<16x!tpu.dma_semaphore, #tpu.memory_space<semaphore_mem>>) attributes {dimension_semantics = [#tpu.dimension_semantics<parallel>], iteration_bounds = array<i64: 1>, scalar_prefetch = 1 : i64, scratch_operands = 2 : i64, tpu.core_type = #tpu.core_type<tc>, window_params = [{transform_indices = @transform_0, window_bounds = array<i64: 16, 1>}, {}, {pipeline_mode = #tpu.pipeline_mode<synchronous>, transform_indices = @transform_2, window_bounds = array<i64: 128, 384>}, {pipeline_mode = #tpu.pipeline_mode<synchronous>, transform_indices = @transform_3, window_bounds = array<i64: 1, 384>}, {pipeline_mode = #tpu.pipeline_mode<synchronous>, transform_indices = @transform_4, window_bounds = array<i64: 128, 128>}, {transform_indices = @transform_5, window_bounds = array<i64: 16, 16, 128>}, {transform_indices = @transform_6, window_bounds = array<i64: 16, 144, 128>}]} {
    %c16_i32 = arith.constant 16 : i32
    %0 = arith.muli %arg0, %c16_i32 : i32
    %c0_i32 = arith.constant 0 : i32
    %1 = arith.addi %0, %c0_i32 : i32
    %2 = arith.index_cast %1 : i32 to index
    %3 = memref.load %arg1[%2] : memref<16xi32, #tpu.memory_space<smem>>
    %c1_i32 = arith.constant 1 : i32
    %4 = arith.addi %0, %c1_i32 : i32
    %5 = arith.index_cast %4 : i32 to index
    %6 = memref.load %arg1[%5] : memref<16xi32, #tpu.memory_space<smem>>
    %c2_i32 = arith.constant 2 : i32
    %7 = arith.addi %0, %c2_i32 : i32
    %8 = arith.index_cast %7 : i32 to index
    %9 = memref.load %arg1[%8] : memref<16xi32, #tpu.memory_space<smem>>
    %c3_i32 = arith.constant 3 : i32
    %10 = arith.addi %0, %c3_i32 : i32
    %11 = arith.index_cast %10 : i32 to index
    %12 = memref.load %arg1[%11] : memref<16xi32, #tpu.memory_space<smem>>
    %c4_i32 = arith.constant 4 : i32
    %13 = arith.addi %0, %c4_i32 : i32
    %14 = arith.index_cast %13 : i32 to index
    %15 = memref.load %arg1[%14] : memref<16xi32, #tpu.memory_space<smem>>
    %c5_i32 = arith.constant 5 : i32
    %16 = arith.addi %0, %c5_i32 : i32
    %17 = arith.index_cast %16 : i32 to index
    %18 = memref.load %arg1[%17] : memref<16xi32, #tpu.memory_space<smem>>
    %c6_i32 = arith.constant 6 : i32
    %19 = arith.addi %0, %c6_i32 : i32
    %20 = arith.index_cast %19 : i32 to index
    %21 = memref.load %arg1[%20] : memref<16xi32, #tpu.memory_space<smem>>
    %c7_i32 = arith.constant 7 : i32
    %22 = arith.addi %0, %c7_i32 : i32
    %23 = arith.index_cast %22 : i32 to index
    %24 = memref.load %arg1[%23] : memref<16xi32, #tpu.memory_space<smem>>
    %c8_i32 = arith.constant 8 : i32
    %25 = arith.addi %0, %c8_i32 : i32
    %26 = arith.index_cast %25 : i32 to index
    %27 = memref.load %arg1[%26] : memref<16xi32, #tpu.memory_space<smem>>
    %c9_i32 = arith.constant 9 : i32
    %28 = arith.addi %0, %c9_i32 : i32
    %29 = arith.index_cast %28 : i32 to index
    %30 = memref.load %arg1[%29] : memref<16xi32, #tpu.memory_space<smem>>
    %c10_i32 = arith.constant 10 : i32
    %31 = arith.addi %0, %c10_i32 : i32
    %32 = arith.index_cast %31 : i32 to index
    %33 = memref.load %arg1[%32] : memref<16xi32, #tpu.memory_space<smem>>
    %c11_i32 = arith.constant 11 : i32
    %34 = arith.addi %0, %c11_i32 : i32
    %35 = arith.index_cast %34 : i32 to index
    %36 = memref.load %arg1[%35] : memref<16xi32, #tpu.memory_space<smem>>
    %c12_i32 = arith.constant 12 : i32
    %37 = arith.addi %0, %c12_i32 : i32
    %38 = arith.index_cast %37 : i32 to index
    %39 = memref.load %arg1[%38] : memref<16xi32, #tpu.memory_space<smem>>
    %c13_i32 = arith.constant 13 : i32
    %40 = arith.addi %0, %c13_i32 : i32
    %41 = arith.index_cast %40 : i32 to index
    %42 = memref.load %arg1[%41] : memref<16xi32, #tpu.memory_space<smem>>
    %c14_i32 = arith.constant 14 : i32
    %43 = arith.addi %0, %c14_i32 : i32
    %44 = arith.index_cast %43 : i32 to index
    %45 = memref.load %arg1[%44] : memref<16xi32, #tpu.memory_space<smem>>
    %c15_i32 = arith.constant 15 : i32
    %46 = arith.addi %0, %c15_i32 : i32
    %47 = arith.index_cast %46 : i32 to index
    %48 = memref.load %arg1[%47] : memref<16xi32, #tpu.memory_space<smem>>
    %c0_i32_0 = arith.constant 0 : i32
    %c0_i32_1 = arith.constant 0 : i32
    %c0_i32_2 = arith.constant 0 : i32
    %49 = tpu.memref_slice %arg3[%3, %c0_i32_2] : memref<40x128xf32, #tpu.memory_space<any>> -> memref<16x128xf32, #tpu.memory_space<any>>
    %c0_i32_3 = arith.constant 0 : i32
    %c0_i32_4 = arith.constant 0 : i32
    %50 = tpu.memref_slice %arg9[%c0_i32_0, %c0_i32_3, %c0_i32_4] : memref<16x16x128xf32, #tpu.memory_space<vmem>> -> memref<1x16x128xf32, #tpu.memory_space<vmem>>
    %51 = tpu.memref_squeeze %50 : memref<1x16x128xf32, #tpu.memory_space<vmem>> -> memref<16x128xf32, #tpu.memory_space<vmem>>
    %52 = tpu.memref_slice %arg10[%c0_i32_1] : memref<16x!tpu.dma_semaphore, #tpu.memory_space<semaphore_mem>> -> memref<1x!tpu.dma_semaphore, #tpu.memory_space<semaphore_mem>>
    %53 = tpu.memref_squeeze %52 : memref<1x!tpu.dma_semaphore, #tpu.memory_space<semaphore_mem>> -> memref<!tpu.dma_semaphore, #tpu.memory_space<semaphore_mem>>
    tpu.enqueue_dma source(%49 : memref<16x128xf32, #tpu.memory_space<any>>) target(%51 : memref<16x128xf32, #tpu.memory_space<vmem>>) target_semaphore(%53 : memref<!tpu.dma_semaphore, #tpu.memory_space<semaphore_mem>>)
    %c1_i32_5 = arith.constant 1 : i32
    %c1_i32_6 = arith.constant 1 : i32
    %c0_i32_7 = arith.constant 0 : i32
    %54 = tpu.memref_slice %arg3[%6, %c0_i32_7] : memref<40x128xf32, #tpu.memory_space<any>> -> memref<16x128xf32, #tpu.memory_space<any>>
    %c0_i32_8 = arith.constant 0 : i32
    %c0_i32_9 = arith.constant 0 : i32
    %55 = tpu.memref_slice %arg9[%c1_i32_5, %c0_i32_8, %c0_i32_9] : memref<16x16x128xf32, #tpu.memory_space<vmem>> -> memref<1x16x128xf32, #tpu.memory_space<vmem>>
    %56 = tpu.memref_squeeze %55 : memref<1x16x128xf32, #tpu.memory_space<vmem>> -> memref<16x128xf32, #tpu.memory_space<vmem>>
    %57 = tpu.memref_slice %arg10[%c1_i32_6] : memref<16x!tpu.dma_semaphore, #tpu.memory_space<semaphore_mem>> -> memref<1x!tpu.dma_semaphore, #tpu.memory_space<semaphore_mem>>
    %58 = tpu.memref_squeeze %57 : memref<1x!tpu.dma_semaphore, #tpu.memory_space<semaphore_mem>> -> memref<!tpu.dma_semaphore, #tpu.memory_space<semaphore_mem>>
    tpu.enqueue_dma source(%54 : memref<16x128xf32, #tpu.memory_space<any>>) target(%56 : memref<16x128xf32, #tpu.memory_space<vmem>>) target_semaphore(%58 : memref<!tpu.dma_semaphore, #tpu.memory_space<semaphore_mem>>)
    %c2_i32_10 = arith.constant 2 : i32
    %c2_i32_11 = arith.constant 2 : i32
    %c0_i32_12 = arith.constant 0 : i32
    %59 = tpu.memref_slice %arg3[%9, %c0_i32_12] : memref<40x128xf32, #tpu.memory_space<any>> -> memref<16x128xf32, #tpu.memory_space<any>>
    %c0_i32_13 = arith.constant 0 : i32
    %c0_i32_14 = arith.constant 0 : i32
    %60 = tpu.memref_slice %arg9[%c2_i32_10, %c0_i32_13, %c0_i32_14] : memref<16x16x128xf32, #tpu.memory_space<vmem>> -> memref<1x16x128xf32, #tpu.memory_space<vmem>>
    %61 = tpu.memref_squeeze %60 : memref<1x16x128xf32, #tpu.memory_space<vmem>> -> memref<16x128xf32, #tpu.memory_space<vmem>>
    %62 = tpu.memref_slice %arg10[%c2_i32_11] : memref<16x!tpu.dma_semaphore, #tpu.memory_space<semaphore_mem>> -> memref<1x!tpu.dma_semaphore, #tpu.memory_space<semaphore_mem>>
    %63 = tpu.memref_squeeze %62 : memref<1x!tpu.dma_semaphore, #tpu.memory_space<semaphore_mem>> -> memref<!tpu.dma_semaphore, #tpu.memory_space<semaphore_mem>>
    tpu.enqueue_dma source(%59 : memref<16x128xf32, #tpu.memory_space<any>>) target(%61 : memref<16x128xf32, #tpu.memory_space<vmem>>) target_semaphore(%63 : memref<!tpu.dma_semaphore, #tpu.memory_space<semaphore_mem>>)
    %c3_i32_15 = arith.constant 3 : i32
    %c3_i32_16 = arith.constant 3 : i32
    %c0_i32_17 = arith.constant 0 : i32
    %64 = tpu.memref_slice %arg3[%12, %c0_i32_17] : memref<40x128xf32, #tpu.memory_space<any>> -> memref<16x128xf32, #tpu.memory_space<any>>
    %c0_i32_18 = arith.constant 0 : i32
    %c0_i32_19 = arith.constant 0 : i32
    %65 = tpu.memref_slice %arg9[%c3_i32_15, %c0_i32_18, %c0_i32_19] : memref<16x16x128xf32, #tpu.memory_space<vmem>> -> memref<1x16x128xf32, #tpu.memory_space<vmem>>
    %66 = tpu.memref_squeeze %65 : memref<1x16x128xf32, #tpu.memory_space<vmem>> -> memref<16x128xf32, #tpu.memory_space<vmem>>
    %67 = tpu.memref_slice %arg10[%c3_i32_16] : memref<16x!tpu.dma_semaphore, #tpu.memory_space<semaphore_mem>> -> memref<1x!tpu.dma_semaphore, #tpu.memory_space<semaphore_mem>>
    %68 = tpu.memref_squeeze %67 : memref<1x!tpu.dma_semaphore, #tpu.memory_space<semaphore_mem>> -> memref<!tpu.dma_semaphore, #tpu.memory_space<semaphore_mem>>
    tpu.enqueue_dma source(%64 : memref<16x128xf32, #tpu.memory_space<any>>) target(%66 : memref<16x128xf32, #tpu.memory_space<vmem>>) target_semaphore(%68 : memref<!tpu.dma_semaphore, #tpu.memory_space<semaphore_mem>>)
    %c4_i32_20 = arith.constant 4 : i32
    %c4_i32_21 = arith.constant 4 : i32
    %c0_i32_22 = arith.constant 0 : i32
    %69 = tpu.memref_slice %arg3[%15, %c0_i32_22] : memref<40x128xf32, #tpu.memory_space<any>> -> memref<16x128xf32, #tpu.memory_space<any>>
    %c0_i32_23 = arith.constant 0 : i32
    %c0_i32_24 = arith.constant 0 : i32
    %70 = tpu.memref_slice %arg9[%c4_i32_20, %c0_i32_23, %c0_i32_24] : memref<16x16x128xf32, #tpu.memory_space<vmem>> -> memref<1x16x128xf32, #tpu.memory_space<vmem>>
    %71 = tpu.memref_squeeze %70 : memref<1x16x128xf32, #tpu.memory_space<vmem>> -> memref<16x128xf32, #tpu.memory_space<vmem>>
    %72 = tpu.memref_slice %arg10[%c4_i32_21] : memref<16x!tpu.dma_semaphore, #tpu.memory_space<semaphore_mem>> -> memref<1x!tpu.dma_semaphore, #tpu.memory_space<semaphore_mem>>
    %73 = tpu.memref_squeeze %72 : memref<1x!tpu.dma_semaphore, #tpu.memory_space<semaphore_mem>> -> memref<!tpu.dma_semaphore, #tpu.memory_space<semaphore_mem>>
    tpu.enqueue_dma source(%69 : memref<16x128xf32, #tpu.memory_space<any>>) target(%71 : memref<16x128xf32, #tpu.memory_space<vmem>>) target_semaphore(%73 : memref<!tpu.dma_semaphore, #tpu.memory_space<semaphore_mem>>)
    %c5_i32_25 = arith.constant 5 : i32
    %c5_i32_26 = arith.constant 5 : i32
    %c0_i32_27 = arith.constant 0 : i32
    %74 = tpu.memref_slice %arg3[%18, %c0_i32_27] : memref<40x128xf32, #tpu.memory_space<any>> -> memref<16x128xf32, #tpu.memory_space<any>>
    %c0_i32_28 = arith.constant 0 : i32
    %c0_i32_29 = arith.constant 0 : i32
    %75 = tpu.memref_slice %arg9[%c5_i32_25, %c0_i32_28, %c0_i32_29] : memref<16x16x128xf32, #tpu.memory_space<vmem>> -> memref<1x16x128xf32, #tpu.memory_space<vmem>>
    %76 = tpu.memref_squeeze %75 : memref<1x16x128xf32, #tpu.memory_space<vmem>> -> memref<16x128xf32, #tpu.memory_space<vmem>>
    %77 = tpu.memref_slice %arg10[%c5_i32_26] : memref<16x!tpu.dma_semaphore, #tpu.memory_space<semaphore_mem>> -> memref<1x!tpu.dma_semaphore, #tpu.memory_space<semaphore_mem>>
    %78 = tpu.memref_squeeze %77 : memref<1x!tpu.dma_semaphore, #tpu.memory_space<semaphore_mem>> -> memref<!tpu.dma_semaphore, #tpu.memory_space<semaphore_mem>>
    tpu.enqueue_dma source(%74 : memref<16x128xf32, #tpu.memory_space<any>>) target(%76 : memref<16x128xf32, #tpu.memory_space<vmem>>) target_semaphore(%78 : memref<!tpu.dma_semaphore, #tpu.memory_space<semaphore_mem>>)
    %c6_i32_30 = arith.constant 6 : i32
    %c6_i32_31 = arith.constant 6 : i32
    %c0_i32_32 = arith.constant 0 : i32
    %79 = tpu.memref_slice %arg3[%21, %c0_i32_32] : memref<40x128xf32, #tpu.memory_space<any>> -> memref<16x128xf32, #tpu.memory_space<any>>
    %c0_i32_33 = arith.constant 0 : i32
    %c0_i32_34 = arith.constant 0 : i32
    %80 = tpu.memref_slice %arg9[%c6_i32_30, %c0_i32_33, %c0_i32_34] : memref<16x16x128xf32, #tpu.memory_space<vmem>> -> memref<1x16x128xf32, #tpu.memory_space<vmem>>
    %81 = tpu.memref_squeeze %80 : memref<1x16x128xf32, #tpu.memory_space<vmem>> -> memref<16x128xf32, #tpu.memory_space<vmem>>
    %82 = tpu.memref_slice %arg10[%c6_i32_31] : memref<16x!tpu.dma_semaphore, #tpu.memory_space<semaphore_mem>> -> memref<1x!tpu.dma_semaphore, #tpu.memory_space<semaphore_mem>>
    %83 = tpu.memref_squeeze %82 : memref<1x!tpu.dma_semaphore, #tpu.memory_space<semaphore_mem>> -> memref<!tpu.dma_semaphore, #tpu.memory_space<semaphore_mem>>
    tpu.enqueue_dma source(%79 : memref<16x128xf32, #tpu.memory_space<any>>) target(%81 : memref<16x128xf32, #tpu.memory_space<vmem>>) target_semaphore(%83 : memref<!tpu.dma_semaphore, #tpu.memory_space<semaphore_mem>>)
    %c7_i32_35 = arith.constant 7 : i32
    %c7_i32_36 = arith.constant 7 : i32
    %c0_i32_37 = arith.constant 0 : i32
    %84 = tpu.memref_slice %arg3[%24, %c0_i32_37] : memref<40x128xf32, #tpu.memory_space<any>> -> memref<16x128xf32, #tpu.memory_space<any>>
    %c0_i32_38 = arith.constant 0 : i32
    %c0_i32_39 = arith.constant 0 : i32
    %85 = tpu.memref_slice %arg9[%c7_i32_35, %c0_i32_38, %c0_i32_39] : memref<16x16x128xf32, #tpu.memory_space<vmem>> -> memref<1x16x128xf32, #tpu.memory_space<vmem>>
    %86 = tpu.memref_squeeze %85 : memref<1x16x128xf32, #tpu.memory_space<vmem>> -> memref<16x128xf32, #tpu.memory_space<vmem>>
    %87 = tpu.memref_slice %arg10[%c7_i32_36] : memref<16x!tpu.dma_semaphore, #tpu.memory_space<semaphore_mem>> -> memref<1x!tpu.dma_semaphore, #tpu.memory_space<semaphore_mem>>
    %88 = tpu.memref_squeeze %87 : memref<1x!tpu.dma_semaphore, #tpu.memory_space<semaphore_mem>> -> memref<!tpu.dma_semaphore, #tpu.memory_space<semaphore_mem>>
    tpu.enqueue_dma source(%84 : memref<16x128xf32, #tpu.memory_space<any>>) target(%86 : memref<16x128xf32, #tpu.memory_space<vmem>>) target_semaphore(%88 : memref<!tpu.dma_semaphore, #tpu.memory_space<semaphore_mem>>)
    %c8_i32_40 = arith.constant 8 : i32
    %c8_i32_41 = arith.constant 8 : i32
    %c0_i32_42 = arith.constant 0 : i32
    %89 = tpu.memref_slice %arg3[%27, %c0_i32_42] : memref<40x128xf32, #tpu.memory_space<any>> -> memref<16x128xf32, #tpu.memory_space<any>>
    %c0_i32_43 = arith.constant 0 : i32
    %c0_i32_44 = arith.constant 0 : i32
    %90 = tpu.memref_slice %arg9[%c8_i32_40, %c0_i32_43, %c0_i32_44] : memref<16x16x128xf32, #tpu.memory_space<vmem>> -> memref<1x16x128xf32, #tpu.memory_space<vmem>>
    %91 = tpu.memref_squeeze %90 : memref<1x16x128xf32, #tpu.memory_space<vmem>> -> memref<16x128xf32, #tpu.memory_space<vmem>>
    %92 = tpu.memref_slice %arg10[%c8_i32_41] : memref<16x!tpu.dma_semaphore, #tpu.memory_space<semaphore_mem>> -> memref<1x!tpu.dma_semaphore, #tpu.memory_space<semaphore_mem>>
    %93 = tpu.memref_squeeze %92 : memref<1x!tpu.dma_semaphore, #tpu.memory_space<semaphore_mem>> -> memref<!tpu.dma_semaphore, #tpu.memory_space<semaphore_mem>>
    tpu.enqueue_dma source(%89 : memref<16x128xf32, #tpu.memory_space<any>>) target(%91 : memref<16x128xf32, #tpu.memory_space<vmem>>) target_semaphore(%93 : memref<!tpu.dma_semaphore, #tpu.memory_space<semaphore_mem>>)
    %c9_i32_45 = arith.constant 9 : i32
    %c9_i32_46 = arith.constant 9 : i32
    %c0_i32_47 = arith.constant 0 : i32
    %94 = tpu.memref_slice %arg3[%30, %c0_i32_47] : memref<40x128xf32, #tpu.memory_space<any>> -> memref<16x128xf32, #tpu.memory_space<any>>
    %c0_i32_48 = arith.constant 0 : i32
    %c0_i32_49 = arith.constant 0 : i32
    %95 = tpu.memref_slice %arg9[%c9_i32_45, %c0_i32_48, %c0_i32_49] : memref<16x16x128xf32, #tpu.memory_space<vmem>> -> memref<1x16x128xf32, #tpu.memory_space<vmem>>
    %96 = tpu.memref_squeeze %95 : memref<1x16x128xf32, #tpu.memory_space<vmem>> -> memref<16x128xf32, #tpu.memory_space<vmem>>
    %97 = tpu.memref_slice %arg10[%c9_i32_46] : memref<16x!tpu.dma_semaphore, #tpu.memory_space<semaphore_mem>> -> memref<1x!tpu.dma_semaphore, #tpu.memory_space<semaphore_mem>>
    %98 = tpu.memref_squeeze %97 : memref<1x!tpu.dma_semaphore, #tpu.memory_space<semaphore_mem>> -> memref<!tpu.dma_semaphore, #tpu.memory_space<semaphore_mem>>
    tpu.enqueue_dma source(%94 : memref<16x128xf32, #tpu.memory_space<any>>) target(%96 : memref<16x128xf32, #tpu.memory_space<vmem>>) target_semaphore(%98 : memref<!tpu.dma_semaphore, #tpu.memory_space<semaphore_mem>>)
    %c10_i32_50 = arith.constant 10 : i32
    %c10_i32_51 = arith.constant 10 : i32
    %c0_i32_52 = arith.constant 0 : i32
    %99 = tpu.memref_slice %arg3[%33, %c0_i32_52] : memref<40x128xf32, #tpu.memory_space<any>> -> memref<16x128xf32, #tpu.memory_space<any>>
    %c0_i32_53 = arith.constant 0 : i32
    %c0_i32_54 = arith.constant 0 : i32
    %100 = tpu.memref_slice %arg9[%c10_i32_50, %c0_i32_53, %c0_i32_54] : memref<16x16x128xf32, #tpu.memory_space<vmem>> -> memref<1x16x128xf32, #tpu.memory_space<vmem>>
    %101 = tpu.memref_squeeze %100 : memref<1x16x128xf32, #tpu.memory_space<vmem>> -> memref<16x128xf32, #tpu.memory_space<vmem>>
    %102 = tpu.memref_slice %arg10[%c10_i32_51] : memref<16x!tpu.dma_semaphore, #tpu.memory_space<semaphore_mem>> -> memref<1x!tpu.dma_semaphore, #tpu.memory_space<semaphore_mem>>
    %103 = tpu.memref_squeeze %102 : memref<1x!tpu.dma_semaphore, #tpu.memory_space<semaphore_mem>> -> memref<!tpu.dma_semaphore, #tpu.memory_space<semaphore_mem>>
    tpu.enqueue_dma source(%99 : memref<16x128xf32, #tpu.memory_space<any>>) target(%101 : memref<16x128xf32, #tpu.memory_space<vmem>>) target_semaphore(%103 : memref<!tpu.dma_semaphore, #tpu.memory_space<semaphore_mem>>)
    %c11_i32_55 = arith.constant 11 : i32
    %c11_i32_56 = arith.constant 11 : i32
    %c0_i32_57 = arith.constant 0 : i32
    %104 = tpu.memref_slice %arg3[%36, %c0_i32_57] : memref<40x128xf32, #tpu.memory_space<any>> -> memref<16x128xf32, #tpu.memory_space<any>>
    %c0_i32_58 = arith.constant 0 : i32
    %c0_i32_59 = arith.constant 0 : i32
    %105 = tpu.memref_slice %arg9[%c11_i32_55, %c0_i32_58, %c0_i32_59] : memref<16x16x128xf32, #tpu.memory_space<vmem>> -> memref<1x16x128xf32, #tpu.memory_space<vmem>>
    %106 = tpu.memref_squeeze %105 : memref<1x16x128xf32, #tpu.memory_space<vmem>> -> memref<16x128xf32, #tpu.memory_space<vmem>>
    %107 = tpu.memref_slice %arg10[%c11_i32_56] : memref<16x!tpu.dma_semaphore, #tpu.memory_space<semaphore_mem>> -> memref<1x!tpu.dma_semaphore, #tpu.memory_space<semaphore_mem>>
    %108 = tpu.memref_squeeze %107 : memref<1x!tpu.dma_semaphore, #tpu.memory_space<semaphore_mem>> -> memref<!tpu.dma_semaphore, #tpu.memory_space<semaphore_mem>>
    tpu.enqueue_dma source(%104 : memref<16x128xf32, #tpu.memory_space<any>>) target(%106 : memref<16x128xf32, #tpu.memory_space<vmem>>) target_semaphore(%108 : memref<!tpu.dma_semaphore, #tpu.memory_space<semaphore_mem>>)
    %c12_i32_60 = arith.constant 12 : i32
    %c12_i32_61 = arith.constant 12 : i32
    %c0_i32_62 = arith.constant 0 : i32
    %109 = tpu.memref_slice %arg3[%39, %c0_i32_62] : memref<40x128xf32, #tpu.memory_space<any>> -> memref<16x128xf32, #tpu.memory_space<any>>
    %c0_i32_63 = arith.constant 0 : i32
    %c0_i32_64 = arith.constant 0 : i32
    %110 = tpu.memref_slice %arg9[%c12_i32_60, %c0_i32_63, %c0_i32_64] : memref<16x16x128xf32, #tpu.memory_space<vmem>> -> memref<1x16x128xf32, #tpu.memory_space<vmem>>
    %111 = tpu.memref_squeeze %110 : memref<1x16x128xf32, #tpu.memory_space<vmem>> -> memref<16x128xf32, #tpu.memory_space<vmem>>
    %112 = tpu.memref_slice %arg10[%c12_i32_61] : memref<16x!tpu.dma_semaphore, #tpu.memory_space<semaphore_mem>> -> memref<1x!tpu.dma_semaphore, #tpu.memory_space<semaphore_mem>>
    %113 = tpu.memref_squeeze %112 : memref<1x!tpu.dma_semaphore, #tpu.memory_space<semaphore_mem>> -> memref<!tpu.dma_semaphore, #tpu.memory_space<semaphore_mem>>
    tpu.enqueue_dma source(%109 : memref<16x128xf32, #tpu.memory_space<any>>) target(%111 : memref<16x128xf32, #tpu.memory_space<vmem>>) target_semaphore(%113 : memref<!tpu.dma_semaphore, #tpu.memory_space<semaphore_mem>>)
    %c13_i32_65 = arith.constant 13 : i32
    %c13_i32_66 = arith.constant 13 : i32
    %c0_i32_67 = arith.constant 0 : i32
    %114 = tpu.memref_slice %arg3[%42, %c0_i32_67] : memref<40x128xf32, #tpu.memory_space<any>> -> memref<16x128xf32, #tpu.memory_space<any>>
    %c0_i32_68 = arith.constant 0 : i32
    %c0_i32_69 = arith.constant 0 : i32
    %115 = tpu.memref_slice %arg9[%c13_i32_65, %c0_i32_68, %c0_i32_69] : memref<16x16x128xf32, #tpu.memory_space<vmem>> -> memref<1x16x128xf32, #tpu.memory_space<vmem>>
    %116 = tpu.memref_squeeze %115 : memref<1x16x128xf32, #tpu.memory_space<vmem>> -> memref<16x128xf32, #tpu.memory_space<vmem>>
    %117 = tpu.memref_slice %arg10[%c13_i32_66] : memref<16x!tpu.dma_semaphore, #tpu.memory_space<semaphore_mem>> -> memref<1x!tpu.dma_semaphore, #tpu.memory_space<semaphore_mem>>
    %118 = tpu.memref_squeeze %117 : memref<1x!tpu.dma_semaphore, #tpu.memory_space<semaphore_mem>> -> memref<!tpu.dma_semaphore, #tpu.memory_space<semaphore_mem>>
    tpu.enqueue_dma source(%114 : memref<16x128xf32, #tpu.memory_space<any>>) target(%116 : memref<16x128xf32, #tpu.memory_space<vmem>>) target_semaphore(%118 : memref<!tpu.dma_semaphore, #tpu.memory_space<semaphore_mem>>)
    %c14_i32_70 = arith.constant 14 : i32
    %c14_i32_71 = arith.constant 14 : i32
    %c0_i32_72 = arith.constant 0 : i32
    %119 = tpu.memref_slice %arg3[%45, %c0_i32_72] : memref<40x128xf32, #tpu.memory_space<any>> -> memref<16x128xf32, #tpu.memory_space<any>>
    %c0_i32_73 = arith.constant 0 : i32
    %c0_i32_74 = arith.constant 0 : i32
    %120 = tpu.memref_slice %arg9[%c14_i32_70, %c0_i32_73, %c0_i32_74] : memref<16x16x128xf32, #tpu.memory_space<vmem>> -> memref<1x16x128xf32, #tpu.memory_space<vmem>>
    %121 = tpu.memref_squeeze %120 : memref<1x16x128xf32, #tpu.memory_space<vmem>> -> memref<16x128xf32, #tpu.memory_space<vmem>>
    %122 = tpu.memref_slice %arg10[%c14_i32_71] : memref<16x!tpu.dma_semaphore, #tpu.memory_space<semaphore_mem>> -> memref<1x!tpu.dma_semaphore, #tpu.memory_space<semaphore_mem>>
    %123 = tpu.memref_squeeze %122 : memref<1x!tpu.dma_semaphore, #tpu.memory_space<semaphore_mem>> -> memref<!tpu.dma_semaphore, #tpu.memory_space<semaphore_mem>>
    tpu.enqueue_dma source(%119 : memref<16x128xf32, #tpu.memory_space<any>>) target(%121 : memref<16x128xf32, #tpu.memory_space<vmem>>) target_semaphore(%123 : memref<!tpu.dma_semaphore, #tpu.memory_space<semaphore_mem>>)
    %c15_i32_75 = arith.constant 15 : i32
    %c15_i32_76 = arith.constant 15 : i32
    %c0_i32_77 = arith.constant 0 : i32
    %124 = tpu.memref_slice %arg3[%48, %c0_i32_77] : memref<40x128xf32, #tpu.memory_space<any>> -> memref<16x128xf32, #tpu.memory_space<any>>
    %c0_i32_78 = arith.constant 0 : i32
    %c0_i32_79 = arith.constant 0 : i32
    %125 = tpu.memref_slice %arg9[%c15_i32_75, %c0_i32_78, %c0_i32_79] : memref<16x16x128xf32, #tpu.memory_space<vmem>> -> memref<1x16x128xf32, #tpu.memory_space<vmem>>
    %126 = tpu.memref_squeeze %125 : memref<1x16x128xf32, #tpu.memory_space<vmem>> -> memref<16x128xf32, #tpu.memory_space<vmem>>
    %127 = tpu.memref_slice %arg10[%c15_i32_76] : memref<16x!tpu.dma_semaphore, #tpu.memory_space<semaphore_mem>> -> memref<1x!tpu.dma_semaphore, #tpu.memory_space<semaphore_mem>>
    %128 = tpu.memref_squeeze %127 : memref<1x!tpu.dma_semaphore, #tpu.memory_space<semaphore_mem>> -> memref<!tpu.dma_semaphore, #tpu.memory_space<semaphore_mem>>
    tpu.enqueue_dma source(%124 : memref<16x128xf32, #tpu.memory_space<any>>) target(%126 : memref<16x128xf32, #tpu.memory_space<vmem>>) target_semaphore(%128 : memref<!tpu.dma_semaphore, #tpu.memory_space<semaphore_mem>>)
    %c0_i32_80 = arith.constant 0 : i32
    %c0_i32_81 = arith.constant 0 : i32
    %c0_i32_82 = arith.constant 0 : i32
    %129 = tpu.memref_slice %arg3[%3, %c0_i32_82] : memref<40x128xf32, #tpu.memory_space<any>> -> memref<16x128xf32, #tpu.memory_space<any>>
    %c0_i32_83 = arith.constant 0 : i32
    %c0_i32_84 = arith.constant 0 : i32
    %130 = tpu.memref_slice %arg9[%c0_i32_80, %c0_i32_83, %c0_i32_84] : memref<16x16x128xf32, #tpu.memory_space<vmem>> -> memref<1x16x128xf32, #tpu.memory_space<vmem>>
    %131 = tpu.memref_squeeze %130 : memref<1x16x128xf32, #tpu.memory_space<vmem>> -> memref<16x128xf32, #tpu.memory_space<vmem>>
    %132 = tpu.memref_slice %arg10[%c0_i32_81] : memref<16x!tpu.dma_semaphore, #tpu.memory_space<semaphore_mem>> -> memref<1x!tpu.dma_semaphore, #tpu.memory_space<semaphore_mem>>
    %133 = tpu.memref_squeeze %132 : memref<1x!tpu.dma_semaphore, #tpu.memory_space<semaphore_mem>> -> memref<!tpu.dma_semaphore, #tpu.memory_space<semaphore_mem>>
    tpu.wait_dma2 semaphore(%133 : memref<!tpu.dma_semaphore, #tpu.memory_space<semaphore_mem>>) src(%129 : memref<16x128xf32, #tpu.memory_space<any>>) dst(%131 : memref<16x128xf32, #tpu.memory_space<vmem>>)
    %c1_i32_85 = arith.constant 1 : i32
    %c1_i32_86 = arith.constant 1 : i32
    %c0_i32_87 = arith.constant 0 : i32
    %134 = tpu.memref_slice %arg3[%6, %c0_i32_87] : memref<40x128xf32, #tpu.memory_space<any>> -> memref<16x128xf32, #tpu.memory_space<any>>
    %c0_i32_88 = arith.constant 0 : i32
    %c0_i32_89 = arith.constant 0 : i32
    %135 = tpu.memref_slice %arg9[%c1_i32_85, %c0_i32_88, %c0_i32_89] : memref<16x16x128xf32, #tpu.memory_space<vmem>> -> memref<1x16x128xf32, #tpu.memory_space<vmem>>
    %136 = tpu.memref_squeeze %135 : memref<1x16x128xf32, #tpu.memory_space<vmem>> -> memref<16x128xf32, #tpu.memory_space<vmem>>
    %137 = tpu.memref_slice %arg10[%c1_i32_86] : memref<16x!tpu.dma_semaphore, #tpu.memory_space<semaphore_mem>> -> memref<1x!tpu.dma_semaphore, #tpu.memory_space<semaphore_mem>>
    %138 = tpu.memref_squeeze %137 : memref<1x!tpu.dma_semaphore, #tpu.memory_space<semaphore_mem>> -> memref<!tpu.dma_semaphore, #tpu.memory_space<semaphore_mem>>
    tpu.wait_dma2 semaphore(%138 : memref<!tpu.dma_semaphore, #tpu.memory_space<semaphore_mem>>) src(%134 : memref<16x128xf32, #tpu.memory_space<any>>) dst(%136 : memref<16x128xf32, #tpu.memory_space<vmem>>)
    %c2_i32_90 = arith.constant 2 : i32
    %c2_i32_91 = arith.constant 2 : i32
    %c0_i32_92 = arith.constant 0 : i32
    %139 = tpu.memref_slice %arg3[%9, %c0_i32_92] : memref<40x128xf32, #tpu.memory_space<any>> -> memref<16x128xf32, #tpu.memory_space<any>>
    %c0_i32_93 = arith.constant 0 : i32
    %c0_i32_94 = arith.constant 0 : i32
    %140 = tpu.memref_slice %arg9[%c2_i32_90, %c0_i32_93, %c0_i32_94] : memref<16x16x128xf32, #tpu.memory_space<vmem>> -> memref<1x16x128xf32, #tpu.memory_space<vmem>>
    %141 = tpu.memref_squeeze %140 : memref<1x16x128xf32, #tpu.memory_space<vmem>> -> memref<16x128xf32, #tpu.memory_space<vmem>>
    %142 = tpu.memref_slice %arg10[%c2_i32_91] : memref<16x!tpu.dma_semaphore, #tpu.memory_space<semaphore_mem>> -> memref<1x!tpu.dma_semaphore, #tpu.memory_space<semaphore_mem>>
    %143 = tpu.memref_squeeze %142 : memref<1x!tpu.dma_semaphore, #tpu.memory_space<semaphore_mem>> -> memref<!tpu.dma_semaphore, #tpu.memory_space<semaphore_mem>>
    tpu.wait_dma2 semaphore(%143 : memref<!tpu.dma_semaphore, #tpu.memory_space<semaphore_mem>>) src(%139 : memref<16x128xf32, #tpu.memory_space<any>>) dst(%141 : memref<16x128xf32, #tpu.memory_space<vmem>>)
    %c3_i32_95 = arith.constant 3 : i32
    %c3_i32_96 = arith.constant 3 : i32
    %c0_i32_97 = arith.constant 0 : i32
    %144 = tpu.memref_slice %arg3[%12, %c0_i32_97] : memref<40x128xf32, #tpu.memory_space<any>> -> memref<16x128xf32, #tpu.memory_space<any>>
    %c0_i32_98 = arith.constant 0 : i32
    %c0_i32_99 = arith.constant 0 : i32
    %145 = tpu.memref_slice %arg9[%c3_i32_95, %c0_i32_98, %c0_i32_99] : memref<16x16x128xf32, #tpu.memory_space<vmem>> -> memref<1x16x128xf32, #tpu.memory_space<vmem>>
    %146 = tpu.memref_squeeze %145 : memref<1x16x128xf32, #tpu.memory_space<vmem>> -> memref<16x128xf32, #tpu.memory_space<vmem>>
    %147 = tpu.memref_slice %arg10[%c3_i32_96] : memref<16x!tpu.dma_semaphore, #tpu.memory_space<semaphore_mem>> -> memref<1x!tpu.dma_semaphore, #tpu.memory_space<semaphore_mem>>
    %148 = tpu.memref_squeeze %147 : memref<1x!tpu.dma_semaphore, #tpu.memory_space<semaphore_mem>> -> memref<!tpu.dma_semaphore, #tpu.memory_space<semaphore_mem>>
    tpu.wait_dma2 semaphore(%148 : memref<!tpu.dma_semaphore, #tpu.memory_space<semaphore_mem>>) src(%144 : memref<16x128xf32, #tpu.memory_space<any>>) dst(%146 : memref<16x128xf32, #tpu.memory_space<vmem>>)
    %c4_i32_100 = arith.constant 4 : i32
    %c4_i32_101 = arith.constant 4 : i32
    %c0_i32_102 = arith.constant 0 : i32
    %149 = tpu.memref_slice %arg3[%15, %c0_i32_102] : memref<40x128xf32, #tpu.memory_space<any>> -> memref<16x128xf32, #tpu.memory_space<any>>
    %c0_i32_103 = arith.constant 0 : i32
    %c0_i32_104 = arith.constant 0 : i32
    %150 = tpu.memref_slice %arg9[%c4_i32_100, %c0_i32_103, %c0_i32_104] : memref<16x16x128xf32, #tpu.memory_space<vmem>> -> memref<1x16x128xf32, #tpu.memory_space<vmem>>
    %151 = tpu.memref_squeeze %150 : memref<1x16x128xf32, #tpu.memory_space<vmem>> -> memref<16x128xf32, #tpu.memory_space<vmem>>
    %152 = tpu.memref_slice %arg10[%c4_i32_101] : memref<16x!tpu.dma_semaphore, #tpu.memory_space<semaphore_mem>> -> memref<1x!tpu.dma_semaphore, #tpu.memory_space<semaphore_mem>>
    %153 = tpu.memref_squeeze %152 : memref<1x!tpu.dma_semaphore, #tpu.memory_space<semaphore_mem>> -> memref<!tpu.dma_semaphore, #tpu.memory_space<semaphore_mem>>
    tpu.wait_dma2 semaphore(%153 : memref<!tpu.dma_semaphore, #tpu.memory_space<semaphore_mem>>) src(%149 : memref<16x128xf32, #tpu.memory_space<any>>) dst(%151 : memref<16x128xf32, #tpu.memory_space<vmem>>)
    %c5_i32_105 = arith.constant 5 : i32
    %c5_i32_106 = arith.constant 5 : i32
    %c0_i32_107 = arith.constant 0 : i32
    %154 = tpu.memref_slice %arg3[%18, %c0_i32_107] : memref<40x128xf32, #tpu.memory_space<any>> -> memref<16x128xf32, #tpu.memory_space<any>>
    %c0_i32_108 = arith.constant 0 : i32
    %c0_i32_109 = arith.constant 0 : i32
    %155 = tpu.memref_slice %arg9[%c5_i32_105, %c0_i32_108, %c0_i32_109] : memref<16x16x128xf32, #tpu.memory_space<vmem>> -> memref<1x16x128xf32, #tpu.memory_space<vmem>>
    %156 = tpu.memref_squeeze %155 : memref<1x16x128xf32, #tpu.memory_space<vmem>> -> memref<16x128xf32, #tpu.memory_space<vmem>>
    %157 = tpu.memref_slice %arg10[%c5_i32_106] : memref<16x!tpu.dma_semaphore, #tpu.memory_space<semaphore_mem>> -> memref<1x!tpu.dma_semaphore, #tpu.memory_space<semaphore_mem>>
    %158 = tpu.memref_squeeze %157 : memref<1x!tpu.dma_semaphore, #tpu.memory_space<semaphore_mem>> -> memref<!tpu.dma_semaphore, #tpu.memory_space<semaphore_mem>>
    tpu.wait_dma2 semaphore(%158 : memref<!tpu.dma_semaphore, #tpu.memory_space<semaphore_mem>>) src(%154 : memref<16x128xf32, #tpu.memory_space<any>>) dst(%156 : memref<16x128xf32, #tpu.memory_space<vmem>>)
    %c6_i32_110 = arith.constant 6 : i32
    %c6_i32_111 = arith.constant 6 : i32
    %c0_i32_112 = arith.constant 0 : i32
    %159 = tpu.memref_slice %arg3[%21, %c0_i32_112] : memref<40x128xf32, #tpu.memory_space<any>> -> memref<16x128xf32, #tpu.memory_space<any>>
    %c0_i32_113 = arith.constant 0 : i32
    %c0_i32_114 = arith.constant 0 : i32
    %160 = tpu.memref_slice %arg9[%c6_i32_110, %c0_i32_113, %c0_i32_114] : memref<16x16x128xf32, #tpu.memory_space<vmem>> -> memref<1x16x128xf32, #tpu.memory_space<vmem>>
    %161 = tpu.memref_squeeze %160 : memref<1x16x128xf32, #tpu.memory_space<vmem>> -> memref<16x128xf32, #tpu.memory_space<vmem>>
    %162 = tpu.memref_slice %arg10[%c6_i32_111] : memref<16x!tpu.dma_semaphore, #tpu.memory_space<semaphore_mem>> -> memref<1x!tpu.dma_semaphore, #tpu.memory_space<semaphore_mem>>
    %163 = tpu.memref_squeeze %162 : memref<1x!tpu.dma_semaphore, #tpu.memory_space<semaphore_mem>> -> memref<!tpu.dma_semaphore, #tpu.memory_space<semaphore_mem>>
    tpu.wait_dma2 semaphore(%163 : memref<!tpu.dma_semaphore, #tpu.memory_space<semaphore_mem>>) src(%159 : memref<16x128xf32, #tpu.memory_space<any>>) dst(%161 : memref<16x128xf32, #tpu.memory_space<vmem>>)
    %c7_i32_115 = arith.constant 7 : i32
    %c7_i32_116 = arith.constant 7 : i32
    %c0_i32_117 = arith.constant 0 : i32
    %164 = tpu.memref_slice %arg3[%24, %c0_i32_117] : memref<40x128xf32, #tpu.memory_space<any>> -> memref<16x128xf32, #tpu.memory_space<any>>
    %c0_i32_118 = arith.constant 0 : i32
    %c0_i32_119 = arith.constant 0 : i32
    %165 = tpu.memref_slice %arg9[%c7_i32_115, %c0_i32_118, %c0_i32_119] : memref<16x16x128xf32, #tpu.memory_space<vmem>> -> memref<1x16x128xf32, #tpu.memory_space<vmem>>
    %166 = tpu.memref_squeeze %165 : memref<1x16x128xf32, #tpu.memory_space<vmem>> -> memref<16x128xf32, #tpu.memory_space<vmem>>
    %167 = tpu.memref_slice %arg10[%c7_i32_116] : memref<16x!tpu.dma_semaphore, #tpu.memory_space<semaphore_mem>> -> memref<1x!tpu.dma_semaphore, #tpu.memory_space<semaphore_mem>>
    %168 = tpu.memref_squeeze %167 : memref<1x!tpu.dma_semaphore, #tpu.memory_space<semaphore_mem>> -> memref<!tpu.dma_semaphore, #tpu.memory_space<semaphore_mem>>
    tpu.wait_dma2 semaphore(%168 : memref<!tpu.dma_semaphore, #tpu.memory_space<semaphore_mem>>) src(%164 : memref<16x128xf32, #tpu.memory_space<any>>) dst(%166 : memref<16x128xf32, #tpu.memory_space<vmem>>)
    %c8_i32_120 = arith.constant 8 : i32
    %c8_i32_121 = arith.constant 8 : i32
    %c0_i32_122 = arith.constant 0 : i32
    %169 = tpu.memref_slice %arg3[%27, %c0_i32_122] : memref<40x128xf32, #tpu.memory_space<any>> -> memref<16x128xf32, #tpu.memory_space<any>>
    %c0_i32_123 = arith.constant 0 : i32
    %c0_i32_124 = arith.constant 0 : i32
    %170 = tpu.memref_slice %arg9[%c8_i32_120, %c0_i32_123, %c0_i32_124] : memref<16x16x128xf32, #tpu.memory_space<vmem>> -> memref<1x16x128xf32, #tpu.memory_space<vmem>>
    %171 = tpu.memref_squeeze %170 : memref<1x16x128xf32, #tpu.memory_space<vmem>> -> memref<16x128xf32, #tpu.memory_space<vmem>>
    %172 = tpu.memref_slice %arg10[%c8_i32_121] : memref<16x!tpu.dma_semaphore, #tpu.memory_space<semaphore_mem>> -> memref<1x!tpu.dma_semaphore, #tpu.memory_space<semaphore_mem>>
    %173 = tpu.memref_squeeze %172 : memref<1x!tpu.dma_semaphore, #tpu.memory_space<semaphore_mem>> -> memref<!tpu.dma_semaphore, #tpu.memory_space<semaphore_mem>>
    tpu.wait_dma2 semaphore(%173 : memref<!tpu.dma_semaphore, #tpu.memory_space<semaphore_mem>>) src(%169 : memref<16x128xf32, #tpu.memory_space<any>>) dst(%171 : memref<16x128xf32, #tpu.memory_space<vmem>>)
    %c9_i32_125 = arith.constant 9 : i32
    %c9_i32_126 = arith.constant 9 : i32
    %c0_i32_127 = arith.constant 0 : i32
    %174 = tpu.memref_slice %arg3[%30, %c0_i32_127] : memref<40x128xf32, #tpu.memory_space<any>> -> memref<16x128xf32, #tpu.memory_space<any>>
    %c0_i32_128 = arith.constant 0 : i32
    %c0_i32_129 = arith.constant 0 : i32
    %175 = tpu.memref_slice %arg9[%c9_i32_125, %c0_i32_128, %c0_i32_129] : memref<16x16x128xf32, #tpu.memory_space<vmem>> -> memref<1x16x128xf32, #tpu.memory_space<vmem>>
    %176 = tpu.memref_squeeze %175 : memref<1x16x128xf32, #tpu.memory_space<vmem>> -> memref<16x128xf32, #tpu.memory_space<vmem>>
    %177 = tpu.memref_slice %arg10[%c9_i32_126] : memref<16x!tpu.dma_semaphore, #tpu.memory_space<semaphore_mem>> -> memref<1x!tpu.dma_semaphore, #tpu.memory_space<semaphore_mem>>
    %178 = tpu.memref_squeeze %177 : memref<1x!tpu.dma_semaphore, #tpu.memory_space<semaphore_mem>> -> memref<!tpu.dma_semaphore, #tpu.memory_space<semaphore_mem>>
    tpu.wait_dma2 semaphore(%178 : memref<!tpu.dma_semaphore, #tpu.memory_space<semaphore_mem>>) src(%174 : memref<16x128xf32, #tpu.memory_space<any>>) dst(%176 : memref<16x128xf32, #tpu.memory_space<vmem>>)
    %c10_i32_130 = arith.constant 10 : i32
    %c10_i32_131 = arith.constant 10 : i32
    %c0_i32_132 = arith.constant 0 : i32
    %179 = tpu.memref_slice %arg3[%33, %c0_i32_132] : memref<40x128xf32, #tpu.memory_space<any>> -> memref<16x128xf32, #tpu.memory_space<any>>
    %c0_i32_133 = arith.constant 0 : i32
    %c0_i32_134 = arith.constant 0 : i32
    %180 = tpu.memref_slice %arg9[%c10_i32_130, %c0_i32_133, %c0_i32_134] : memref<16x16x128xf32, #tpu.memory_space<vmem>> -> memref<1x16x128xf32, #tpu.memory_space<vmem>>
    %181 = tpu.memref_squeeze %180 : memref<1x16x128xf32, #tpu.memory_space<vmem>> -> memref<16x128xf32, #tpu.memory_space<vmem>>
    %182 = tpu.memref_slice %arg10[%c10_i32_131] : memref<16x!tpu.dma_semaphore, #tpu.memory_space<semaphore_mem>> -> memref<1x!tpu.dma_semaphore, #tpu.memory_space<semaphore_mem>>
    %183 = tpu.memref_squeeze %182 : memref<1x!tpu.dma_semaphore, #tpu.memory_space<semaphore_mem>> -> memref<!tpu.dma_semaphore, #tpu.memory_space<semaphore_mem>>
    tpu.wait_dma2 semaphore(%183 : memref<!tpu.dma_semaphore, #tpu.memory_space<semaphore_mem>>) src(%179 : memref<16x128xf32, #tpu.memory_space<any>>) dst(%181 : memref<16x128xf32, #tpu.memory_space<vmem>>)
    %c11_i32_135 = arith.constant 11 : i32
    %c11_i32_136 = arith.constant 11 : i32
    %c0_i32_137 = arith.constant 0 : i32
    %184 = tpu.memref_slice %arg3[%36, %c0_i32_137] : memref<40x128xf32, #tpu.memory_space<any>> -> memref<16x128xf32, #tpu.memory_space<any>>
    %c0_i32_138 = arith.constant 0 : i32
    %c0_i32_139 = arith.constant 0 : i32
    %185 = tpu.memref_slice %arg9[%c11_i32_135, %c0_i32_138, %c0_i32_139] : memref<16x16x128xf32, #tpu.memory_space<vmem>> -> memref<1x16x128xf32, #tpu.memory_space<vmem>>
    %186 = tpu.memref_squeeze %185 : memref<1x16x128xf32, #tpu.memory_space<vmem>> -> memref<16x128xf32, #tpu.memory_space<vmem>>
    %187 = tpu.memref_slice %arg10[%c11_i32_136] : memref<16x!tpu.dma_semaphore, #tpu.memory_space<semaphore_mem>> -> memref<1x!tpu.dma_semaphore, #tpu.memory_space<semaphore_mem>>
    %188 = tpu.memref_squeeze %187 : memref<1x!tpu.dma_semaphore, #tpu.memory_space<semaphore_mem>> -> memref<!tpu.dma_semaphore, #tpu.memory_space<semaphore_mem>>
    tpu.wait_dma2 semaphore(%188 : memref<!tpu.dma_semaphore, #tpu.memory_space<semaphore_mem>>) src(%184 : memref<16x128xf32, #tpu.memory_space<any>>) dst(%186 : memref<16x128xf32, #tpu.memory_space<vmem>>)
    %c12_i32_140 = arith.constant 12 : i32
    %c12_i32_141 = arith.constant 12 : i32
    %c0_i32_142 = arith.constant 0 : i32
    %189 = tpu.memref_slice %arg3[%39, %c0_i32_142] : memref<40x128xf32, #tpu.memory_space<any>> -> memref<16x128xf32, #tpu.memory_space<any>>
    %c0_i32_143 = arith.constant 0 : i32
    %c0_i32_144 = arith.constant 0 : i32
    %190 = tpu.memref_slice %arg9[%c12_i32_140, %c0_i32_143, %c0_i32_144] : memref<16x16x128xf32, #tpu.memory_space<vmem>> -> memref<1x16x128xf32, #tpu.memory_space<vmem>>
    %191 = tpu.memref_squeeze %190 : memref<1x16x128xf32, #tpu.memory_space<vmem>> -> memref<16x128xf32, #tpu.memory_space<vmem>>
    %192 = tpu.memref_slice %arg10[%c12_i32_141] : memref<16x!tpu.dma_semaphore, #tpu.memory_space<semaphore_mem>> -> memref<1x!tpu.dma_semaphore, #tpu.memory_space<semaphore_mem>>
    %193 = tpu.memref_squeeze %192 : memref<1x!tpu.dma_semaphore, #tpu.memory_space<semaphore_mem>> -> memref<!tpu.dma_semaphore, #tpu.memory_space<semaphore_mem>>
    tpu.wait_dma2 semaphore(%193 : memref<!tpu.dma_semaphore, #tpu.memory_space<semaphore_mem>>) src(%189 : memref<16x128xf32, #tpu.memory_space<any>>) dst(%191 : memref<16x128xf32, #tpu.memory_space<vmem>>)
    %c13_i32_145 = arith.constant 13 : i32
    %c13_i32_146 = arith.constant 13 : i32
    %c0_i32_147 = arith.constant 0 : i32
    %194 = tpu.memref_slice %arg3[%42, %c0_i32_147] : memref<40x128xf32, #tpu.memory_space<any>> -> memref<16x128xf32, #tpu.memory_space<any>>
    %c0_i32_148 = arith.constant 0 : i32
    %c0_i32_149 = arith.constant 0 : i32
    %195 = tpu.memref_slice %arg9[%c13_i32_145, %c0_i32_148, %c0_i32_149] : memref<16x16x128xf32, #tpu.memory_space<vmem>> -> memref<1x16x128xf32, #tpu.memory_space<vmem>>
    %196 = tpu.memref_squeeze %195 : memref<1x16x128xf32, #tpu.memory_space<vmem>> -> memref<16x128xf32, #tpu.memory_space<vmem>>
    %197 = tpu.memref_slice %arg10[%c13_i32_146] : memref<16x!tpu.dma_semaphore, #tpu.memory_space<semaphore_mem>> -> memref<1x!tpu.dma_semaphore, #tpu.memory_space<semaphore_mem>>
    %198 = tpu.memref_squeeze %197 : memref<1x!tpu.dma_semaphore, #tpu.memory_space<semaphore_mem>> -> memref<!tpu.dma_semaphore, #tpu.memory_space<semaphore_mem>>
    tpu.wait_dma2 semaphore(%198 : memref<!tpu.dma_semaphore, #tpu.memory_space<semaphore_mem>>) src(%194 : memref<16x128xf32, #tpu.memory_space<any>>) dst(%196 : memref<16x128xf32, #tpu.memory_space<vmem>>)
    %c14_i32_150 = arith.constant 14 : i32
    %c14_i32_151 = arith.constant 14 : i32
    %c0_i32_152 = arith.constant 0 : i32
    %199 = tpu.memref_slice %arg3[%45, %c0_i32_152] : memref<40x128xf32, #tpu.memory_space<any>> -> memref<16x128xf32, #tpu.memory_space<any>>
    %c0_i32_153 = arith.constant 0 : i32
    %c0_i32_154 = arith.constant 0 : i32
    %200 = tpu.memref_slice %arg9[%c14_i32_150, %c0_i32_153, %c0_i32_154] : memref<16x16x128xf32, #tpu.memory_space<vmem>> -> memref<1x16x128xf32, #tpu.memory_space<vmem>>
    %201 = tpu.memref_squeeze %200 : memref<1x16x128xf32, #tpu.memory_space<vmem>> -> memref<16x128xf32, #tpu.memory_space<vmem>>
    %202 = tpu.memref_slice %arg10[%c14_i32_151] : memref<16x!tpu.dma_semaphore, #tpu.memory_space<semaphore_mem>> -> memref<1x!tpu.dma_semaphore, #tpu.memory_space<semaphore_mem>>
    %203 = tpu.memref_squeeze %202 : memref<1x!tpu.dma_semaphore, #tpu.memory_space<semaphore_mem>> -> memref<!tpu.dma_semaphore, #tpu.memory_space<semaphore_mem>>
    tpu.wait_dma2 semaphore(%203 : memref<!tpu.dma_semaphore, #tpu.memory_space<semaphore_mem>>) src(%199 : memref<16x128xf32, #tpu.memory_space<any>>) dst(%201 : memref<16x128xf32, #tpu.memory_space<vmem>>)
    %c15_i32_155 = arith.constant 15 : i32
    %c15_i32_156 = arith.constant 15 : i32
    %c0_i32_157 = arith.constant 0 : i32
    %204 = tpu.memref_slice %arg3[%48, %c0_i32_157] : memref<40x128xf32, #tpu.memory_space<any>> -> memref<16x128xf32, #tpu.memory_space<any>>
    %c0_i32_158 = arith.constant 0 : i32
    %c0_i32_159 = arith.constant 0 : i32
    %205 = tpu.memref_slice %arg9[%c15_i32_155, %c0_i32_158, %c0_i32_159] : memref<16x16x128xf32, #tpu.memory_space<vmem>> -> memref<1x16x128xf32, #tpu.memory_space<vmem>>
    %206 = tpu.memref_squeeze %205 : memref<1x16x128xf32, #tpu.memory_space<vmem>> -> memref<16x128xf32, #tpu.memory_space<vmem>>
    %207 = tpu.memref_slice %arg10[%c15_i32_156] : memref<16x!tpu.dma_semaphore, #tpu.memory_space<semaphore_mem>> -> memref<1x!tpu.dma_semaphore, #tpu.memory_space<semaphore_mem>>
    %208 = tpu.memref_squeeze %207 : memref<1x!tpu.dma_semaphore, #tpu.memory_space<semaphore_mem>> -> memref<!tpu.dma_semaphore, #tpu.memory_space<semaphore_mem>>
    tpu.wait_dma2 semaphore(%208 : memref<!tpu.dma_semaphore, #tpu.memory_space<semaphore_mem>>) src(%204 : memref<16x128xf32, #tpu.memory_space<any>>) dst(%206 : memref<16x128xf32, #tpu.memory_space<vmem>>)
    %c0 = arith.constant 0 : index
    %c0_160 = arith.constant 0 : index
    %c0_161 = arith.constant 0 : index
    %209 = vector.load %arg9[%c0, %c0_160, %c0_161] : memref<16x16x128xf32, #tpu.memory_space<vmem>>, vector<16x16x128xf32>
    %210 = vector.shape_cast %209 : vector<16x16x128xf32> to vector<256x128xf32>
    %211 = arith.truncf %210 : vector<256x128xf32> to vector<256x128xbf16>
    %c0_162 = arith.constant 0 : index
    %c0_163 = arith.constant 0 : index
    %212 = vector.load %arg4[%c0_162, %c0_163] : memref<128x384xbf16, #tpu.memory_space<vmem>>, vector<128x384xbf16>
    %cst = arith.constant dense<0.000000e+00> : vector<256x384xf32>
    %213 = tpu.matmul %211, %212, %cst {dimension_numbers = #tpu.dot_dimension_numbers<[1], [0], [0], [1], [0, 0, 1, 1], [], []>} : vector<256x128xbf16>, vector<128x384xbf16>, vector<256x384xf32> -> vector<256x384xf32>
    %c0_164 = arith.constant 0 : index
    %c0_165 = arith.constant 0 : index
    %214 = vector.load %arg5[%c0_164, %c0_165] : memref<1x384xf32, #tpu.memory_space<vmem>>, vector<1x384xf32>
    %215 = vector.broadcast %214 : vector<1x384xf32> to vector<256x384xf32>
    %216 = arith.addf %213, %215 : vector<256x384xf32>
    %217 = vector.extract_strided_slice %216 {offsets = [0, 0], sizes = [256, 128], strides = [1, 1]} : vector<256x384xf32> to vector<256x128xf32>
    %cst_166 = arith.constant 0.000000e+00 : f32
    %218 = vector.broadcast %cst_166 : f32 to vector<256x128xf32>
    %219 = arith.maximumf %217, %218 : vector<256x128xf32>
    %220 = vector.shape_cast %219 : vector<256x128xf32> to vector<16x16x128xf32>
    %221 = vector.extract_strided_slice %216 {offsets = [0, 128], sizes = [256, 128], strides = [1, 1]} : vector<256x384xf32> to vector<256x128xf32>
    %cst_167 = arith.constant 0.000000e+00 : f32
    %222 = vector.broadcast %cst_167 : f32 to vector<256x128xf32>
    %223 = arith.maximumf %221, %222 : vector<256x128xf32>
    %224 = vector.shape_cast %223 : vector<256x128xf32> to vector<16x16x128xf32>
    %225 = vector.extract_strided_slice %216 {offsets = [0, 256], sizes = [256, 128], strides = [1, 1]} : vector<256x384xf32> to vector<256x128xf32>
    %226 = vector.shape_cast %225 : vector<256x128xf32> to vector<16x16x128xf32>
    %227 = tpu.iota {dimensions = array<i32: 1>} : vector<16x16x1xi32>
    %c0_168 = arith.constant 0 : index
    %c0_169 = arith.constant 0 : index
    %228 = vector.load %arg2[%c0_168, %c0_169] : memref<16x1xi32, #tpu.memory_space<vmem>>, vector<16x1xi32>
    %229 = vector.shape_cast %228 : vector<16x1xi32> to vector<16x1x1xi32>
    %230 = vector.broadcast %229 : vector<16x1x1xi32> to vector<16x16x1xi32>
    %231 = arith.cmpi slt, %227, %230 : vector<16x16x1xi32>
    %cst_170 = arith.constant 0.000000e+00 : f32
    %232 = vector.shape_cast %231 : vector<16x16x1xi1> to vector<16x16x1xi1>
    %233 = vector.broadcast %232 : vector<16x16x1xi1> to vector<16x16x128xi1>
    %234 = vector.broadcast %cst_170 : f32 to vector<16x16x128xf32>
    %235 = arith.select %233, %220, %234 : vector<16x16x128xi1>, vector<16x16x128xf32>
    %cst_171 = arith.constant 0.000000e+00 : f32
    %236 = vector.shape_cast %231 : vector<16x16x1xi1> to vector<16x16x1xi1>
    %237 = vector.broadcast %236 : vector<16x16x1xi1> to vector<16x16x128xi1>
    %238 = vector.broadcast %cst_171 : f32 to vector<16x16x128xf32>
    %239 = arith.select %237, %224, %238 : vector<16x16x128xi1>, vector<16x16x128xf32>
    %240 = arith.truncf %239 : vector<16x16x128xf32> to vector<16x16x128xbf16>
    %241 = arith.truncf %226 : vector<16x16x128xf32> to vector<16x16x128xbf16>
    "tpu.trace_start"() <{level = 10 : i32, message = "gpc,gpe->gce"}> : () -> ()
    %cst_172 = arith.constant dense<0.000000e+00> : vector<16x128x128xf32>
    %242 = tpu.matmul %240, %241, %cst_172 {dimension_numbers = #tpu.dot_dimension_numbers<[1], [1], [2], [2], [0, 0, 0, 2, 1, 2], [0], [0]>} : vector<16x16x128xbf16>, vector<16x16x128xbf16>, vector<16x128x128xf32> -> vector<16x128x128xf32>
    "tpu.trace_stop"() : () -> ()
    %c0_173 = arith.constant 0 : index
    %c0_174 = arith.constant 0 : index
    %243 = vector.load %arg6[%c0_173, %c0_174] : memref<128x128xf32, #tpu.memory_space<vmem>>, vector<128x128xf32>
    %244 = vector.shape_cast %243 : vector<128x128xf32> to vector<1x128x128xf32>
    %245 = vector.broadcast %244 : vector<1x128x128xf32> to vector<16x128x128xf32>
    %246 = arith.mulf %242, %245 : vector<16x128x128xf32>
    %cst_175 = arith.constant dense<0.000000e+00> : vector<16x128xf32>
    %247 = vector.multi_reduction <add>, %239, %cst_175 [1] : vector<16x16x128xf32> to vector<16x128xf32>
    %248 = vector.shape_cast %247 : vector<16x128xf32> to vector<16x1x128xf32>
    %249 = arith.truncf %246 : vector<16x128x128xf32> to vector<16x128x128xbf16>
    %c0_176 = arith.constant 0 : index
    %c0_177 = arith.constant 0 : index
    %c0_178 = arith.constant 0 : index
    %250 = vector.load %arg8[%c0_176, %c0_177, %c0_178] : memref<16x144x128xbf16, #tpu.memory_space<vmem>>, vector<16x128x128xbf16>
    tpu.vector_store %arg8[%c0_176, %c0_177, %c0_178], %249 {strides = array<i32>} : memref<16x144x128xbf16, #tpu.memory_space<vmem>>, vector<16x128x128xbf16>,
    %251 = vector.shape_cast %248 : vector<16x1x128xf32> to vector<16x1x128xf32>
    %252 = vector.broadcast %251 : vector<16x1x128xf32> to vector<16x16x128xf32>
    %253 = arith.truncf %252 : vector<16x16x128xf32> to vector<16x16x128xbf16>
    %c0_179 = arith.constant 0 : index
    %c128 = arith.constant 128 : index
    %c0_180 = arith.constant 0 : index
    %254 = vector.load %arg8[%c0_179, %c128, %c0_180] : memref<16x144x128xbf16, #tpu.memory_space<vmem>>, vector<16x16x128xbf16>
    tpu.vector_store %arg8[%c0_179, %c128, %c0_180], %253 {strides = array<i32>} : memref<16x144x128xbf16, #tpu.memory_space<vmem>>, vector<16x16x128xbf16>,
    %255 = arith.truncf %235 : vector<16x16x128xf32> to vector<16x16x128xbf16>
    %c0_181 = arith.constant 0 : index
    %c0_182 = arith.constant 0 : index
    %c0_183 = arith.constant 0 : index
    %256 = vector.load %arg7[%c0_181, %c0_182, %c0_183] : memref<16x16x128xbf16, #tpu.memory_space<vmem>>, vector<16x16x128xbf16>
    tpu.vector_store %arg7[%c0_181, %c0_182, %c0_183], %255 {strides = array<i32>} : memref<16x16x128xbf16, #tpu.memory_space<vmem>>, vector<16x16x128xbf16>,
    return
  }
  func.func @transform_0(%arg0: i32, %arg1: memref<16xi32, #tpu.memory_space<smem>>) -> (i32, i32) {
    %c0_i32 = arith.constant 0 : i32
    %c0_i32_0 = arith.constant 0 : i32
    return %arg0, %c0_i32 : i32, i32
  }
  func.func @transform_2(%arg0: i32, %arg1: memref<16xi32, #tpu.memory_space<smem>>) -> (i32, i32) {
    %c0_i32 = arith.constant 0 : i32
    %c0_i32_0 = arith.constant 0 : i32
    %c0_i32_1 = arith.constant 0 : i32
    return %c0_i32, %c0_i32_0 : i32, i32
  }
  func.func @transform_3(%arg0: i32, %arg1: memref<16xi32, #tpu.memory_space<smem>>) -> (i32, i32) {
    %c0_i32 = arith.constant 0 : i32
    %c0_i32_0 = arith.constant 0 : i32
    %c0_i32_1 = arith.constant 0 : i32
    return %c0_i32, %c0_i32_0 : i32, i32
  }
  func.func @transform_4(%arg0: i32, %arg1: memref<16xi32, #tpu.memory_space<smem>>) -> (i32, i32) {
    %c0_i32 = arith.constant 0 : i32
    %c0_i32_0 = arith.constant 0 : i32
    %c0_i32_1 = arith.constant 0 : i32
    return %c0_i32, %c0_i32_0 : i32, i32
  }
  func.func @transform_5(%arg0: i32, %arg1: memref<16xi32, #tpu.memory_space<smem>>) -> (i32, i32, i32) {
    %c0_i32 = arith.constant 0 : i32
    %c0_i32_0 = arith.constant 0 : i32
    %c0_i32_1 = arith.constant 0 : i32
    return %arg0, %c0_i32, %c0_i32_0 : i32, i32, i32
  }
  func.func @transform_6(%arg0: i32, %arg1: memref<16xi32, #tpu.memory_space<smem>>) -> (i32, i32, i32) {
    %c0_i32 = arith.constant 0 : i32
    %c0_i32_0 = arith.constant 0 : i32
    %c0_i32_1 = arith.constant 0 : i32
    return %arg0, %c0_i32, %c0_i32_0 : i32, i32, i32
  }
}

</mosaic_0001>

<llo_original>
// kernel: tpu_custom_call.1
$region0: #{tpu_custom_call.1}
  #allocation0 [shape = 'u32[]', space=smem, size = 0x4, offset = 0x4, fixed_abs, tag = 'smem constant byte address 0x4 - core index']
  #allocation1 [shape = 'u32[72,128]{1,0:T(1,128)}', space=vmem, size = 0x9000, scoped, tag = 'internal scratch']
  #allocation2 [shape = 'f32[16,16,128]{2,1,0:T(8,128)}', space=vmem, size = 0x20000, scoped, tag = 'scratch operand']
  #allocation3 [shape = 's32[16]{0}', space=sflag, size = 0x40, scoped, tag = 'scratch operand']
  #allocation4 [shape = 's32[1]{0}', space=sflag, size = 0x4, scoped, tag = 'scoped memory for tpu_custom_call.1']
  #allocation5 [shape = 'u8[512]{0}', space=smem, size = 0x200, scoped, tag = 'prefetched SMEM operand 0']
  #allocation14 [shape = 's32[]', space=sflag, size = 0x4, offset = 0, fixed_abs, tag = 'sflag constant byte address 0x0 - dummy sync flag']
  #allocation15 [shape = 's32[]', space=sflag, size = 0x4, offset = 0, fixed_abs, tag = 'sflag constant byte address 0x0 - dummy sync flag']
  #allocation16 [shape = 'u32[]', space=smem, size = 0x4, offset = 0x44, fixed_abs, tag = 'smem constant byte address 0x44 - assertion arg 0']
  #allocation17 [shape = 'u32[]', space=smem, size = 0x4, offset = 0x48, fixed_abs, tag = 'smem constant byte address 0x48 - assertion arg 1']
  #allocation18 [shape = 's32[]', space=sflag, size = 0x4, offset = 0, fixed_abs, tag = 'sflag constant byte address 0x0 - dummy sync flag']
  #allocation19 [shape = 's32[]', space=sflag, size = 0x4, offset = 0, fixed_abs, tag = 'sflag constant byte address 0x0 - dummy sync flag']
  #allocation20 [shape = 's32[]', space=sflag, size = 0x4, offset = 0, fixed_abs, tag = 'sflag constant byte address 0x0 - dummy sync flag']
  #allocation21 [shape = 's32[]', space=sflag, size = 0x4, offset = 0, fixed_abs, tag = 'sflag constant byte address 0x0 - dummy sync flag']
  #allocation22 [shape = 's32[]', space=sflag, size = 0x4, offset = 0, fixed_abs, tag = 'sflag constant byte address 0x0 - dummy sync flag']
  #allocation23 [shape = 's32[]', space=sflag, size = 0x4, offset = 0, fixed_abs, tag = 'sflag constant byte address 0x0 - dummy sync flag']
  #allocation24 [shape = 's32[]', space=sflag, size = 0x4, offset = 0, fixed_abs, tag = 'sflag constant byte address 0x0 - dummy sync flag']
  #allocation25 [shape = 's32[]', space=sflag, size = 0x4, offset = 0, fixed_abs, tag = 'sflag constant byte address 0x0 - dummy sync flag']
  #allocation26 [shape = 's32[]', space=sflag, size = 0x4, offset = 0, fixed_abs, tag = 'sflag constant byte address 0x0 - dummy sync flag']
  #allocation27 [shape = 's32[]', space=sflag, size = 0x4, offset = 0, fixed_abs, tag = 'sflag constant byte address 0x0 - dummy sync flag']
  #allocation28 [shape = 's32[]', space=sflag, size = 0x4, offset = 0, fixed_abs, tag = 'sflag constant byte address 0x0 - dummy sync flag']
  #allocation29 [shape = 's32[]', space=sflag, size = 0x4, offset = 0, fixed_abs, tag = 'sflag constant byte address 0x0 - dummy sync flag']
  #allocation30 [shape = 's32[]', space=sflag, size = 0x4, offset = 0, fixed_abs, tag = 'sflag constant byte address 0x0 - dummy sync flag']
  #allocation31 [shape = 's32[]', space=sflag, size = 0x4, offset = 0, fixed_abs, tag = 'sflag constant byte address 0x0 - dummy sync flag']
  #allocation32 [shape = 's32[]', space=sflag, size = 0x4, offset = 0, fixed_abs, tag = 'sflag constant byte address 0x0 - dummy sync flag']
  #allocation33 [shape = 's32[]', space=sflag, size = 0x4, offset = 0, fixed_abs, tag = 'sflag constant byte address 0x0 - dummy sync flag']
  #allocation34 [shape = 's32[]', space=sflag, size = 0x4, offset = 0, fixed_abs, tag = 'sflag constant byte address 0x0 - dummy sync flag']
  #allocation35 [shape = 's32[]', space=sflag, size = 0x4, offset = 0, fixed_abs, tag = 'sflag constant byte address 0x0 - dummy sync flag']
  #allocation36 [shape = 's32[]', space=sflag, size = 0x4, offset = 0, fixed_abs, tag = 'sflag constant byte address 0x0 - dummy sync flag']
  #allocation37 [shape = 's32[]', space=sflag, size = 0x4, offset = 0, fixed_abs, tag = 'sflag constant byte address 0x0 - dummy sync flag']
  #allocation38 [shape = 's32[]', space=sflag, size = 0x4, offset = 0, fixed_abs, tag = 'sflag constant byte address 0x0 - dummy sync flag']
  #allocation39 [shape = 's32[]', space=sflag, size = 0x4, offset = 0, fixed_abs, tag = 'sflag constant byte address 0x0 - dummy sync flag']
  #allocation40 [shape = 's32[]', space=sflag, size = 0x4, offset = 0, fixed_abs, tag = 'sflag constant byte address 0x0 - dummy sync flag']
  #allocation41 [shape = 's32[]', space=sflag, size = 0x4, offset = 0, fixed_abs, tag = 'sflag constant byte address 0x0 - dummy sync flag']
  #allocation42 [shape = 's32[]', space=sflag, size = 0x4, offset = 0, fixed_abs, tag = 'sflag constant byte address 0x0 - dummy sync flag']
  #allocation43 [shape = 's32[]', space=sflag, size = 0x4, offset = 0, fixed_abs, tag = 'sflag constant byte address 0x0 - dummy sync flag']
  #allocation44 [shape = 's32[]', space=sflag, size = 0x4, offset = 0, fixed_abs, tag = 'sflag constant byte address 0x0 - dummy sync flag']
  #allocation45 [shape = 's32[]', space=sflag, size = 0x4, offset = 0, fixed_abs, tag = 'sflag constant byte address 0x0 - dummy sync flag']
  #allocation46 [shape = 's32[]', space=sflag, size = 0x4, offset = 0, fixed_abs, tag = 'sflag constant byte address 0x0 - dummy sync flag']
  #allocation47 [shape = 's32[]', space=sflag, size = 0x4, offset = 0, fixed_abs, tag = 'sflag constant byte address 0x0 - dummy sync flag']
  %s0 = inlined_call_operand.vmem [shape: s32[16], index: 0, kind: input, shape index: {}]
  %s1 = inlined_call_operand.vmem [shape: s32[16,1], index: 1, kind: input, shape index: {}]
  %s2 = inlined_call_operand.hbm [shape: f32[40,128], index: 2, kind: input, shape index: {}]
  %s3 = inlined_call_operand.hbm [shape: bf16[128,384], index: 3, kind: input, shape index: {}]
  %s4 = inlined_call_operand.vmem [shape: f32[1,384], index: 4, kind: input, shape index: {}]
  %s5 = inlined_call_operand.hbm [shape: f32[128,128], index: 5, kind: input, shape index: {}]
  %s6 = inlined_call_operand.hbm [shape: bf16[16,16,128], index: 6, kind: output, shape index: {0}]
  %s7 = inlined_call_operand.hbm [shape: bf16[16,144,128], index: 7, kind: output, shape index: {1}]
  %8 = xla_tuple %s6, %s7
  %s9 = sld [smem:[#allocation0]]
  $region106: #{tpu_custom_call.1} parent=0
    _
  %s11 = ssub.s32 1, %s9
  %s12 = scalar_select 0, %s11, %s9
  %s14 = sshll.u32 %s0, 4
  %s15 = int_to_ptr.vmem [resolvable:$true] %s14
  %17 = dma.vmem_to_smem %s15, 16, [#allocation5], [#allocation4]
  %19 = dma.done [#allocation4], 16
  %20 = sfence
  $region1: #{tpu_custom_call.1} parent=0
    #allocation6 [shape = 'u8[98304]{0}', space=vmem, size = 0x18000, scoped, tag = 'input window, operand 3, single buffered']
    #allocation7 [shape = 's32[1]{0}', space=sflag, size = 0x4, scoped, tag = 'scoped memory for tpu_custom_call.1']
    #allocation8 [shape = 's32[1]{0}', space=sflag, size = 0x4, scoped, tag = 'scoped memory for tpu_custom_call.1']
    #allocation9 [shape = 'u8[65536]{0}', space=vmem, size = 0x10000, scoped, tag = 'input window, operand 5, single buffered']
    #allocation10 [shape = 's32[1]{0}', space=sflag, size = 0x4, scoped, tag = 'scoped memory for tpu_custom_call.1']
    #allocation11 [shape = 'u8[65536]{0}', space=vmem, size = 0x10000, scoped, tag = 'output window, operand 0, single buffered']
    #allocation12 [shape = 'u8[589824]{0}', space=vmem, size = 0x90000, scoped, tag = 'output window, operand 1, single buffered']
    #allocation13 [shape = 's32[1]{0}', space=sflag, size = 0x4, scoped, tag = 'scoped memory for tpu_custom_call.1']
    %21 = vsyncpa [#allocation7], 0
    %22 = vsyncpa [#allocation10], 0
    %23 = vsyncpa [#allocation8], 0
    %24 = vsyncpa [#allocation13], 0
    // Predicated region
    $region2: #{tpu_custom_call.1} parent=1 // pred_check
      _
    $region3: #{tpu_custom_call.1} parent=1 // pred_check_branch
      %26 = sbr.rel (0) target = $region5
    $region4: #{tpu_custom_call.1} parent=1 // pred_region
      _
    $region5: #{tpu_custom_call.1} parent=1 // pred_fallthru
      _
    // Predicated region
    $region6: #{tpu_custom_call.1} parent=1 // pred_check
      _
    $region7: #{tpu_custom_call.1} parent=1 // pred_check_branch
      %28 = sbr.rel (0) target = $region9
    $region8: #{tpu_custom_call.1} parent=1 // pred_region
      %30 = vsyncadd [#allocation7], 0
      %s31 = sshll.u32 %s3, 4
      %s32 = int_to_ptr.hbm [resolvable:$true] %s31
      %s33 = sshll.u32 [#allocation6], 4
      %s34 = int_to_ptr.vmem [resolvable:$true] %s33
      %39 = dma.hbm_to_vmem [thread:$0]  %s32, 3072, %s34, [#allocation7], 192, 192, 12
    $region9: #{tpu_custom_call.1} parent=1 // pred_fallthru
      _
    // Predicated region
    $region10: #{tpu_custom_call.1} parent=1 // pred_check
      _
    $region11: #{tpu_custom_call.1} parent=1 // pred_check_branch
      %41 = sbr.rel (0) target = $region13
    $region12: #{tpu_custom_call.1} parent=1 // pred_region
      _
    $region13: #{tpu_custom_call.1} parent=1 // pred_fallthru
      _
    // Predicated region
    $region14: #{tpu_custom_call.1} parent=1 // pred_check
      _
    $region15: #{tpu_custom_call.1} parent=1 // pred_check_branch
      %43 = sbr.rel (0) target = $region17
    $region16: #{tpu_custom_call.1} parent=1 // pred_region
      %45 = vsyncadd [#allocation10], 0
      %s46 = sshll.u32 %s5, 4
      %s47 = int_to_ptr.hbm [resolvable:$true] %s46
      %s48 = sshll.u32 [#allocation9], 4
      %s49 = int_to_ptr.vmem [resolvable:$true] %s48
      %54 = dma.hbm_to_vmem [thread:$0]  %s47, 2048, %s49, [#allocation10], 128, 128, 8
    $region17: #{tpu_custom_call.1} parent=1 // pred_fallthru
      _
    // Predicated region
    $region18: #{tpu_custom_call.1} parent=1 // pred_check
      _
    $region19: #{tpu_custom_call.1} parent=1 // pred_check_branch
      %56 = sbr.rel (0) target = $region21
    $region20: #{tpu_custom_call.1} parent=1 // pred_region
      %58 = dma.done [#allocation7], 3072
    $region21: #{tpu_custom_call.1} parent=1 // pred_fallthru
      _
    // Predicated region
    $region22: #{tpu_custom_call.1} parent=1 // pred_check
      _
    $region23: #{tpu_custom_call.1} parent=1 // pred_check_branch
      %60 = sbr.rel (0) target = $region25
    $region24: #{tpu_custom_call.1} parent=1 // pred_region
      %62 = dma.done [#allocation10], 2048
    $region25: #{tpu_custom_call.1} parent=1 // pred_fallthru
      _
    %s64 = smul.u32 0, 16
    %s65 = sld [smem:[#allocation5 + %s64]]
    %s66 = sadd.s32 %s64, 1
    %s67 = sld [smem:[#allocation5 + %s66]]
    %s68 = sadd.s32 %s64, 2
    %s69 = sld [smem:[#allocation5 + %s68]]
    %s70 = sadd.s32 %s64, 3
    %s71 = sld [smem:[#allocation5 + %s70]]
    %s72 = sadd.s32 %s64, 4
    %s73 = sld [smem:[#allocation5 + %s72]]
    %s74 = sadd.s32 %s64, 5
    %s75 = sld [smem:[#allocation5 + %s74]]
    %s76 = sadd.s32 %s64, 6
    %s77 = sld [smem:[#allocation5 + %s76]]
    %s78 = sadd.s32 %s64, 7
    %s79 = sld [smem:[#allocation5 + %s78]]
    %s80 = sadd.s32 %s64, 8
    %s81 = sld [smem:[#allocation5 + %s80]]
    %s82 = sadd.s32 %s64, 9
    %s83 = sld [smem:[#allocation5 + %s82]]
    %s84 = sadd.s32 %s64, 10
    %s85 = sld [smem:[#allocation5 + %s84]]
    %s86 = sadd.s32 %s64, 11
    %s87 = sld [smem:[#allocation5 + %s86]]
    %s88 = sadd.s32 %s64, 12
    %s89 = sld [smem:[#allocation5 + %s88]]
    %s90 = sadd.s32 %s64, 13
    %s91 = sld [smem:[#allocation5 + %s90]]
    %s92 = sadd.s32 %s64, 14
    %s93 = sld [smem:[#allocation5 + %s92]]
    %s94 = sadd.s32 %s64, 15
    %s95 = sld [smem:[#allocation5 + %s94]]
    %s96 = scalar_lea.hbm %s2, %s65
    // Predicated region
    $region26: #{tpu_custom_call.1} parent=1 // pred_check
      _
    $region27: #{tpu_custom_call.1} parent=1 // pred_check_branch
      %98 = sbr.rel target = $region29
    $region28: #{tpu_custom_call.1} parent=1 // pred_region
      %99 = sst [smem:[#allocation16]] [#allocation15]
      %100 = sst [smem:[#allocation17]] [#allocation14]
    $region29: #{tpu_custom_call.1} parent=1 // pred_fallthru
      _
    %102 = shalt.err (0)
    %s104 = sshll.u32 %s96, 4
    %s105 = int_to_ptr.hbm [resolvable:$true] %s104
    %s106 = sshll.u32 [#allocation2], 4
    %s107 = int_to_ptr.vmem [resolvable:$true] %s106
    %109 = dma.hbm_to_vmem [thread:$0]  %s105, 256, %s107, [#allocation3]
    %s110 = scalar_lea.hbm %s2, %s67
    %s111 = scalar_lea.vmem [#allocation2], 16
    %s112 = scalar_lea.sflag [#allocation3], 1
    // Predicated region
    $region30: #{tpu_custom_call.1} parent=1 // pred_check
      _
    $region31: #{tpu_custom_call.1} parent=1 // pred_check_branch
      %114 = sbr.rel target = $region33
    $region32: #{tpu_custom_call.1} parent=1 // pred_region
      %115 = sst [smem:[#allocation16]] [#allocation19]
      %116 = sst [smem:[#allocation17]] [#allocation18]
    $region33: #{tpu_custom_call.1} parent=1 // pred_fallthru
      _
    %118 = shalt.err (0)
    %s120 = sshll.u32 %s110, 4
    %s121 = int_to_ptr.hbm [resolvable:$true] %s120
    %s122 = sshll.u32 %s111, 4
    %s123 = int_to_ptr.vmem [resolvable:$true] %s122
    %125 = dma.hbm_to_vmem [thread:$0]  %s121, 256, %s123, %s112
    %s126 = scalar_lea.hbm %s2, %s69
    %s127 = scalar_lea.vmem [#allocation2], 32
    %s128 = scalar_lea.sflag [#allocation3], 2
    // Predicated region
    $region34: #{tpu_custom_call.1} parent=1 // pred_check
      _
    $region35: #{tpu_custom_call.1} parent=1 // pred_check_branch
      %130 = sbr.rel target = $region37
    $region36: #{tpu_custom_call.1} parent=1 // pred_region
      %131 = sst [smem:[#allocation16]] [#allocation21]
      %132 = sst [smem:[#allocation17]] [#allocation20]
    $region37: #{tpu_custom_call.1} parent=1 // pred_fallthru
      _
    %134 = shalt.err (0)
    %s136 = sshll.u32 %s126, 4
    %s137 = int_to_ptr.hbm [resolvable:$true] %s136
    %s138 = sshll.u32 %s127, 4
    %s139 = int_to_ptr.vmem [resolvable:$true] %s138
    %141 = dma.hbm_to_vmem [thread:$0]  %s137, 256, %s139, %s128
    %s142 = scalar_lea.hbm %s2, %s71
    %s143 = scalar_lea.vmem [#allocation2], 48
    %s144 = scalar_lea.sflag [#allocation3], 3
    // Predicated region
    $region38: #{tpu_custom_call.1} parent=1 // pred_check
      _
    $region39: #{tpu_custom_call.1} parent=1 // pred_check_branch
      %146 = sbr.rel target = $region41
    $region40: #{tpu_custom_call.1} parent=1 // pred_region
      %147 = sst [smem:[#allocation16]] [#allocation23]
      %148 = sst [smem:[#allocation17]] [#allocation22]
    $region41: #{tpu_custom_call.1} parent=1 // pred_fallthru
      _
    %150 = shalt.err (0)
    %s152 = sshll.u32 %s142, 4
    %s153 = int_to_ptr.hbm [resolvable:$true] %s152
    %s154 = sshll.u32 %s143, 4
    %s155 = int_to_ptr.vmem [resolvable:$true] %s154
    %157 = dma.hbm_to_vmem [thread:$0]  %s153, 256, %s155, %s144
    %s158 = scalar_lea.hbm %s2, %s73
    %s159 = scalar_lea.vmem [#allocation2], 64
    %s160 = scalar_lea.sflag [#allocation3], 4
    // Predicated region
    $region42: #{tpu_custom_call.1} parent=1 // pred_check
      _
    $region43: #{tpu_custom_call.1} parent=1 // pred_check_branch
      %162 = sbr.rel target = $region45
    $region44: #{tpu_custom_call.1} parent=1 // pred_region
      %163 = sst [smem:[#allocation16]] [#allocation25]
      %164 = sst [smem:[#allocation17]] [#allocation24]
    $region45: #{tpu_custom_call.1} parent=1 // pred_fallthru
      _
    %166 = shalt.err (0)
    %s168 = sshll.u32 %s158, 4
    %s169 = int_to_ptr.hbm [resolvable:$true] %s168
    %s170 = sshll.u32 %s159, 4
    %s171 = int_to_ptr.vmem [resolvable:$true] %s170
    %173 = dma.hbm_to_vmem [thread:$0]  %s169, 256, %s171, %s160
    %s174 = scalar_lea.hbm %s2, %s75
    %s175 = scalar_lea.vmem [#allocation2], 80
    %s176 = scalar_lea.sflag [#allocation3], 5
    // Predicated region
    $region46: #{tpu_custom_call.1} parent=1 // pred_check
      _
    $region47: #{tpu_custom_call.1} parent=1 // pred_check_branch
      %178 = sbr.rel target = $region49
    $region48: #{tpu_custom_call.1} parent=1 // pred_region
      %179 = sst [smem:[#allocation16]] [#allocation27]
      %180 = sst [smem:[#allocation17]] [#allocation26]
    $region49: #{tpu_custom_call.1} parent=1 // pred_fallthru
      _
    %182 = shalt.err (0)
    %s184 = sshll.u32 %s174, 4
    %s185 = int_to_ptr.hbm [resolvable:$true] %s184
    %s186 = sshll.u32 %s175, 4
    %s187 = int_to_ptr.vmem [resolvable:$true] %s186
    %189 = dma.hbm_to_vmem [thread:$0]  %s185, 256, %s187, %s176
    %s190 = scalar_lea.hbm %s2, %s77
    %s191 = scalar_lea.vmem [#allocation2], 96
    %s192 = scalar_lea.sflag [#allocation3], 6
    // Predicated region
    $region50: #{tpu_custom_call.1} parent=1 // pred_check
      _
    $region51: #{tpu_custom_call.1} parent=1 // pred_check_branch
      %194 = sbr.rel target = $region53
    $region52: #{tpu_custom_call.1} parent=1 // pred_region
      %195 = sst [smem:[#allocation16]] [#allocation29]
      %196 = sst [smem:[#allocation17]] [#allocation28]
    $region53: #{tpu_custom_call.1} parent=1 // pred_fallthru
      _
    %198 = shalt.err (0)
    %s200 = sshll.u32 %s190, 4
    %s201 = int_to_ptr.hbm [resolvable:$true] %s200
    %s202 = sshll.u32 %s191, 4
    %s203 = int_to_ptr.vmem [resolvable:$true] %s202
    %205 = dma.hbm_to_vmem [thread:$0]  %s201, 256, %s203, %s192
    %s206 = scalar_lea.hbm %s2, %s79
    %s207 = scalar_lea.vmem [#allocation2], 112
    %s208 = scalar_lea.sflag [#allocation3], 7
    // Predicated region
    $region54: #{tpu_custom_call.1} parent=1 // pred_check
      _
    $region55: #{tpu_custom_call.1} parent=1 // pred_check_branch
      %210 = sbr.rel target = $region57
    $region56: #{tpu_custom_call.1} parent=1 // pred_region
      %211 = sst [smem:[#allocation16]] [#allocation31]
      %212 = sst [smem:[#allocation17]] [#allocation30]
    $region57: #{tpu_custom_call.1} parent=1 // pred_fallthru
      _
    %214 = shalt.err (0)
    %s216 = sshll.u32 %s206, 4
    %s217 = int_to_ptr.hbm [resolvable:$true] %s216
    %s218 = sshll.u32 %s207, 4
    %s219 = int_to_ptr.vmem [resolvable:$true] %s218
    %221 = dma.hbm_to_vmem [thread:$0]  %s217, 256, %s219, %s208
    %s222 = scalar_lea.hbm %s2, %s81
    %s223 = scalar_lea.vmem [#allocation2], 128
    %s224 = scalar_lea.sflag [#allocation3], 8
    // Predicated region
    $region58: #{tpu_custom_call.1} parent=1 // pred_check
      _
    $region59: #{tpu_custom_call.1} parent=1 // pred_check_branch
      %226 = sbr.rel target = $region61
    $region60: #{tpu_custom_call.1} parent=1 // pred_region
      %227 = sst [smem:[#allocation16]] [#allocation33]
      %228 = sst [smem:[#allocation17]] [#allocation32]
    $region61: #{tpu_custom_call.1} parent=1 // pred_fallthru
      _
    %230 = shalt.err (0)
    %s232 = sshll.u32 %s222, 4
    %s233 = int_to_ptr.hbm [resolvable:$true] %s232
    %s234 = sshll.u32 %s223, 4
    %s235 = int_to_ptr.vmem [resolvable:$true] %s234
    %237 = dma.hbm_to_vmem [thread:$0]  %s233, 256, %s235, %s224
    %s238 = scalar_lea.hbm %s2, %s83
    %s239 = scalar_lea.vmem [#allocation2], 144
    %s240 = scalar_lea.sflag [#allocation3], 9
    // Predicated region
    $region62: #{tpu_custom_call.1} parent=1 // pred_check
      _
    $region63: #{tpu_custom_call.1} parent=1 // pred_check_branch
      %242 = sbr.rel target = $region65
    $region64: #{tpu_custom_call.1} parent=1 // pred_region
      %243 = sst [smem:[#allocation16]] [#allocation35]
      %244 = sst [smem:[#allocation17]] [#allocation34]
    $region65: #{tpu_custom_call.1} parent=1 // pred_fallthru
      _
    %246 = shalt.err (0)
    %s248 = sshll.u32 %s238, 4
    %s249 = int_to_ptr.hbm [resolvable:$true] %s248
    %s250 = sshll.u32 %s239, 4
    %s251 = int_to_ptr.vmem [resolvable:$true] %s250
    %253 = dma.hbm_to_vmem [thread:$0]  %s249, 256, %s251, %s240
    %s254 = scalar_lea.hbm %s2, %s85
    %s255 = scalar_lea.vmem [#allocation2], 160
    %s256 = scalar_lea.sflag [#allocation3], 10
    // Predicated region
    $region66: #{tpu_custom_call.1} parent=1 // pred_check
      _
    $region67: #{tpu_custom_call.1} parent=1 // pred_check_branch
      %258 = sbr.rel target = $region69
    $region68: #{tpu_custom_call.1} parent=1 // pred_region
      %259 = sst [smem:[#allocation16]] [#allocation37]
      %260 = sst [smem:[#allocation17]] [#allocation36]
    $region69: #{tpu_custom_call.1} parent=1 // pred_fallthru
      _
    %262 = shalt.err (0)
    %s264 = sshll.u32 %s254, 4
    %s265 = int_to_ptr.hbm [resolvable:$true] %s264
    %s266 = sshll.u32 %s255, 4
    %s267 = int_to_ptr.vmem [resolvable:$true] %s266
    %269 = dma.hbm_to_vmem [thread:$0]  %s265, 256, %s267, %s256
    %s270 = scalar_lea.hbm %s2, %s87
    %s271 = scalar_lea.vmem [#allocation2], 176
    %s272 = scalar_lea.sflag [#allocation3], 11
    // Predicated region
    $region70: #{tpu_custom_call.1} parent=1 // pred_check
      _
    $region71: #{tpu_custom_call.1} parent=1 // pred_check_branch
      %274 = sbr.rel target = $region73
    $region72: #{tpu_custom_call.1} parent=1 // pred_region
      %275 = sst [smem:[#allocation16]] [#allocation39]
      %276 = sst [smem:[#allocation17]] [#allocation38]
    $region73: #{tpu_custom_call.1} parent=1 // pred_fallthru
      _
    %278 = shalt.err (0)
    %s280 = sshll.u32 %s270, 4
    %s281 = int_to_ptr.hbm [resolvable:$true] %s280
    %s282 = sshll.u32 %s271, 4
    %s283 = int_to_ptr.vmem [resolvable:$true] %s282
    %285 = dma.hbm_to_vmem [thread:$0]  %s281, 256, %s283, %s272
    %s286 = scalar_lea.hbm %s2, %s89
    %s287 = scalar_lea.vmem [#allocation2], 192
    %s288 = scalar_lea.sflag [#allocation3], 12
    // Predicated region
    $region74: #{tpu_custom_call.1} parent=1 // pred_check
      _
    $region75: #{tpu_custom_call.1} parent=1 // pred_check_branch
      %290 = sbr.rel target = $region77
    $region76: #{tpu_custom_call.1} parent=1 // pred_region
      %291 = sst [smem:[#allocation16]] [#allocation41]
      %292 = sst [smem:[#allocation17]] [#allocation40]
    $region77: #{tpu_custom_call.1} parent=1 // pred_fallthru
      _
    %294 = shalt.err (0)
    %s296 = sshll.u32 %s286, 4
    %s297 = int_to_ptr.hbm [resolvable:$true] %s296
    %s298 = sshll.u32 %s287, 4
    %s299 = int_to_ptr.vmem [resolvable:$true] %s298
    %301 = dma.hbm_to_vmem [thread:$0]  %s297, 256, %s299, %s288
    %s302 = scalar_lea.hbm %s2, %s91
    %s303 = scalar_lea.vmem [#allocation2], 208
    %s304 = scalar_lea.sflag [#allocation3], 13
    // Predicated region
    $region78: #{tpu_custom_call.1} parent=1 // pred_check
      _
    $region79: #{tpu_custom_call.1} parent=1 // pred_check_branch
      %306 = sbr.rel target = $region81
    $region80: #{tpu_custom_call.1} parent=1 // pred_region
      %307 = sst [smem:[#allocation16]] [#allocation43]
      %308 = sst [smem:[#allocation17]] [#allocation42]
    $region81: #{tpu_custom_call.1} parent=1 // pred_fallthru
      _
    %310 = shalt.err (0)
    %s312 = sshll.u32 %s302, 4
    %s313 = int_to_ptr.hbm [resolvable:$true] %s312
    %s314 = sshll.u32 %s303, 4
    %s315 = int_to_ptr.vmem [resolvable:$true] %s314
    %317 = dma.hbm_to_vmem [thread:$0]  %s313, 256, %s315, %s304
    %s318 = scalar_lea.hbm %s2, %s93
    %s319 = scalar_lea.vmem [#allocation2], 224
    %s320 = scalar_lea.sflag [#allocation3], 14
    // Predicated region
    $region82: #{tpu_custom_call.1} parent=1 // pred_check
      _
    $region83: #{tpu_custom_call.1} parent=1 // pred_check_branch
      %322 = sbr.rel target = $region85
    $region84: #{tpu_custom_call.1} parent=1 // pred_region
      %323 = sst [smem:[#allocation16]] [#allocation45]
      %324 = sst [smem:[#allocation17]] [#allocation44]
    $region85: #{tpu_custom_call.1} parent=1 // pred_fallthru
      _
    %326 = shalt.err (0)
    %s328 = sshll.u32 %s318, 4
    %s329 = int_to_ptr.hbm [resolvable:$true] %s328
    %s330 = sshll.u32 %s319, 4
    %s331 = int_to_ptr.vmem [resolvable:$true] %s330
    %333 = dma.hbm_to_vmem [thread:$0]  %s329, 256, %s331, %s320
    %s334 = scalar_lea.hbm %s2, %s95
    %s335 = scalar_lea.vmem [#allocation2], 240
    %s336 = scalar_lea.sflag [#allocation3], 15
    // Predicated region
    $region86: #{tpu_custom_call.1} parent=1 // pred_check
      _
    $region87: #{tpu_custom_call.1} parent=1 // pred_check_branch
      %338 = sbr.rel target = $region89
    $region88: #{tpu_custom_call.1} parent=1 // pred_region
      %339 = sst [smem:[#allocation16]] [#allocation47]
      %340 = sst [smem:[#allocation17]] [#allocation46]
    $region89: #{tpu_custom_call.1} parent=1 // pred_fallthru
      _
    %342 = shalt.err (0)
    %s344 = sshll.u32 %s334, 4
    %s345 = int_to_ptr.hbm [resolvable:$true] %s344
    %s346 = sshll.u32 %s335, 4
    %s347 = int_to_ptr.vmem [resolvable:$true] %s346
    %349 = dma.hbm_to_vmem [thread:$0]  %s345, 256, %s347, %s336
    %s350 = smul.u32 16, 1
    %s351 = sshll.u32 %s350, 4
    %352 = dma.done [#allocation3], %s351
    %s353 = sshll.u32 %s350, 4
    %354 = dma.done %s112, %s353
    %s355 = sshll.u32 %s350, 4
    %356 = dma.done %s128, %s355
    %s357 = sshll.u32 %s350, 4
    %358 = dma.done %s144, %s357
    %s359 = sshll.u32 %s350, 4
    %360 = dma.done %s160, %s359
    %s361 = sshll.u32 %s350, 4
    %362 = dma.done %s176, %s361
    %s363 = sshll.u32 %s350, 4
    %364 = dma.done %s192, %s363
    %s365 = sshll.u32 %s350, 4
    %366 = dma.done %s208, %s365
    %s367 = sshll.u32 %s350, 4
    %368 = dma.done %s224, %s367
    %s369 = sshll.u32 %s350, 4
    %370 = dma.done %s240, %s369
    %s371 = sshll.u32 %s350, 4
    %372 = dma.done %s256, %s371
    %s373 = sshll.u32 %s350, 4
    %374 = dma.done %s272, %s373
    %s375 = sshll.u32 %s350, 4
    %376 = dma.done %s288, %s375
    %s377 = sshll.u32 %s350, 4
    %378 = dma.done %s304, %s377
    %s379 = sshll.u32 %s350, 4
    %380 = dma.done %s320, %s379
    %s381 = sshll.u32 %s350, 4
    %382 = dma.done %s336, %s381
    %v383 = vld [vmem:[#allocation2] sm:$0xff]
    %v384 = vld [vmem:[#allocation2 + $0x8] sm:$0xff]
    %v385 = vld [vmem:[#allocation2 + $0x10] sm:$0xff]
    %v386 = vld [vmem:[#allocation2 + $0x18] sm:$0xff]
    %v387 = vld [vmem:[#allocation2 + $0x20] sm:$0xff]
    %v388 = vld [vmem:[#allocation2 + $0x28] sm:$0xff]
    %v389 = vld [vmem:[#allocation2 + $0x30] sm:$0xff]
    %v390 = vld [vmem:[#allocation2 + $0x38] sm:$0xff]
    %v391 = vld [vmem:[#allocation2 + $0x40] sm:$0xff]
    %v392 = vld [vmem:[#allocation2 + $0x48] sm:$0xff]
    %v393 = vld [vmem:[#allocation2 + $0x50] sm:$0xff]
    %v394 = vld [vmem:[#allocation2 + $0x58] sm:$0xff]
    %v395 = vld [vmem:[#allocation2 + $0x60] sm:$0xff]
    %v396 = vld [vmem:[#allocation2 + $0x68] sm:$0xff]
    %v397 = vld [vmem:[#allocation2 + $0x70] sm:$0xff]
    %v398 = vld [vmem:[#allocation2 + $0x78] sm:$0xff]
    %v399 = vld [vmem:[#allocation2 + $0x80] sm:$0xff]
    %v400 = vld [vmem:[#allocation2 + $0x88] sm:$0xff]
    %v401 = vld [vmem:[#allocation2 + $0x90] sm:$0xff]
    %v402 = vld [vmem:[#allocation2 + $0x98] sm:$0xff]
    %v403 = vld [vmem:[#allocation2 + $0xa0] sm:$0xff]
    %v404 = vld [vmem:[#allocation2 + $0xa8] sm:$0xff]
    %v405 = vld [vmem:[#allocation2 + $0xb0] sm:$0xff]
    %v406 = vld [vmem:[#allocation2 + $0xb8] sm:$0xff]
    %v407 = vld [vmem:[#allocation2 + $0xc0] sm:$0xff]
    %v408 = vld [vmem:[#allocation2 + $0xc8] sm:$0xff]
    %v409 = vld [vmem:[#allocation2 + $0xd0] sm:$0xff]
    %v410 = vld [vmem:[#allocation2 + $0xd8] sm:$0xff]
    %v411 = vld [vmem:[#allocation2 + $0xe0] sm:$0xff]
    %v412 = vld [vmem:[#allocation2 + $0xe8] sm:$0xff]
    %v413 = vld [vmem:[#allocation2 + $0xf0] sm:$0xff]
    %v414 = vld [vmem:[#allocation2 + $0xf8] sm:$0xff]
    %v415 = vpack.c.bf16 %v384, %v383
    %v416 = vpack.c.bf16 %v386, %v385
    %v417 = vpack.c.bf16 %v388, %v387
    %v418 = vpack.c.bf16 %v390, %v389
    %v419 = vpack.c.bf16 %v392, %v391
    %v420 = vpack.c.bf16 %v394, %v393
    %v421 = vpack.c.bf16 %v396, %v395
    %v422 = vpack.c.bf16 %v398, %v397
    %v423 = vpack.c.bf16 %v400, %v399
    %v424 = vpack.c.bf16 %v402, %v401
    %v425 = vpack.c.bf16 %v404, %v403
    %v426 = vpack.c.bf16 %v406, %v405
    %v427 = vpack.c.bf16 %v408, %v407
    %v428 = vpack.c.bf16 %v410, %v409
    %v429 = vpack.c.bf16 %v412, %v411
    %v430 = vpack.c.bf16 %v414, %v413
    %v431 = vld [vmem:[#allocation6] sm:$0xff]
    %v432 = vld [vmem:[#allocation6 + $0x8] sm:$0xf]
    %v433 = vld [vmem:[#allocation6 + $0xc] sm:$0xff]
    %v434 = vld [vmem:[#allocation6 + $0x14] sm:$0xf]
    %v435 = vld [vmem:[#allocation6 + $0x18] sm:$0xff]
    %v436 = vld [vmem:[#allocation6 + $0x20] sm:$0xf]
    %v437 = vld [vmem:[#allocation6 + $0x24] sm:$0xff]
    %v438 = vld [vmem:[#allocation6 + $0x2c] sm:$0xf]
    %v439 = vld [vmem:[#allocation6 + $0x30] sm:$0xff]
    %v440 = vld [vmem:[#allocation6 + $0x38] sm:$0xf]
    %v441 = vld [vmem:[#allocation6 + $0x3c] sm:$0xff]
    %v442 = vld [vmem:[#allocation6 + $0x44] sm:$0xf]
    %v443 = vld [vmem:[#allocation6 + $0x48] sm:$0xff]
    %v444 = vld [vmem:[#allocation6 + $0x50] sm:$0xf]
    %v445 = vld [vmem:[#allocation6 + $0x54] sm:$0xff]
    %v446 = vld [vmem:[#allocation6 + $0x5c] sm:$0xf]
    %v447 = vld [vmem:[#allocation6 + $0x60] sm:$0xff]
    %v448 = vld [vmem:[#allocation6 + $0x68] sm:$0xf]
    %v449 = vld [vmem:[#allocation6 + $0x6c] sm:$0xff]
    %v450 = vld [vmem:[#allocation6 + $0x74] sm:$0xf]
    %v451 = vld [vmem:[#allocation6 + $0x78] sm:$0xff]
    %v452 = vld [vmem:[#allocation6 + $0x80] sm:$0xf]
    %v453 = vld [vmem:[#allocation6 + $0x84] sm:$0xff]
    %v454 = vld [vmem:[#allocation6 + $0x8c] sm:$0xf]
    %v455 = vld [vmem:[#allocation6 + $0x90] sm:$0xff]
    %v456 = vld [vmem:[#allocation6 + $0x98] sm:$0xf]
    %v457 = vld [vmem:[#allocation6 + $0x9c] sm:$0xff]
    %v458 = vld [vmem:[#allocation6 + $0xa4] sm:$0xf]
    %v459 = vld [vmem:[#allocation6 + $0xa8] sm:$0xff]
    %v460 = vld [vmem:[#allocation6 + $0xb0] sm:$0xf]
    %v461 = vld [vmem:[#allocation6 + $0xb4] sm:$0xff]
    %v462 = vld [vmem:[#allocation6 + $0xbc] sm:$0xf]
    %v463 = vld [vmem:[%s4] sm:$0x7]
    %v465 = vperm.slane %v463, 0
    %v466 = vperm.slane %v463, 1
    %v467 = vperm.slane %v463, 2
    %v503 = vunpack.c.l.b16 %v431
    %v504 = vunpack.c.h.b16 %v431
    %v505 = vunpack.c.l.b16 %v432
    %v506 = vunpack.c.l.b16 %v433
    %v507 = vunpack.c.h.b16 %v433
    %v508 = vunpack.c.l.b16 %v434
    %v509 = vunpack.c.l.b16 %v435
    %v510 = vunpack.c.h.b16 %v435
    %v511 = vunpack.c.l.b16 %v436
    %v512 = vunpack.c.l.b16 %v437
    %v513 = vunpack.c.h.b16 %v437
    %v514 = vunpack.c.l.b16 %v438
    %v515 = vunpack.c.l.b16 %v439
    %v516 = vunpack.c.h.b16 %v439
    %v517 = vunpack.c.l.b16 %v440
    %v518 = vunpack.c.l.b16 %v441
    %v519 = vunpack.c.h.b16 %v441
    %v520 = vunpack.c.l.b16 %v442
    %v521 = vunpack.c.l.b16 %v443
    %v522 = vunpack.c.h.b16 %v443
    %v523 = vunpack.c.l.b16 %v444
    %v524 = vunpack.c.l.b16 %v445
    %v525 = vunpack.c.h.b16 %v445
    %v526 = vunpack.c.l.b16 %v446
    %v527 = vunpack.c.l.b16 %v447
    %v528 = vunpack.c.h.b16 %v447
    %v529 = vunpack.c.l.b16 %v448
    %v530 = vunpack.c.l.b16 %v449
    %v531 = vunpack.c.h.b16 %v449
    %v532 = vunpack.c.l.b16 %v450
    %v533 = vunpack.c.l.b16 %v451
    %v534 = vunpack.c.h.b16 %v451
    %v535 = vunpack.c.l.b16 %v452
    %v536 = vunpack.c.l.b16 %v453
    %v537 = vunpack.c.h.b16 %v453
    %v538 = vunpack.c.l.b16 %v454
    %v539 = vunpack.c.l.b16 %v455
    %v540 = vunpack.c.h.b16 %v455
    %v541 = vunpack.c.l.b16 %v456
    %v542 = vunpack.c.l.b16 %v457
    %v543 = vunpack.c.h.b16 %v457
    %v544 = vunpack.c.l.b16 %v458
    %v545 = vunpack.c.l.b16 %v459
    %v546 = vunpack.c.h.b16 %v459
    %v547 = vunpack.c.l.b16 %v460
    %v548 = vunpack.c.l.b16 %v461
    %v549 = vunpack.c.h.b16 %v461
    %v550 = vunpack.c.l.b16 %v462
    %v551 = vpack.c.b16 %v506, %v503
    %v552 = vpack.c.b16 %v507, %v504
    %v553 = vpack.c.b16 %v508, %v505
    %v554 = vpack.c.b16 %v512, %v509
    %v555 = vpack.c.b16 %v513, %v510
    %v556 = vpack.c.b16 %v514, %v511
    %v557 = vpack.c.b16 %v518, %v515
    %v558 = vpack.c.b16 %v519, %v516
    %v559 = vpack.c.b16 %v520, %v517
    %v560 = vpack.c.b16 %v524, %v521
    %v561 = vpack.c.b16 %v525, %v522
    %v562 = vpack.c.b16 %v526, %v523
    %v563 = vpack.c.b16 %v530, %v527
    %v564 = vpack.c.b16 %v531, %v528
    %v565 = vpack.c.b16 %v532, %v529
    %v566 = vpack.c.b16 %v536, %v533
    %v567 = vpack.c.b16 %v537, %v534
    %v568 = vpack.c.b16 %v538, %v535
    %v569 = vpack.c.b16 %v542, %v539
    %v570 = vpack.c.b16 %v543, %v540
    %v571 = vpack.c.b16 %v544, %v541
    %v572 = vpack.c.b16 %v548, %v545
    %v573 = vpack.c.b16 %v549, %v546
    %v574 = vpack.c.b16 %v550, %v547
    %599 = vmatpush.bf16.msra.mxu0 %v572
    %600 = vmatpush.bf16.msra.mxu0 %v569
    %601 = vmatpush.bf16.msra.mxu0 %v566
    %602 = vmatpush.bf16.msra.mxu0 %v563
    %603 = vmatpush.bf16.msra.mxu0 %v560
    %604 = vmatpush.bf16.msra.mxu0 %v557
    %605 = vmatpush.bf16.msra.mxu0 %v554
    %606 = vmatpush.bf16.msra.mxu0 %v551
    %607 = vmatmul.bf16.gmra.mxu0 %v415
    %v608 = vpop.f32.mrf.mxu0
    %v609 = vadd.f32 %v465, %v608
    %v610 = vpop.f32.mrf.mxu0
    %v611 = vadd.f32 %v465, %v610
    %612 = vmatmul.bf16.gmra.mxu0 %v416
    %v613 = vpop.f32.mrf.mxu0
    %v614 = vadd.f32 %v465, %v613
    %v615 = vpop.f32.mrf.mxu0
    %v616 = vadd.f32 %v465, %v615
    %617 = vmatmul.bf16.gmra.mxu0 %v417
    %v618 = vpop.f32.mrf.mxu0
    %v619 = vadd.f32 %v465, %v618
    %v620 = vpop.f32.mrf.mxu0
    %v621 = vadd.f32 %v465, %v620
    %622 = vmatmul.bf16.gmra.mxu0 %v418
    %v623 = vpop.f32.mrf.mxu0
    %v624 = vadd.f32 %v465, %v623
    %v625 = vpop.f32.mrf.mxu0
    %v626 = vadd.f32 %v465, %v625
    %627 = vmatmul.bf16.gmra.mxu0 %v419
    %v628 = vpop.f32.mrf.mxu0
    %v629 = vadd.f32 %v465, %v628
    %v630 = vpop.f32.mrf.mxu0
    %v631 = vadd.f32 %v465, %v630
    %632 = vmatmul.bf16.gmra.mxu0 %v420
    %v633 = vpop.f32.mrf.mxu0
    %v634 = vadd.f32 %v465, %v633
    %v635 = vpop.f32.mrf.mxu0
    %v636 = vadd.f32 %v465, %v635
    %637 = vmatmul.bf16.gmra.mxu0 %v421
    %v638 = vpop.f32.mrf.mxu0
    %v639 = vadd.f32 %v465, %v638
    %v640 = vpop.f32.mrf.mxu0
    %v641 = vadd.f32 %v465, %v640
    %642 = vmatmul.bf16.gmra.mxu0 %v422
    %v643 = vpop.f32.mrf.mxu0
    %v644 = vadd.f32 %v465, %v643
    %v645 = vpop.f32.mrf.mxu0
    %v646 = vadd.f32 %v465, %v645
    %647 = vmatmul.bf16.gmra.mxu0 %v423
    %v648 = vpop.f32.mrf.mxu0
    %v649 = vadd.f32 %v465, %v648
    %v650 = vpop.f32.mrf.mxu0
    %v651 = vadd.f32 %v465, %v650
    %652 = vmatmul.bf16.gmra.mxu0 %v424
    %v653 = vpop.f32.mrf.mxu0
    %v654 = vadd.f32 %v465, %v653
    %v655 = vpop.f32.mrf.mxu0
    %v656 = vadd.f32 %v465, %v655
    %657 = vmatmul.bf16.gmra.mxu0 %v425
    %v658 = vpop.f32.mrf.mxu0
    %v659 = vadd.f32 %v465, %v658
    %v660 = vpop.f32.mrf.mxu0
    %v661 = vadd.f32 %v465, %v660
    %662 = vmatmul.bf16.gmra.mxu0 %v426
    %v663 = vpop.f32.mrf.mxu0
    %v664 = vadd.f32 %v465, %v663
    %v665 = vpop.f32.mrf.mxu0
    %v666 = vadd.f32 %v465, %v665
    %667 = vmatmul.bf16.gmra.mxu0 %v427
    %v668 = vpop.f32.mrf.mxu0
    %v669 = vadd.f32 %v465, %v668
    %v670 = vpop.f32.mrf.mxu0
    %v671 = vadd.f32 %v465, %v670
    %672 = vmatmul.bf16.gmra.mxu0 %v428
    %v673 = vpop.f32.mrf.mxu0
    %v674 = vadd.f32 %v465, %v673
    %v675 = vpop.f32.mrf.mxu0
    %v676 = vadd.f32 %v465, %v675
    %677 = vmatmul.bf16.gmra.mxu0 %v429
    %v678 = vpop.f32.mrf.mxu0
    %v679 = vadd.f32 %v465, %v678
    %v680 = vpop.f32.mrf.mxu0
    %v681 = vadd.f32 %v465, %v680
    %682 = vmatmul.bf16.gmra.mxu0 %v430
    %v683 = vpop.f32.mrf.mxu0
    %v684 = vadd.f32 %v465, %v683
    %v685 = vpop.f32.mrf.mxu0
    %v686 = vadd.f32 %v465, %v685
    %687 = vdwg.mxu0
    %688 = vmatpush.bf16.msra.mxu0 %v573
    %689 = vmatpush.bf16.msra.mxu0 %v570
    %690 = vmatpush.bf16.msra.mxu0 %v567
    %691 = vmatpush.bf16.msra.mxu0 %v564
    %692 = vmatpush.bf16.msra.mxu0 %v561
    %693 = vmatpush.bf16.msra.mxu0 %v558
    %694 = vmatpush.bf16.msra.mxu0 %v555
    %695 = vmatpush.bf16.msra.mxu0 %v552
    %696 = vmatmul.bf16.gmra.mxu0 %v415
    %v697 = vpop.f32.mrf.mxu0
    %v698 = vadd.f32 %v466, %v697
    %v699 = vpop.f32.mrf.mxu0
    %v700 = vadd.f32 %v466, %v699
    %701 = vmatmul.bf16.gmra.mxu0 %v416
    %v702 = vpop.f32.mrf.mxu0
    %v703 = vadd.f32 %v466, %v702
    %v704 = vpop.f32.mrf.mxu0
    %v705 = vadd.f32 %v466, %v704
    %706 = vmatmul.bf16.gmra.mxu0 %v417
    %v707 = vpop.f32.mrf.mxu0
    %v708 = vadd.f32 %v466, %v707
    %v709 = vpop.f32.mrf.mxu0
    %v710 = vadd.f32 %v466, %v709
    %711 = vmatmul.bf16.gmra.mxu0 %v418
    %v712 = vpop.f32.mrf.mxu0
    %v713 = vadd.f32 %v466, %v712
    %v714 = vpop.f32.mrf.mxu0
    %v715 = vadd.f32 %v466, %v714
    %716 = vmatmul.bf16.gmra.mxu0 %v419
    %v717 = vpop.f32.mrf.mxu0
    %v718 = vadd.f32 %v466, %v717
    %v719 = vpop.f32.mrf.mxu0
    %v720 = vadd.f32 %v466, %v719
    %721 = vmatmul.bf16.gmra.mxu0 %v420
    %v722 = vpop.f32.mrf.mxu0
    %v723 = vadd.f32 %v466, %v722
    %v724 = vpop.f32.mrf.mxu0
    %v725 = vadd.f32 %v466, %v724
    %726 = vmatmul.bf16.gmra.mxu0 %v421
    %v727 = vpop.f32.mrf.mxu0
    %v728 = vadd.f32 %v466, %v727
    %v729 = vpop.f32.mrf.mxu0
    %v730 = vadd.f32 %v466, %v729
    %731 = vmatmul.bf16.gmra.mxu0 %v422
    %v732 = vpop.f32.mrf.mxu0
    %v733 = vadd.f32 %v466, %v732
    %v734 = vpop.f32.mrf.mxu0
    %v735 = vadd.f32 %v466, %v734
    %736 = vmatmul.bf16.gmra.mxu0 %v423
    %v737 = vpop.f32.mrf.mxu0
    %v738 = vadd.f32 %v466, %v737
    %v739 = vpop.f32.mrf.mxu0
    %v740 = vadd.f32 %v466, %v739
    %741 = vmatmul.bf16.gmra.mxu0 %v424
    %v742 = vpop.f32.mrf.mxu0
    %v743 = vadd.f32 %v466, %v742
    %v744 = vpop.f32.mrf.mxu0
    %v745 = vadd.f32 %v466, %v744
    %746 = vmatmul.bf16.gmra.mxu0 %v425
    %v747 = vpop.f32.mrf.mxu0
    %v748 = vadd.f32 %v466, %v747
    %v749 = vpop.f32.mrf.mxu0
    %v750 = vadd.f32 %v466, %v749
    %751 = vmatmul.bf16.gmra.mxu0 %v426
    %v752 = vpop.f32.mrf.mxu0
    %v753 = vadd.f32 %v466, %v752
    %v754 = vpop.f32.mrf.mxu0
    %v755 = vadd.f32 %v466, %v754
    %756 = vmatmul.bf16.gmra.mxu0 %v427
    %v757 = vpop.f32.mrf.mxu0
    %v758 = vadd.f32 %v466, %v757
    %v759 = vpop.f32.mrf.mxu0
    %v760 = vadd.f32 %v466, %v759
    %761 = vmatmul.bf16.gmra.mxu0 %v428
    %v762 = vpop.f32.mrf.mxu0
    %v763 = vadd.f32 %v466, %v762
    %v764 = vpop.f32.mrf.mxu0
    %v765 = vadd.f32 %v466, %v764
    %766 = vmatmul.bf16.gmra.mxu0 %v429
    %v767 = vpop.f32.mrf.mxu0
    %v768 = vadd.f32 %v466, %v767
    %v769 = vpop.f32.mrf.mxu0
    %v770 = vadd.f32 %v466, %v769
    %771 = vmatmul.bf16.gmra.mxu0 %v430
    %v772 = vpop.f32.mrf.mxu0
    %v773 = vadd.f32 %v466, %v772
    %v774 = vpop.f32.mrf.mxu0
    %v775 = vadd.f32 %v466, %v774
    %776 = vdwg.mxu0
    %777 = vmatpush.bf16.msra.mxu0 %v574
    %778 = vmatpush.bf16.msra.mxu0 %v571
    %779 = vmatpush.bf16.msra.mxu0 %v568
    %780 = vmatpush.bf16.msra.mxu0 %v565
    %781 = vmatpush.bf16.msra.mxu0 %v562
    %782 = vmatpush.bf16.msra.mxu0 %v559
    %783 = vmatpush.bf16.msra.mxu0 %v556
    %784 = vmatpush.bf16.msra.mxu0 %v553
    %785 = vmatmul.bf16.gmra.mxu0 %v415
    %v786 = vpop.f32.mrf.mxu0
    %v787 = vadd.f32 %v467, %v786
    %v788 = vpop.f32.mrf.mxu0
    %v789 = vadd.f32 %v467, %v788
    %790 = vmatmul.bf16.gmra.mxu0 %v416
    %v791 = vpop.f32.mrf.mxu0
    %v792 = vadd.f32 %v467, %v791
    %v793 = vpop.f32.mrf.mxu0
    %v794 = vadd.f32 %v467, %v793
    %795 = vmatmul.bf16.gmra.mxu0 %v417
    %v796 = vpop.f32.mrf.mxu0
    %v797 = vadd.f32 %v467, %v796
    %v798 = vpop.f32.mrf.mxu0
    %v799 = vadd.f32 %v467, %v798
    %800 = vmatmul.bf16.gmra.mxu0 %v418
    %v801 = vpop.f32.mrf.mxu0
    %v802 = vadd.f32 %v467, %v801
    %v803 = vpop.f32.mrf.mxu0
    %v804 = vadd.f32 %v467, %v803
    %805 = vmatmul.bf16.gmra.mxu0 %v419
    %v806 = vpop.f32.mrf.mxu0
    %v807 = vadd.f32 %v467, %v806
    %v808 = vpop.f32.mrf.mxu0
    %v809 = vadd.f32 %v467, %v808
    %810 = vmatmul.bf16.gmra.mxu0 %v420
    %v811 = vpop.f32.mrf.mxu0
    %v812 = vadd.f32 %v467, %v811
    %v813 = vpop.f32.mrf.mxu0
    %v814 = vadd.f32 %v467, %v813
    %815 = vmatmul.bf16.gmra.mxu0 %v421
    %v816 = vpop.f32.mrf.mxu0
    %v817 = vadd.f32 %v467, %v816
    %v818 = vpop.f32.mrf.mxu0
    %v819 = vadd.f32 %v467, %v818
    %820 = vmatmul.bf16.gmra.mxu0 %v422
    %v821 = vpop.f32.mrf.mxu0
    %v822 = vadd.f32 %v467, %v821
    %v823 = vpop.f32.mrf.mxu0
    %v824 = vadd.f32 %v467, %v823
    %825 = vmatmul.bf16.gmra.mxu0 %v423
    %v826 = vpop.f32.mrf.mxu0
    %v827 = vadd.f32 %v467, %v826
    %v828 = vpop.f32.mrf.mxu0
    %v829 = vadd.f32 %v467, %v828
    %830 = vmatmul.bf16.gmra.mxu0 %v424
    %v831 = vpop.f32.mrf.mxu0
    %v832 = vadd.f32 %v467, %v831
    %v833 = vpop.f32.mrf.mxu0
    %v834 = vadd.f32 %v467, %v833
    %835 = vmatmul.bf16.gmra.mxu0 %v425
    %v836 = vpop.f32.mrf.mxu0
    %v837 = vadd.f32 %v467, %v836
    %v838 = vpop.f32.mrf.mxu0
    %v839 = vadd.f32 %v467, %v838
    %840 = vmatmul.bf16.gmra.mxu0 %v426
    %v841 = vpop.f32.mrf.mxu0
    %v842 = vadd.f32 %v467, %v841
    %v843 = vpop.f32.mrf.mxu0
    %v844 = vadd.f32 %v467, %v843
    %845 = vmatmul.bf16.gmra.mxu0 %v427
    %v846 = vpop.f32.mrf.mxu0
    %v847 = vadd.f32 %v467, %v846
    %v848 = vpop.f32.mrf.mxu0
    %v849 = vadd.f32 %v467, %v848
    %850 = vmatmul.bf16.gmra.mxu0 %v428
    %v851 = vpop.f32.mrf.mxu0
    %v852 = vadd.f32 %v467, %v851
    %v853 = vpop.f32.mrf.mxu0
    %v854 = vadd.f32 %v467, %v853
    %855 = vmatmul.bf16.gmra.mxu0 %v429
    %v856 = vpop.f32.mrf.mxu0
    %v857 = vadd.f32 %v467, %v856
    %v858 = vpop.f32.mrf.mxu0
    %v859 = vadd.f32 %v467, %v858
    %860 = vmatmul.bf16.gmra.mxu0 %v430
    %v861 = vpop.f32.mrf.mxu0
    %v862 = vadd.f32 %v467, %v861
    %v863 = vpop.f32.mrf.mxu0
    %v864 = vadd.f32 %v467, %v863
    %865 = vdwg.mxu0
    %v866 = vmax.f32 %v609, 0.0
    %v867 = vmax.f32 %v611, 0.0
    %v868 = vmax.f32 %v614, 0.0
    %v869 = vmax.f32 %v616, 0.0
    %v870 = vmax.f32 %v619, 0.0
    %v871 = vmax.f32 %v621, 0.0
    %v872 = vmax.f32 %v624, 0.0
    %v873 = vmax.f32 %v626, 0.0
    %v874 = vmax.f32 %v629, 0.0
    %v875 = vmax.f32 %v631, 0.0
    %v876 = vmax.f32 %v634, 0.0
    %v877 = vmax.f32 %v636, 0.0
    %v878 = vmax.f32 %v639, 0.0
    %v879 = vmax.f32 %v641, 0.0
    %v880 = vmax.f32 %v644, 0.0
    %v881 = vmax.f32 %v646, 0.0
    %v882 = vmax.f32 %v649, 0.0
    %v883 = vmax.f32 %v651, 0.0
    %v884 = vmax.f32 %v654, 0.0
    %v885 = vmax.f32 %v656, 0.0
    %v886 = vmax.f32 %v659, 0.0
    %v887 = vmax.f32 %v661, 0.0
    %v888 = vmax.f32 %v664, 0.0
    %v889 = vmax.f32 %v666, 0.0
    %v890 = vmax.f32 %v669, 0.0
    %v891 = vmax.f32 %v671, 0.0
    %v892 = vmax.f32 %v674, 0.0
    %v893 = vmax.f32 %v676, 0.0
    %v894 = vmax.f32 %v679, 0.0
    %v895 = vmax.f32 %v681, 0.0
    %v896 = vmax.f32 %v684, 0.0
    %v897 = vmax.f32 %v686, 0.0
    %v898 = vmax.f32 %v698, 0.0
    %v899 = vmax.f32 %v700, 0.0
    %v900 = vmax.f32 %v703, 0.0
    %v901 = vmax.f32 %v705, 0.0
    %v902 = vmax.f32 %v708, 0.0
    %v903 = vmax.f32 %v710, 0.0
    %v904 = vmax.f32 %v713, 0.0
    %v905 = vmax.f32 %v715, 0.0
    %v906 = vmax.f32 %v718, 0.0
    %v907 = vmax.f32 %v720, 0.0
    %v908 = vmax.f32 %v723, 0.0
    %v909 = vmax.f32 %v725, 0.0
    %v910 = vmax.f32 %v728, 0.0
    %v911 = vmax.f32 %v730, 0.0
    %v912 = vmax.f32 %v733, 0.0
    %v913 = vmax.f32 %v735, 0.0
    %v914 = vmax.f32 %v738, 0.0
    %v915 = vmax.f32 %v740, 0.0
    %v916 = vmax.f32 %v743, 0.0
    %v917 = vmax.f32 %v745, 0.0
    %v918 = vmax.f32 %v748, 0.0
    %v919 = vmax.f32 %v750, 0.0
    %v920 = vmax.f32 %v753, 0.0
    %v921 = vmax.f32 %v755, 0.0
    %v922 = vmax.f32 %v758, 0.0
    %v923 = vmax.f32 %v760, 0.0
    %v924 = vmax.f32 %v763, 0.0
    %v925 = vmax.f32 %v765, 0.0
    %v926 = vmax.f32 %v768, 0.0
    %v927 = vmax.f32 %v770, 0.0
    %v928 = vmax.f32 %v773, 0.0
    %v929 = vmax.f32 %v775, 0.0
    %v930 = vlaneseq
    %v931 = vshrl.u32 %v930, 7
    %v932 = vadd.s32 %v931, 8
    %v933 = vld [vmem:[%s1] sm:$0xff]
    %v934 = vld [vmem:[%s1 + $0x8] sm:$0xff]
    %v935 = vrot.slane %v933, 1
    %v936 = vrot.slane %v933, 2
    %v937 = vrot.slane %v933, 3
    %v938 = vrot.slane %v933, 4
    %v939 = vrot.slane %v933, 5
    %v940 = vrot.slane %v933, 6
    %v941 = vrot.slane %v933, 7
    %v942 = vrot.slane %v934, 1
    %v943 = vrot.slane %v934, 2
    %v944 = vrot.slane %v934, 3
    %v945 = vrot.slane %v934, 4
    %v946 = vrot.slane %v934, 5
    %v947 = vrot.slane %v934, 6
    %v948 = vrot.slane %v934, 7
    %v949 = vperm.slane %v933, 0
    %v950 = vperm.slane %v935, 0
    %v951 = vperm.slane %v936, 0
    %v952 = vperm.slane %v937, 0
    %v953 = vperm.slane %v938, 0
    %v954 = vperm.slane %v939, 0
    %v955 = vperm.slane %v940, 0
    %v956 = vperm.slane %v941, 0
    %v957 = vperm.slane %v934, 0
    %v958 = vperm.slane %v942, 0
    %v959 = vperm.slane %v943, 0
    %v960 = vperm.slane %v944, 0
    %v961 = vperm.slane %v945, 0
    %v962 = vperm.slane %v946, 0
    %v963 = vperm.slane %v947, 0
    %v964 = vperm.slane %v948, 0
    %vm965 = vcmp.lt.s32.totalorder %v931, %v949
    %vm966 = vcmp.lt.s32.totalorder %v932, %v949
    %vm967 = vcmp.lt.s32.totalorder %v931, %v950
    %vm968 = vcmp.lt.s32.totalorder %v932, %v950
    %vm969 = vcmp.lt.s32.totalorder %v931, %v951
    %vm970 = vcmp.lt.s32.totalorder %v932, %v951
    %vm971 = vcmp.lt.s32.totalorder %v931, %v952
    %vm972 = vcmp.lt.s32.totalorder %v932, %v952
    %vm973 = vcmp.lt.s32.totalorder %v931, %v953
    %vm974 = vcmp.lt.s32.totalorder %v932, %v953
    %vm975 = vcmp.lt.s32.totalorder %v931, %v954
    %vm976 = vcmp.lt.s32.totalorder %v932, %v954
    %vm977 = vcmp.lt.s32.totalorder %v931, %v955
    %vm978 = vcmp.lt.s32.totalorder %v932, %v955
    %vm979 = vcmp.lt.s32.totalorder %v931, %v956
    %vm980 = vcmp.lt.s32.totalorder %v932, %v956
    %vm981 = vcmp.lt.s32.totalorder %v931, %v957
    %vm982 = vcmp.lt.s32.totalorder %v932, %v957
    %vm983 = vcmp.lt.s32.totalorder %v931, %v958
    %vm984 = vcmp.lt.s32.totalorder %v932, %v958
    %vm985 = vcmp.lt.s32.totalorder %v931, %v959
    %vm986 = vcmp.lt.s32.totalorder %v932, %v959
    %vm987 = vcmp.lt.s32.totalorder %v931, %v960
    %vm988 = vcmp.lt.s32.totalorder %v932, %v960
    %vm989 = vcmp.lt.s32.totalorder %v931, %v961
    %vm990 = vcmp.lt.s32.totalorder %v932, %v961
    %vm991 = vcmp.lt.s32.totalorder %v931, %v962
    %vm992 = vcmp.lt.s32.totalorder %v932, %v962
    %vm993 = vcmp.lt.s32.totalorder %v931, %v963
    %vm994 = vcmp.lt.s32.totalorder %v932, %v963
    %vm995 = vcmp.lt.s32.totalorder %v931, %v964
    %vm996 = vcmp.lt.s32.totalorder %v932, %v964
    %v997 = vsel %vm965, 1, 0
    %v998 = vsel %vm966, 1, 0
    %v999 = vsel %vm967, 1, 0
    %v1000 = vsel %vm968, 1, 0
    %v1001 = vsel %vm969, 1, 0
    %v1002 = vsel %vm970, 1, 0
    %v1003 = vsel %vm971, 1, 0
    %v1004 = vsel %vm972, 1, 0
    %v1005 = vsel %vm973, 1, 0
    %v1006 = vsel %vm974, 1, 0
    %v1007 = vsel %vm975, 1, 0
    %v1008 = vsel %vm976, 1, 0
    %v1009 = vsel %vm977, 1, 0
    %v1010 = vsel %vm978, 1, 0
    %v1011 = vsel %vm979, 1, 0
    %v1012 = vsel %vm980, 1, 0
    %v1013 = vsel %vm981, 1, 0
    %v1014 = vsel %vm982, 1, 0
    %v1015 = vsel %vm983, 1, 0
    %v1016 = vsel %vm984, 1, 0
    %v1017 = vsel %vm985, 1, 0
    %v1018 = vsel %vm986, 1, 0
    %v1019 = vsel %vm987, 1, 0
    %v1020 = vsel %vm988, 1, 0
    %v1021 = vsel %vm989, 1, 0
    %v1022 = vsel %vm990, 1, 0
    %v1023 = vsel %vm991, 1, 0
    %v1024 = vsel %vm992, 1, 0
    %v1025 = vsel %vm993, 1, 0
    %v1026 = vsel %vm994, 1, 0
    %v1027 = vsel %vm995, 1, 0
    %v1028 = vsel %vm996, 1, 0
    %1029 = vset.pattern.permute.xlu0 0
    %1030 = vperm.xlu0 %1029, %v997
    %v1031 = vpop.permute.xlu0 %1030
    %1032 = vset.pattern.permute.xlu0 0
    %1033 = vperm.xlu0 %1032, %v998
    %v1034 = vpop.permute.xlu0 %1033
    %1035 = vset.pattern.permute.xlu0 0
    %1036 = vperm.xlu0 %1035, %v999
    %v1037 = vpop.permute.xlu0 %1036
    %1038 = vset.pattern.permute.xlu0 0
    %1039 = vperm.xlu0 %1038, %v1000
    %v1040 = vpop.permute.xlu0 %1039
    %1041 = vset.pattern.permute.xlu0 0
    %1042 = vperm.xlu0 %1041, %v1001
    %v1043 = vpop.permute.xlu0 %1042
    %1044 = vset.pattern.permute.xlu0 0
    %1045 = vperm.xlu0 %1044, %v1002
    %v1046 = vpop.permute.xlu0 %1045
    %1047 = vset.pattern.permute.xlu0 0
    %1048 = vperm.xlu0 %1047, %v1003
    %v1049 = vpop.permute.xlu0 %1048
    %1050 = vset.pattern.permute.xlu0 0
    %1051 = vperm.xlu0 %1050, %v1004
    %v1052 = vpop.permute.xlu0 %1051
    %1053 = vset.pattern.permute.xlu0 0
    %1054 = vperm.xlu0 %1053, %v1005
    %v1055 = vpop.permute.xlu0 %1054
    %1056 = vset.pattern.permute.xlu0 0
    %1057 = vperm.xlu0 %1056, %v1006
    %v1058 = vpop.permute.xlu0 %1057
    %1059 = vset.pattern.permute.xlu0 0
    %1060 = vperm.xlu0 %1059, %v1007
    %v1061 = vpop.permute.xlu0 %1060
    %1062 = vset.pattern.permute.xlu0 0
    %1063 = vperm.xlu0 %1062, %v1008
    %v1064 = vpop.permute.xlu0 %1063
    %1065 = vset.pattern.permute.xlu0 0
    %1066 = vperm.xlu0 %1065, %v1009
    %v1067 = vpop.permute.xlu0 %1066
    %1068 = vset.pattern.permute.xlu0 0
    %1069 = vperm.xlu0 %1068, %v1010
    %v1070 = vpop.permute.xlu0 %1069
    %1071 = vset.pattern.permute.xlu0 0
    %1072 = vperm.xlu0 %1071, %v1011
    %v1073 = vpop.permute.xlu0 %1072
    %1074 = vset.pattern.permute.xlu0 0
    %1075 = vperm.xlu0 %1074, %v1012
    %v1076 = vpop.permute.xlu0 %1075
    %1077 = vset.pattern.permute.xlu0 0
    %1078 = vperm.xlu0 %1077, %v1013
    %v1079 = vpop.permute.xlu0 %1078
    %1080 = vset.pattern.permute.xlu0 0
    %1081 = vperm.xlu0 %1080, %v1014
    %v1082 = vpop.permute.xlu0 %1081
    %1083 = vset.pattern.permute.xlu0 0
    %1084 = vperm.xlu0 %1083, %v1015
    %v1085 = vpop.permute.xlu0 %1084
    %1086 = vset.pattern.permute.xlu0 0
    %1087 = vperm.xlu0 %1086, %v1016
    %v1088 = vpop.permute.xlu0 %1087
    %1089 = vset.pattern.permute.xlu0 0
    %1090 = vperm.xlu0 %1089, %v1017
    %v1091 = vpop.permute.xlu0 %1090
    %1092 = vset.pattern.permute.xlu0 0
    %1093 = vperm.xlu0 %1092, %v1018
    %v1094 = vpop.permute.xlu0 %1093
    %1095 = vset.pattern.permute.xlu0 0
    %1096 = vperm.xlu0 %1095, %v1019
    %v1097 = vpop.permute.xlu0 %1096
    %1098 = vset.pattern.permute.xlu0 0
    %1099 = vperm.xlu0 %1098, %v1020
    %v1100 = vpop.permute.xlu0 %1099
    %1101 = vset.pattern.permute.xlu0 0
    %1102 = vperm.xlu0 %1101, %v1021
    %v1103 = vpop.permute.xlu0 %1102
    %1104 = vset.pattern.permute.xlu0 0
    %1105 = vperm.xlu0 %1104, %v1022
    %v1106 = vpop.permute.xlu0 %1105
    %1107 = vset.pattern.permute.xlu0 0
    %1108 = vperm.xlu0 %1107, %v1023
    %v1109 = vpop.permute.xlu0 %1108
    %1110 = vset.pattern.permute.xlu0 0
    %1111 = vperm.xlu0 %1110, %v1024
    %v1112 = vpop.permute.xlu0 %1111
    %1113 = vset.pattern.permute.xlu0 0
    %1114 = vperm.xlu0 %1113, %v1025
    %v1115 = vpop.permute.xlu0 %1114
    %1116 = vset.pattern.permute.xlu0 0
    %1117 = vperm.xlu0 %1116, %v1026
    %v1118 = vpop.permute.xlu0 %1117
    %1119 = vset.pattern.permute.xlu0 0
    %1120 = vperm.xlu0 %1119, %v1027
    %v1121 = vpop.permute.xlu0 %1120
    %1122 = vset.pattern.permute.xlu0 0
    %1123 = vperm.xlu0 %1122, %v1028
    %v1124 = vpop.permute.xlu0 %1123
    %vm1125 = vcmp.eq.s32.totalorder %v1031, 1
    %vm1126 = vcmp.eq.s32.totalorder %v1034, 1
    %vm1127 = vcmp.eq.s32.totalorder %v1037, 1
    %vm1128 = vcmp.eq.s32.totalorder %v1040, 1
    %vm1129 = vcmp.eq.s32.totalorder %v1043, 1
    %vm1130 = vcmp.eq.s32.totalorder %v1046, 1
    %vm1131 = vcmp.eq.s32.totalorder %v1049, 1
    %vm1132 = vcmp.eq.s32.totalorder %v1052, 1
    %vm1133 = vcmp.eq.s32.totalorder %v1055, 1
    %vm1134 = vcmp.eq.s32.totalorder %v1058, 1
    %vm1135 = vcmp.eq.s32.totalorder %v1061, 1
    %vm1136 = vcmp.eq.s32.totalorder %v1064, 1
    %vm1137 = vcmp.eq.s32.totalorder %v1067, 1
    %vm1138 = vcmp.eq.s32.totalorder %v1070, 1
    %vm1139 = vcmp.eq.s32.totalorder %v1073, 1
    %vm1140 = vcmp.eq.s32.totalorder %v1076, 1
    %vm1141 = vcmp.eq.s32.totalorder %v1079, 1
    %vm1142 = vcmp.eq.s32.totalorder %v1082, 1
    %vm1143 = vcmp.eq.s32.totalorder %v1085, 1
    %vm1144 = vcmp.eq.s32.totalorder %v1088, 1
    %vm1145 = vcmp.eq.s32.totalorder %v1091, 1
    %vm1146 = vcmp.eq.s32.totalorder %v1094, 1
    %vm1147 = vcmp.eq.s32.totalorder %v1097, 1
    %vm1148 = vcmp.eq.s32.totalorder %v1100, 1
    %vm1149 = vcmp.eq.s32.totalorder %v1103, 1
    %vm1150 = vcmp.eq.s32.totalorder %v1106, 1
    %vm1151 = vcmp.eq.s32.totalorder %v1109, 1
    %vm1152 = vcmp.eq.s32.totalorder %v1112, 1
    %vm1153 = vcmp.eq.s32.totalorder %v1115, 1
    %vm1154 = vcmp.eq.s32.totalorder %v1118, 1
    %vm1155 = vcmp.eq.s32.totalorder %v1121, 1
    %vm1156 = vcmp.eq.s32.totalorder %v1124, 1
    %v1157 = vsel %vm1125, %v866, 0.0
    %v1158 = vsel %vm1126, %v867, 0.0
    %v1159 = vsel %vm1127, %v868, 0.0
    %v1160 = vsel %vm1128, %v869, 0.0
    %v1161 = vsel %vm1129, %v870, 0.0
    %v1162 = vsel %vm1130, %v871, 0.0
    %v1163 = vsel %vm1131, %v872, 0.0
    %v1164 = vsel %vm1132, %v873, 0.0
    %v1165 = vsel %vm1133, %v874, 0.0
    %v1166 = vsel %vm1134, %v875, 0.0
    %v1167 = vsel %vm1135, %v876, 0.0
    %v1168 = vsel %vm1136, %v877, 0.0
    %v1169 = vsel %vm1137, %v878, 0.0
    %v1170 = vsel %vm1138, %v879, 0.0
    %v1171 = vsel %vm1139, %v880, 0.0
    %v1172 = vsel %vm1140, %v881, 0.0
    %v1173 = vsel %vm1141, %v882, 0.0
    %v1174 = vsel %vm1142, %v883, 0.0
    %v1175 = vsel %vm1143, %v884, 0.0
    %v1176 = vsel %vm1144, %v885, 0.0
    %v1177 = vsel %vm1145, %v886, 0.0
    %v1178 = vsel %vm1146, %v887, 0.0
    %v1179 = vsel %vm1147, %v888, 0.0
    %v1180 = vsel %vm1148, %v889, 0.0
    %v1181 = vsel %vm1149, %v890, 0.0
    %v1182 = vsel %vm1150, %v891, 0.0
    %v1183 = vsel %vm1151, %v892, 0.0
    %v1184 = vsel %vm1152, %v893, 0.0
    %v1185 = vsel %vm1153, %v894, 0.0
    %v1186 = vsel %vm1154, %v895, 0.0
    %v1187 = vsel %vm1155, %v896, 0.0
    %v1188 = vsel %vm1156, %v897, 0.0
    %v1189 = vsel %vm1125, %v898, 0.0
    %v1190 = vsel %vm1126, %v899, 0.0
    %v1191 = vsel %vm1127, %v900, 0.0
    %v1192 = vsel %vm1128, %v901, 0.0
    %v1193 = vsel %vm1129, %v902, 0.0
    %v1194 = vsel %vm1130, %v903, 0.0
    %v1195 = vsel %vm1131, %v904, 0.0
    %v1196 = vsel %vm1132, %v905, 0.0
    %v1197 = vsel %vm1133, %v906, 0.0
    %v1198 = vsel %vm1134, %v907, 0.0
    %v1199 = vsel %vm1135, %v908, 0.0
    %v1200 = vsel %vm1136, %v909, 0.0
    %v1201 = vsel %vm1137, %v910, 0.0
    %v1202 = vsel %vm1138, %v911, 0.0
    %v1203 = vsel %vm1139, %v912, 0.0
    %v1204 = vsel %vm1140, %v913, 0.0
    %v1205 = vsel %vm1141, %v914, 0.0
    %v1206 = vsel %vm1142, %v915, 0.0
    %v1207 = vsel %vm1143, %v916, 0.0
    %v1208 = vsel %vm1144, %v917, 0.0
    %v1209 = vsel %vm1145, %v918, 0.0
    %v1210 = vsel %vm1146, %v919, 0.0
    %v1211 = vsel %vm1147, %v920, 0.0
    %v1212 = vsel %vm1148, %v921, 0.0
    %v1213 = vsel %vm1149, %v922, 0.0
    %v1214 = vsel %vm1150, %v923, 0.0
    %v1215 = vsel %vm1151, %v924, 0.0
    %v1216 = vsel %vm1152, %v925, 0.0
    %v1217 = vsel %vm1153, %v926, 0.0
    %v1218 = vsel %vm1154, %v927, 0.0
    %v1219 = vsel %vm1155, %v928, 0.0
    %v1220 = vsel %vm1156, %v929, 0.0
    %v1221 = vpack.c.bf16 %v1189, %v1189
    %v1222 = vpack.c.bf16 %v1190, %v1190
    %v1223 = vpack.c.bf16 %v1191, %v1191
    %v1224 = vpack.c.bf16 %v1192, %v1192
    %v1225 = vpack.c.bf16 %v1193, %v1193
    %v1226 = vpack.c.bf16 %v1194, %v1194
    %v1227 = vpack.c.bf16 %v1195, %v1195
    %v1228 = vpack.c.bf16 %v1196, %v1196
    %v1229 = vpack.c.bf16 %v1197, %v1197
    %v1230 = vpack.c.bf16 %v1198, %v1198
    %v1231 = vpack.c.bf16 %v1199, %v1199
    %v1232 = vpack.c.bf16 %v1200, %v1200
    %v1233 = vpack.c.bf16 %v1201, %v1201
    %v1234 = vpack.c.bf16 %v1202, %v1202
    %v1235 = vpack.c.bf16 %v1203, %v1203
    %v1236 = vpack.c.bf16 %v1204, %v1204
    %v1237 = vpack.c.bf16 %v1205, %v1205
    %v1238 = vpack.c.bf16 %v1206, %v1206
    %v1239 = vpack.c.bf16 %v1207, %v1207
    %v1240 = vpack.c.bf16 %v1208, %v1208
    %v1241 = vpack.c.bf16 %v1209, %v1209
    %v1242 = vpack.c.bf16 %v1210, %v1210
    %v1243 = vpack.c.bf16 %v1211, %v1211
    %v1244 = vpack.c.bf16 %v1212, %v1212
    %v1245 = vpack.c.bf16 %v1213, %v1213
    %v1246 = vpack.c.bf16 %v1214, %v1214
    %v1247 = vpack.c.bf16 %v1215, %v1215
    %v1248 = vpack.c.bf16 %v1216, %v1216
    %v1249 = vpack.c.bf16 %v1217, %v1217
    %v1250 = vpack.c.bf16 %v1218, %v1218
    %v1251 = vpack.c.bf16 %v1219, %v1219
    %v1252 = vpack.c.bf16 %v1220, %v1220
    %v1253 = vpack.c.bf16 %v787, %v787
    %v1254 = vpack.c.bf16 %v789, %v789
    %v1255 = vpack.c.bf16 %v792, %v792
    %v1256 = vpack.c.bf16 %v794, %v794
    %v1257 = vpack.c.bf16 %v797, %v797
    %v1258 = vpack.c.bf16 %v799, %v799
    %v1259 = vpack.c.bf16 %v802, %v802
    %v1260 = vpack.c.bf16 %v804, %v804
    %v1261 = vpack.c.bf16 %v807, %v807
    %v1262 = vpack.c.bf16 %v809, %v809
    %v1263 = vpack.c.bf16 %v812, %v812
    %v1264 = vpack.c.bf16 %v814, %v814
    %v1265 = vpack.c.bf16 %v817, %v817
    %v1266 = vpack.c.bf16 %v819, %v819
    %v1267 = vpack.c.bf16 %v822, %v822
    %v1268 = vpack.c.bf16 %v824, %v824
    %v1269 = vpack.c.bf16 %v827, %v827
    %v1270 = vpack.c.bf16 %v829, %v829
    %v1271 = vpack.c.bf16 %v832, %v832
    %v1272 = vpack.c.bf16 %v834, %v834
    %v1273 = vpack.c.bf16 %v837, %v837
    %v1274 = vpack.c.bf16 %v839, %v839
    %v1275 = vpack.c.bf16 %v842, %v842
    %v1276 = vpack.c.bf16 %v844, %v844
    %v1277 = vpack.c.bf16 %v847, %v847
    %v1278 = vpack.c.bf16 %v849, %v849
    %v1279 = vpack.c.bf16 %v852, %v852
    %v1280 = vpack.c.bf16 %v854, %v854
    %v1281 = vpack.c.bf16 %v857, %v857
    %v1282 = vpack.c.bf16 %v859, %v859
    %v1283 = vpack.c.bf16 %v862, %v862
    %v1284 = vpack.c.bf16 %v864, %v864
    %v1287 = vunpack.c.l.b16 %v1221
    %v1288 = vunpack.c.l.b16 %v1222
    %v1289 = vpack.c.b16 %v1288, %v1287
    %1291 = vxpose.xlu0.c.b16.start [1/8] %v1289, 128
    %1292 = vxpose.xlu0.c.b16.cont [2/8] 0, 128
    %1293 = vxpose.xlu0.c.b16.cont [3/8] 0, 128
    %1294 = vxpose.xlu0.c.b16.cont [4/8] 0, 128
    %1295 = vxpose.xlu0.c.b16.cont [5/8] 0, 128
    %1296 = vxpose.xlu0.c.b16.cont [6/8] 0, 128
    %1297 = vxpose.xlu0.c.b16.cont [7/8] 0, 128
    %1298 = vxpose.xlu0.c.b16.end [8/8] 0, 128
    %v1299 = vpop.trf.xlu0
    %v1300 = vpop.trf.xlu0
    %v1301 = vpop.trf.xlu0
    %v1302 = vpop.trf.xlu0
    %v1303 = vpop.trf.xlu0
    %v1304 = vpop.trf.xlu0
    %v1305 = vpop.trf.xlu0
    %v1306 = vpop.trf.xlu0
    %v1309 = vunpack.c.l.b16 %v1253
    %v1310 = vunpack.c.l.b16 %v1254
    %v1311 = vpack.c.b16 %v1310, %v1309
    %vm1313 = vcmask 130048
    %v1315 = vsel %vm1313, %v1299, 0
    %v1318 = vsel %vm1313, %v1300, 0
    %v1321 = vsel %vm1313, %v1301, 0
    %v1324 = vsel %vm1313, %v1302, 0
    %v1327 = vsel %vm1313, %v1303, 0
    %v1330 = vsel %vm1313, %v1304, 0
    %v1333 = vsel %vm1313, %v1305, 0
    %v1336 = vsel %vm1313, %v1306, 0
    %1338 = vmatpush.bf16.msra.mxu0 0
    %1339 = vmatpush.bf16.msra.mxu0 0
    %1340 = vmatpush.bf16.msra.mxu0 0
    %1341 = vmatpush.bf16.msra.mxu0 0
    %1342 = vmatpush.bf16.msra.mxu0 0
    %1343 = vmatpush.bf16.msra.mxu0 0
    %1344 = vmatpush.bf16.msra.mxu0 0
    %1345 = vmatpush.bf16.msra.mxu0 %v1311
    %1346 = vmatmul.bf16.gmra.mxu0 %v1315
    %v1347 = vpop.f32.mrf.mxu0
    %v1348 = vadd.f32 0.0, %v1347
    %v1349 = vpop.f32.mrf.mxu0
    %v1350 = vadd.f32 0.0, %v1349
    %1351 = vmatmul.bf16.gmra.mxu0 %v1318
    %v1352 = vpop.f32.mrf.mxu0
    %v1353 = vadd.f32 0.0, %v1352
    %v1354 = vpop.f32.mrf.mxu0
    %v1355 = vadd.f32 0.0, %v1354
    %1356 = vmatmul.bf16.gmra.mxu0 %v1321
    %v1357 = vpop.f32.mrf.mxu0
    %v1358 = vadd.f32 0.0, %v1357
    %v1359 = vpop.f32.mrf.mxu0
    %v1360 = vadd.f32 0.0, %v1359
    %1361 = vmatmul.bf16.gmra.mxu0 %v1324
    %v1362 = vpop.f32.mrf.mxu0
    %v1363 = vadd.f32 0.0, %v1362
    %v1364 = vpop.f32.mrf.mxu0
    %v1365 = vadd.f32 0.0, %v1364
    %1366 = vmatmul.bf16.gmra.mxu0 %v1327
    %v1367 = vpop.f32.mrf.mxu0
    %v1368 = vadd.f32 0.0, %v1367
    %v1369 = vpop.f32.mrf.mxu0
    %v1370 = vadd.f32 0.0, %v1369
    %1371 = vmatmul.bf16.gmra.mxu0 %v1330
    %v1372 = vpop.f32.mrf.mxu0
    %v1373 = vadd.f32 0.0, %v1372
    %v1374 = vpop.f32.mrf.mxu0
    %v1375 = vadd.f32 0.0, %v1374
    %1376 = vmatmul.bf16.gmra.mxu0 %v1333
    %v1377 = vpop.f32.mrf.mxu0
    %v1378 = vadd.f32 0.0, %v1377
    %v1379 = vpop.f32.mrf.mxu0
    %v1380 = vadd.f32 0.0, %v1379
    %1381 = vmatmul.bf16.gmra.mxu0 %v1336
    %v1382 = vpop.f32.mrf.mxu0
    %v1383 = vadd.f32 0.0, %v1382
    %v1384 = vpop.f32.mrf.mxu0
    %v1385 = vadd.f32 0.0, %v1384
    %1386 = vdwg.mxu0
    %v1389 = vunpack.c.l.b16 %v1223
    %v1390 = vunpack.c.l.b16 %v1224
    %v1391 = vpack.c.b16 %v1390, %v1389
    %1393 = vxpose.xlu0.c.b16.start [1/8] %v1391, 128
    %1394 = vxpose.xlu0.c.b16.cont [2/8] 0, 128
    %1395 = vxpose.xlu0.c.b16.cont [3/8] 0, 128
    %1396 = vxpose.xlu0.c.b16.cont [4/8] 0, 128
    %1397 = vxpose.xlu0.c.b16.cont [5/8] 0, 128
    %1398 = vxpose.xlu0.c.b16.cont [6/8] 0, 128
    %1399 = vxpose.xlu0.c.b16.cont [7/8] 0, 128
    %1400 = vxpose.xlu0.c.b16.end [8/8] 0, 128
    %v1401 = vpop.trf.xlu0
    %v1402 = vpop.trf.xlu0
    %v1403 = vpop.trf.xlu0
    %v1404 = vpop.trf.xlu0
    %v1405 = vpop.trf.xlu0
    %v1406 = vpop.trf.xlu0
    %v1407 = vpop.trf.xlu0
    %v1408 = vpop.trf.xlu0
    %v1411 = vunpack.c.l.b16 %v1255
    %v1412 = vunpack.c.l.b16 %v1256
    %v1413 = vpack.c.b16 %v1412, %v1411
    %v1416 = vsel %vm1313, %v1401, 0
    %v1419 = vsel %vm1313, %v1402, 0
    %v1422 = vsel %vm1313, %v1403, 0
    %v1425 = vsel %vm1313, %v1404, 0
    %v1428 = vsel %vm1313, %v1405, 0
    %v1431 = vsel %vm1313, %v1406, 0
    %v1434 = vsel %vm1313, %v1407, 0
    %v1437 = vsel %vm1313, %v1408, 0
    %1439 = vmatpush.bf16.msra.mxu0 0
    %1440 = vmatpush.bf16.msra.mxu0 0
    %1441 = vmatpush.bf16.msra.mxu0 0
    %1442 = vmatpush.bf16.msra.mxu0 0
    %1443 = vmatpush.bf16.msra.mxu0 0
    %1444 = vmatpush.bf16.msra.mxu0 0
    %1445 = vmatpush.bf16.msra.mxu0 0
    %1446 = vmatpush.bf16.msra.mxu0 %v1413
    %1447 = vmatmul.bf16.gmra.mxu0 %v1416
    %v1448 = vpop.f32.mrf.mxu0
    %v1449 = vadd.f32 0.0, %v1448
    %v1450 = vpop.f32.mrf.mxu0
    %v1451 = vadd.f32 0.0, %v1450
    %1452 = vmatmul.bf16.gmra.mxu0 %v1419
    %v1453 = vpop.f32.mrf.mxu0
    %v1454 = vadd.f32 0.0, %v1453
    %v1455 = vpop.f32.mrf.mxu0
    %v1456 = vadd.f32 0.0, %v1455
    %1457 = vmatmul.bf16.gmra.mxu0 %v1422
    %v1458 = vpop.f32.mrf.mxu0
    %v1459 = vadd.f32 0.0, %v1458
    %v1460 = vpop.f32.mrf.mxu0
    %v1461 = vadd.f32 0.0, %v1460
    %1462 = vmatmul.bf16.gmra.mxu0 %v1425
    %v1463 = vpop.f32.mrf.mxu0
    %v1464 = vadd.f32 0.0, %v1463
    %v1465 = vpop.f32.mrf.mxu0
    %v1466 = vadd.f32 0.0, %v1465
    %1467 = vmatmul.bf16.gmra.mxu0 %v1428
    %v1468 = vpop.f32.mrf.mxu0
    %v1469 = vadd.f32 0.0, %v1468
    %v1470 = vpop.f32.mrf.mxu0
    %v1471 = vadd.f32 0.0, %v1470
    %1472 = vmatmul.bf16.gmra.mxu0 %v1431
    %v1473 = vpop.f32.mrf.mxu0
    %v1474 = vadd.f32 0.0, %v1473
    %v1475 = vpop.f32.mrf.mxu0
    %v1476 = vadd.f32 0.0, %v1475
    %1477 = vmatmul.bf16.gmra.mxu0 %v1434
    %v1478 = vpop.f32.mrf.mxu0
    %v1479 = vadd.f32 0.0, %v1478
    %v1480 = vpop.f32.mrf.mxu0
    %v1481 = vadd.f32 0.0, %v1480
    %1482 = vmatmul.bf16.gmra.mxu0 %v1437
    %v1483 = vpop.f32.mrf.mxu0
    %v1484 = vadd.f32 0.0, %v1483
    %v1485 = vpop.f32.mrf.mxu0
    %v1486 = vadd.f32 0.0, %v1485
    %1487 = vdwg.mxu0
    %v1490 = vunpack.c.l.b16 %v1225
    %v1491 = vunpack.c.l.b16 %v1226
    %v1492 = vpack.c.b16 %v1491, %v1490
    %1494 = vxpose.xlu0.c.b16.start [1/8] %v1492, 128
    %1495 = vxpose.xlu0.c.b16.cont [2/8] 0, 128
    %1496 = vxpose.xlu0.c.b16.cont [3/8] 0, 128
    %1497 = vxpose.xlu0.c.b16.cont [4/8] 0, 128
    %1498 = vxpose.xlu0.c.b16.cont [5/8] 0, 128
    %1499 = vxpose.xlu0.c.b16.cont [6/8] 0, 128
    %1500 = vxpose.xlu0.c.b16.cont [7/8] 0, 128
    %1501 = vxpose.xlu0.c.b16.end [8/8] 0, 128
    %v1502 = vpop.trf.xlu0
    %v1503 = vpop.trf.xlu0
    %v1504 = vpop.trf.xlu0
    %v1505 = vpop.trf.xlu0
    %v1506 = vpop.trf.xlu0
    %v1507 = vpop.trf.xlu0
    %v1508 = vpop.trf.xlu0
    %v1509 = vpop.trf.xlu0
    %v1512 = vunpack.c.l.b16 %v1257
    %v1513 = vunpack.c.l.b16 %v1258
    %v1514 = vpack.c.b16 %v1513, %v1512
    %v1517 = vsel %vm1313, %v1502, 0
    %v1520 = vsel %vm1313, %v1503, 0
    %v1523 = vsel %vm1313, %v1504, 0
    %v1526 = vsel %vm1313, %v1505, 0
    %v1529 = vsel %vm1313, %v1506, 0
    %v1532 = vsel %vm1313, %v1507, 0
    %v1535 = vsel %vm1313, %v1508, 0
    %v1538 = vsel %vm1313, %v1509, 0
    %1540 = vmatpush.bf16.msra.mxu0 0
    %1541 = vmatpush.bf16.msra.mxu0 0
    %1542 = vmatpush.bf16.msra.mxu0 0
    %1543 = vmatpush.bf16.msra.mxu0 0
    %1544 = vmatpush.bf16.msra.mxu0 0
    %1545 = vmatpush.bf16.msra.mxu0 0
    %1546 = vmatpush.bf16.msra.mxu0 0
    %1547 = vmatpush.bf16.msra.mxu0 %v1514
    %1548 = vmatmul.bf16.gmra.mxu0 %v1517
    %v1549 = vpop.f32.mrf.mxu0
    %v1550 = vadd.f32 0.0, %v1549
    %v1551 = vpop.f32.mrf.mxu0
    %v1552 = vadd.f32 0.0, %v1551
    %1553 = vmatmul.bf16.gmra.mxu0 %v1520
    %v1554 = vpop.f32.mrf.mxu0
    %v1555 = vadd.f32 0.0, %v1554
    %v1556 = vpop.f32.mrf.mxu0
    %v1557 = vadd.f32 0.0, %v1556
    %1558 = vmatmul.bf16.gmra.mxu0 %v1523
    %v1559 = vpop.f32.mrf.mxu0
    %v1560 = vadd.f32 0.0, %v1559
    %v1561 = vpop.f32.mrf.mxu0
    %v1562 = vadd.f32 0.0, %v1561
    %1563 = vmatmul.bf16.gmra.mxu0 %v1526
    %v1564 = vpop.f32.mrf.mxu0
    %v1565 = vadd.f32 0.0, %v1564
    %v1566 = vpop.f32.mrf.mxu0
    %v1567 = vadd.f32 0.0, %v1566
    %1568 = vmatmul.bf16.gmra.mxu0 %v1529
    %v1569 = vpop.f32.mrf.mxu0
    %v1570 = vadd.f32 0.0, %v1569
    %v1571 = vpop.f32.mrf.mxu0
    %v1572 = vadd.f32 0.0, %v1571
    %1573 = vmatmul.bf16.gmra.mxu0 %v1532
    %v1574 = vpop.f32.mrf.mxu0
    %v1575 = vadd.f32 0.0, %v1574
    %v1576 = vpop.f32.mrf.mxu0
    %v1577 = vadd.f32 0.0, %v1576
    %1578 = vmatmul.bf16.gmra.mxu0 %v1535
    %v1579 = vpop.f32.mrf.mxu0
    %v1580 = vadd.f32 0.0, %v1579
    %v1581 = vpop.f32.mrf.mxu0
    %v1582 = vadd.f32 0.0, %v1581
    %1583 = vmatmul.bf16.gmra.mxu0 %v1538
    %v1584 = vpop.f32.mrf.mxu0
    %v1585 = vadd.f32 0.0, %v1584
    %v1586 = vpop.f32.mrf.mxu0
    %v1587 = vadd.f32 0.0, %v1586
    %1588 = vdwg.mxu0
    %v1591 = vunpack.c.l.b16 %v1227
    %v1592 = vunpack.c.l.b16 %v1228
    %v1593 = vpack.c.b16 %v1592, %v1591
    %1595 = vxpose.xlu0.c.b16.start [1/8] %v1593, 128
    %1596 = vxpose.xlu0.c.b16.cont [2/8] 0, 128
    %1597 = vxpose.xlu0.c.b16.cont [3/8] 0, 128
    %1598 = vxpose.xlu0.c.b16.cont [4/8] 0, 128
    %1599 = vxpose.xlu0.c.b16.cont [5/8] 0, 128
    %1600 = vxpose.xlu0.c.b16.cont [6/8] 0, 128
    %1601 = vxpose.xlu0.c.b16.cont [7/8] 0, 128
    %1602 = vxpose.xlu0.c.b16.end [8/8] 0, 128
    %v1603 = vpop.trf.xlu0
    %v1604 = vpop.trf.xlu0
    %v1605 = vpop.trf.xlu0
    %v1606 = vpop.trf.xlu0
    %v1607 = vpop.trf.xlu0
    %v1608 = vpop.trf.xlu0
    %v1609 = vpop.trf.xlu0
    %v1610 = vpop.trf.xlu0
    %v1613 = vunpack.c.l.b16 %v1259
    %v1614 = vunpack.c.l.b16 %v1260
    %v1615 = vpack.c.b16 %v1614, %v1613
    %v1618 = vsel %vm1313, %v1603, 0
    %v1621 = vsel %vm1313, %v1604, 0
    %v1624 = vsel %vm1313, %v1605, 0
    %v1627 = vsel %vm1313, %v1606, 0
    %v1630 = vsel %vm1313, %v1607, 0
    %v1633 = vsel %vm1313, %v1608, 0
    %v1636 = vsel %vm1313, %v1609, 0
    %v1639 = vsel %vm1313, %v1610, 0
    %1641 = vmatpush.bf16.msra.mxu0 0
    %1642 = vmatpush.bf16.msra.mxu0 0
    %1643 = vmatpush.bf16.msra.mxu0 0
    %1644 = vmatpush.bf16.msra.mxu0 0
    %1645 = vmatpush.bf16.msra.mxu0 0
    %1646 = vmatpush.bf16.msra.mxu0 0
    %1647 = vmatpush.bf16.msra.mxu0 0
    %1648 = vmatpush.bf16.msra.mxu0 %v1615
    %1649 = vmatmul.bf16.gmra.mxu0 %v1618
    %v1650 = vpop.f32.mrf.mxu0
    %v1651 = vadd.f32 0.0, %v1650
    %v1652 = vpop.f32.mrf.mxu0
    %v1653 = vadd.f32 0.0, %v1652
    %1654 = vmatmul.bf16.gmra.mxu0 %v1621
    %v1655 = vpop.f32.mrf.mxu0
    %v1656 = vadd.f32 0.0, %v1655
    %v1657 = vpop.f32.mrf.mxu0
    %v1658 = vadd.f32 0.0, %v1657
    %1659 = vmatmul.bf16.gmra.mxu0 %v1624
    %v1660 = vpop.f32.mrf.mxu0
    %v1661 = vadd.f32 0.0, %v1660
    %v1662 = vpop.f32.mrf.mxu0
    %v1663 = vadd.f32 0.0, %v1662
    %1664 = vmatmul.bf16.gmra.mxu0 %v1627
    %v1665 = vpop.f32.mrf.mxu0
    %v1666 = vadd.f32 0.0, %v1665
    %v1667 = vpop.f32.mrf.mxu0
    %v1668 = vadd.f32 0.0, %v1667
    %1669 = vmatmul.bf16.gmra.mxu0 %v1630
    %v1670 = vpop.f32.mrf.mxu0
    %v1671 = vadd.f32 0.0, %v1670
    %v1672 = vpop.f32.mrf.mxu0
    %v1673 = vadd.f32 0.0, %v1672
    %1674 = vmatmul.bf16.gmra.mxu0 %v1633
    %v1675 = vpop.f32.mrf.mxu0
    %v1676 = vadd.f32 0.0, %v1675
    %v1677 = vpop.f32.mrf.mxu0
    %v1678 = vadd.f32 0.0, %v1677
    %1679 = vmatmul.bf16.gmra.mxu0 %v1636
    %v1680 = vpop.f32.mrf.mxu0
    %v1681 = vadd.f32 0.0, %v1680
    %v1682 = vpop.f32.mrf.mxu0
    %v1683 = vadd.f32 0.0, %v1682
    %1684 = vmatmul.bf16.gmra.mxu0 %v1639
    %v1685 = vpop.f32.mrf.mxu0
    %v1686 = vadd.f32 0.0, %v1685
    %v1687 = vpop.f32.mrf.mxu0
    %v1688 = vadd.f32 0.0, %v1687
    %1689 = vdwg.mxu0
    %v1692 = vunpack.c.l.b16 %v1229
    %v1693 = vunpack.c.l.b16 %v1230
    %v1694 = vpack.c.b16 %v1693, %v1692
    %1696 = vxpose.xlu0.c.b16.start [1/8] %v1694, 128
    %1697 = vxpose.xlu0.c.b16.cont [2/8] 0, 128
    %1698 = vxpose.xlu0.c.b16.cont [3/8] 0, 128
    %1699 = vxpose.xlu0.c.b16.cont [4/8] 0, 128
    %1700 = vxpose.xlu0.c.b16.cont [5/8] 0, 128
    %1701 = vxpose.xlu0.c.b16.cont [6/8] 0, 128
    %1702 = vxpose.xlu0.c.b16.cont [7/8] 0, 128
    %1703 = vxpose.xlu0.c.b16.end [8/8] 0, 128
    %v1704 = vpop.trf.xlu0
    %v1705 = vpop.trf.xlu0
    %v1706 = vpop.trf.xlu0
    %v1707 = vpop.trf.xlu0
    %v1708 = vpop.trf.xlu0
    %v1709 = vpop.trf.xlu0
    %v1710 = vpop.trf.xlu0
    %v1711 = vpop.trf.xlu0
    %v1714 = vunpack.c.l.b16 %v1261
    %v1715 = vunpack.c.l.b16 %v1262
    %v1716 = vpack.c.b16 %v1715, %v1714
    %v1719 = vsel %vm1313, %v1704, 0
    %v1722 = vsel %vm1313, %v1705, 0
    %v1725 = vsel %vm1313, %v1706, 0
    %v1728 = vsel %vm1313, %v1707, 0
    %v1731 = vsel %vm1313, %v1708, 0
    %v1734 = vsel %vm1313, %v1709, 0
    %v1737 = vsel %vm1313, %v1710, 0
    %v1740 = vsel %vm1313, %v1711, 0
    %1742 = vmatpush.bf16.msra.mxu0 0
    %1743 = vmatpush.bf16.msra.mxu0 0
    %1744 = vmatpush.bf16.msra.mxu0 0
    %1745 = vmatpush.bf16.msra.mxu0 0
    %1746 = vmatpush.bf16.msra.mxu0 0
    %1747 = vmatpush.bf16.msra.mxu0 0
    %1748 = vmatpush.bf16.msra.mxu0 0
    %1749 = vmatpush.bf16.msra.mxu0 %v1716
    %1750 = vmatmul.bf16.gmra.mxu0 %v1719
    %v1751 = vpop.f32.mrf.mxu0
    %v1752 = vadd.f32 0.0, %v1751
    %v1753 = vpop.f32.mrf.mxu0
    %v1754 = vadd.f32 0.0, %v1753
    %1755 = vmatmul.bf16.gmra.mxu0 %v1722
    %v1756 = vpop.f32.mrf.mxu0
    %v1757 = vadd.f32 0.0, %v1756
    %v1758 = vpop.f32.mrf.mxu0
    %v1759 = vadd.f32 0.0, %v1758
    %1760 = vmatmul.bf16.gmra.mxu0 %v1725
    %v1761 = vpop.f32.mrf.mxu0
    %v1762 = vadd.f32 0.0, %v1761
    %v1763 = vpop.f32.mrf.mxu0
    %v1764 = vadd.f32 0.0, %v1763
    %1765 = vmatmul.bf16.gmra.mxu0 %v1728
    %v1766 = vpop.f32.mrf.mxu0
    %v1767 = vadd.f32 0.0, %v1766
    %v1768 = vpop.f32.mrf.mxu0
    %v1769 = vadd.f32 0.0, %v1768
    %1770 = vmatmul.bf16.gmra.mxu0 %v1731
    %v1771 = vpop.f32.mrf.mxu0
    %v1772 = vadd.f32 0.0, %v1771
    %v1773 = vpop.f32.mrf.mxu0
    %v1774 = vadd.f32 0.0, %v1773
    %1775 = vmatmul.bf16.gmra.mxu0 %v1734
    %v1776 = vpop.f32.mrf.mxu0
    %v1777 = vadd.f32 0.0, %v1776
    %v1778 = vpop.f32.mrf.mxu0
    %v1779 = vadd.f32 0.0, %v1778
    %1780 = vmatmul.bf16.gmra.mxu0 %v1737
    %v1781 = vpop.f32.mrf.mxu0
    %v1782 = vadd.f32 0.0, %v1781
    %v1783 = vpop.f32.mrf.mxu0
    %v1784 = vadd.f32 0.0, %v1783
    %1785 = vmatmul.bf16.gmra.mxu0 %v1740
    %v1786 = vpop.f32.mrf.mxu0
    %v1787 = vadd.f32 0.0, %v1786
    %v1788 = vpop.f32.mrf.mxu0
    %v1789 = vadd.f32 0.0, %v1788
    %1790 = vdwg.mxu0
    %v1793 = vunpack.c.l.b16 %v1231
    %v1794 = vunpack.c.l.b16 %v1232
    %v1795 = vpack.c.b16 %v1794, %v1793
    %1797 = vxpose.xlu0.c.b16.start [1/8] %v1795, 128
    %1798 = vxpose.xlu0.c.b16.cont [2/8] 0, 128
    %1799 = vxpose.xlu0.c.b16.cont [3/8] 0, 128
    %1800 = vxpose.xlu0.c.b16.cont [4/8] 0, 128
    %1801 = vxpose.xlu0.c.b16.cont [5/8] 0, 128
    %1802 = vxpose.xlu0.c.b16.cont [6/8] 0, 128
    %1803 = vxpose.xlu0.c.b16.cont [7/8] 0, 128
    %1804 = vxpose.xlu0.c.b16.end [8/8] 0, 128
    %v1805 = vpop.trf.xlu0
    %v1806 = vpop.trf.xlu0
    %v1807 = vpop.trf.xlu0
    %v1808 = vpop.trf.xlu0
    %v1809 = vpop.trf.xlu0
    %v1810 = vpop.trf.xlu0
    %v1811 = vpop.trf.xlu0
    %v1812 = vpop.trf.xlu0
    %v1815 = vunpack.c.l.b16 %v1263
    %v1816 = vunpack.c.l.b16 %v1264
    %v1817 = vpack.c.b16 %v1816, %v1815
    %v1820 = vsel %vm1313, %v1805, 0
    %v1823 = vsel %vm1313, %v1806, 0
    %v1826 = vsel %vm1313, %v1807, 0
    %v1829 = vsel %vm1313, %v1808, 0
    %v1832 = vsel %vm1313, %v1809, 0
    %v1835 = vsel %vm1313, %v1810, 0
    %v1838 = vsel %vm1313, %v1811, 0
    %v1841 = vsel %vm1313, %v1812, 0
    %1843 = vmatpush.bf16.msra.mxu0 0
    %1844 = vmatpush.bf16.msra.mxu0 0
    %1845 = vmatpush.bf16.msra.mxu0 0
    %1846 = vmatpush.bf16.msra.mxu0 0
    %1847 = vmatpush.bf16.msra.mxu0 0
    %1848 = vmatpush.bf16.msra.mxu0 0
    %1849 = vmatpush.bf16.msra.mxu0 0
    %1850 = vmatpush.bf16.msra.mxu0 %v1817
    %1851 = vmatmul.bf16.gmra.mxu0 %v1820
    %v1852 = vpop.f32.mrf.mxu0
    %v1853 = vadd.f32 0.0, %v1852
    %v1854 = vpop.f32.mrf.mxu0
    %v1855 = vadd.f32 0.0, %v1854
    %1856 = vmatmul.bf16.gmra.mxu0 %v1823
    %v1857 = vpop.f32.mrf.mxu0
    %v1858 = vadd.f32 0.0, %v1857
    %v1859 = vpop.f32.mrf.mxu0
    %v1860 = vadd.f32 0.0, %v1859
    %1861 = vmatmul.bf16.gmra.mxu0 %v1826
    %v1862 = vpop.f32.mrf.mxu0
    %v1863 = vadd.f32 0.0, %v1862
    %v1864 = vpop.f32.mrf.mxu0
    %v1865 = vadd.f32 0.0, %v1864
    %1866 = vmatmul.bf16.gmra.mxu0 %v1829
    %v1867 = vpop.f32.mrf.mxu0
    %v1868 = vadd.f32 0.0, %v1867
    %v1869 = vpop.f32.mrf.mxu0
    %v1870 = vadd.f32 0.0, %v1869
    %1871 = vmatmul.bf16.gmra.mxu0 %v1832
    %v1872 = vpop.f32.mrf.mxu0
    %v1873 = vadd.f32 0.0, %v1872
    %v1874 = vpop.f32.mrf.mxu0
    %v1875 = vadd.f32 0.0, %v1874
    %1876 = vmatmul.bf16.gmra.mxu0 %v1835
    %v1877 = vpop.f32.mrf.mxu0
    %v1878 = vadd.f32 0.0, %v1877
    %v1879 = vpop.f32.mrf.mxu0
    %v1880 = vadd.f32 0.0, %v1879
    %1881 = vmatmul.bf16.gmra.mxu0 %v1838
    %v1882 = vpop.f32.mrf.mxu0
    %v1883 = vadd.f32 0.0, %v1882
    %v1884 = vpop.f32.mrf.mxu0
    %v1885 = vadd.f32 0.0, %v1884
    %1886 = vmatmul.bf16.gmra.mxu0 %v1841
    %v1887 = vpop.f32.mrf.mxu0
    %v1888 = vadd.f32 0.0, %v1887
    %v1889 = vpop.f32.mrf.mxu0
    %v1890 = vadd.f32 0.0, %v1889
    %1891 = vdwg.mxu0
    %v1894 = vunpack.c.l.b16 %v1233
    %v1895 = vunpack.c.l.b16 %v1234
    %v1896 = vpack.c.b16 %v1895, %v1894
    %1898 = vxpose.xlu0.c.b16.start [1/8] %v1896, 128
    %1899 = vxpose.xlu0.c.b16.cont [2/8] 0, 128
    %1900 = vxpose.xlu0.c.b16.cont [3/8] 0, 128
    %1901 = vxpose.xlu0.c.b16.cont [4/8] 0, 128
    %1902 = vxpose.xlu0.c.b16.cont [5/8] 0, 128
    %1903 = vxpose.xlu0.c.b16.cont [6/8] 0, 128
    %1904 = vxpose.xlu0.c.b16.cont [7/8] 0, 128
    %1905 = vxpose.xlu0.c.b16.end [8/8] 0, 128
    %v1906 = vpop.trf.xlu0
    %v1907 = vpop.trf.xlu0
    %v1908 = vpop.trf.xlu0
    %v1909 = vpop.trf.xlu0
    %v1910 = vpop.trf.xlu0
    %v1911 = vpop.trf.xlu0
    %v1912 = vpop.trf.xlu0
    %v1913 = vpop.trf.xlu0
    %v1916 = vunpack.c.l.b16 %v1265
    %v1917 = vunpack.c.l.b16 %v1266
    %v1918 = vpack.c.b16 %v1917, %v1916
    %v1921 = vsel %vm1313, %v1906, 0
    %v1924 = vsel %vm1313, %v1907, 0
    %v1927 = vsel %vm1313, %v1908, 0
    %v1930 = vsel %vm1313, %v1909, 0
    %v1933 = vsel %vm1313, %v1910, 0
    %v1936 = vsel %vm1313, %v1911, 0
    %v1939 = vsel %vm1313, %v1912, 0
    %v1942 = vsel %vm1313, %v1913, 0
    %1944 = vmatpush.bf16.msra.mxu0 0
    %1945 = vmatpush.bf16.msra.mxu0 0
    %1946 = vmatpush.bf16.msra.mxu0 0
    %1947 = vmatpush.bf16.msra.mxu0 0
    %1948 = vmatpush.bf16.msra.mxu0 0
    %1949 = vmatpush.bf16.msra.mxu0 0
    %1950 = vmatpush.bf16.msra.mxu0 0
    %1951 = vmatpush.bf16.msra.mxu0 %v1918
    %1952 = vmatmul.bf16.gmra.mxu0 %v1921
    %v1953 = vpop.f32.mrf.mxu0
    %v1954 = vadd.f32 0.0, %v1953
    %v1955 = vpop.f32.mrf.mxu0
    %v1956 = vadd.f32 0.0, %v1955
    %1957 = vmatmul.bf16.gmra.mxu0 %v1924
    %v1958 = vpop.f32.mrf.mxu0
    %v1959 = vadd.f32 0.0, %v1958
    %v1960 = vpop.f32.mrf.mxu0
    %v1961 = vadd.f32 0.0, %v1960
    %1962 = vmatmul.bf16.gmra.mxu0 %v1927
    %v1963 = vpop.f32.mrf.mxu0
    %v1964 = vadd.f32 0.0, %v1963
    %v1965 = vpop.f32.mrf.mxu0
    %v1966 = vadd.f32 0.0, %v1965
    %1967 = vmatmul.bf16.gmra.mxu0 %v1930
    %v1968 = vpop.f32.mrf.mxu0
    %v1969 = vadd.f32 0.0, %v1968
    %v1970 = vpop.f32.mrf.mxu0
    %v1971 = vadd.f32 0.0, %v1970
    %1972 = vmatmul.bf16.gmra.mxu0 %v1933
    %v1973 = vpop.f32.mrf.mxu0
    %v1974 = vadd.f32 0.0, %v1973
    %v1975 = vpop.f32.mrf.mxu0
    %v1976 = vadd.f32 0.0, %v1975
    %1977 = vmatmul.bf16.gmra.mxu0 %v1936
    %v1978 = vpop.f32.mrf.mxu0
    %v1979 = vadd.f32 0.0, %v1978
    %v1980 = vpop.f32.mrf.mxu0
    %v1981 = vadd.f32 0.0, %v1980
    %1982 = vmatmul.bf16.gmra.mxu0 %v1939
    %v1983 = vpop.f32.mrf.mxu0
    %v1984 = vadd.f32 0.0, %v1983
    %v1985 = vpop.f32.mrf.mxu0
    %v1986 = vadd.f32 0.0, %v1985
    %1987 = vmatmul.bf16.gmra.mxu0 %v1942
    %v1988 = vpop.f32.mrf.mxu0
    %v1989 = vadd.f32 0.0, %v1988
    %v1990 = vpop.f32.mrf.mxu0
    %v1991 = vadd.f32 0.0, %v1990
    %1992 = vdwg.mxu0
    %v1995 = vunpack.c.l.b16 %v1235
    %v1996 = vunpack.c.l.b16 %v1236
    %v1997 = vpack.c.b16 %v1996, %v1995
    %1999 = vxpose.xlu0.c.b16.start [1/8] %v1997, 128
    %2000 = vxpose.xlu0.c.b16.cont [2/8] 0, 128
    %2001 = vxpose.xlu0.c.b16.cont [3/8] 0, 128
    %2002 = vxpose.xlu0.c.b16.cont [4/8] 0, 128
    %2003 = vxpose.xlu0.c.b16.cont [5/8] 0, 128
    %2004 = vxpose.xlu0.c.b16.cont [6/8] 0, 128
    %2005 = vxpose.xlu0.c.b16.cont [7/8] 0, 128
    %2006 = vxpose.xlu0.c.b16.end [8/8] 0, 128
    %v2007 = vpop.trf.xlu0
    %v2008 = vpop.trf.xlu0
    %v2009 = vpop.trf.xlu0
    %v2010 = vpop.trf.xlu0
    %v2011 = vpop.trf.xlu0
    %v2012 = vpop.trf.xlu0
    %v2013 = vpop.trf.xlu0
    %v2014 = vpop.trf.xlu0
    %v2017 = vunpack.c.l.b16 %v1267
    %v2018 = vunpack.c.l.b16 %v1268
    %v2019 = vpack.c.b16 %v2018, %v2017
    %v2022 = vsel %vm1313, %v2007, 0
    %v2025 = vsel %vm1313, %v2008, 0
    %v2028 = vsel %vm1313, %v2009, 0
    %v2031 = vsel %vm1313, %v2010, 0
    %v2034 = vsel %vm1313, %v2011, 0
    %v2037 = vsel %vm1313, %v2012, 0
    %v2040 = vsel %vm1313, %v2013, 0
    %v2043 = vsel %vm1313, %v2014, 0
    %2045 = vmatpush.bf16.msra.mxu0 0
    %2046 = vmatpush.bf16.msra.mxu0 0
    %2047 = vmatpush.bf16.msra.mxu0 0
    %2048 = vmatpush.bf16.msra.mxu0 0
    %2049 = vmatpush.bf16.msra.mxu0 0
    %2050 = vmatpush.bf16.msra.mxu0 0
    %2051 = vmatpush.bf16.msra.mxu0 0
    %2052 = vmatpush.bf16.msra.mxu0 %v2019
    %2053 = vmatmul.bf16.gmra.mxu0 %v2022
    %v2054 = vpop.f32.mrf.mxu0
    %v2055 = vadd.f32 0.0, %v2054
    %v2056 = vpop.f32.mrf.mxu0
    %v2057 = vadd.f32 0.0, %v2056
    %2058 = vmatmul.bf16.gmra.mxu0 %v2025
    %v2059 = vpop.f32.mrf.mxu0
    %v2060 = vadd.f32 0.0, %v2059
    %v2061 = vpop.f32.mrf.mxu0
    %v2062 = vadd.f32 0.0, %v2061
    %2063 = vmatmul.bf16.gmra.mxu0 %v2028
    %v2064 = vpop.f32.mrf.mxu0
    %v2065 = vadd.f32 0.0, %v2064
    %v2066 = vpop.f32.mrf.mxu0
    %v2067 = vadd.f32 0.0, %v2066
    %2068 = vmatmul.bf16.gmra.mxu0 %v2031
    %v2069 = vpop.f32.mrf.mxu0
    %v2070 = vadd.f32 0.0, %v2069
    %v2071 = vpop.f32.mrf.mxu0
    %v2072 = vadd.f32 0.0, %v2071
    %2073 = vmatmul.bf16.gmra.mxu0 %v2034
    %v2074 = vpop.f32.mrf.mxu0
    %v2075 = vadd.f32 0.0, %v2074
    %v2076 = vpop.f32.mrf.mxu0
    %v2077 = vadd.f32 0.0, %v2076
    %2078 = vmatmul.bf16.gmra.mxu0 %v2037
    %v2079 = vpop.f32.mrf.mxu0
    %v2080 = vadd.f32 0.0, %v2079
    %v2081 = vpop.f32.mrf.mxu0
    %v2082 = vadd.f32 0.0, %v2081
    %2083 = vmatmul.bf16.gmra.mxu0 %v2040
    %v2084 = vpop.f32.mrf.mxu0
    %v2085 = vadd.f32 0.0, %v2084
    %v2086 = vpop.f32.mrf.mxu0
    %v2087 = vadd.f32 0.0, %v2086
    %2088 = vmatmul.bf16.gmra.mxu0 %v2043
    %v2089 = vpop.f32.mrf.mxu0
    %v2090 = vadd.f32 0.0, %v2089
    %v2091 = vpop.f32.mrf.mxu0
    %v2092 = vadd.f32 0.0, %v2091
    %2093 = vdwg.mxu0
    %v2096 = vunpack.c.l.b16 %v1237
    %v2097 = vunpack.c.l.b16 %v1238
    %v2098 = vpack.c.b16 %v2097, %v2096
    %2100 = vxpose.xlu0.c.b16.start [1/8] %v2098, 128
    %2101 = vxpose.xlu0.c.b16.cont [2/8] 0, 128
    %2102 = vxpose.xlu0.c.b16.cont [3/8] 0, 128
    %2103 = vxpose.xlu0.c.b16.cont [4/8] 0, 128
    %2104 = vxpose.xlu0.c.b16.cont [5/8] 0, 128
    %2105 = vxpose.xlu0.c.b16.cont [6/8] 0, 128
    %2106 = vxpose.xlu0.c.b16.cont [7/8] 0, 128
    %2107 = vxpose.xlu0.c.b16.end [8/8] 0, 128
    %v2108 = vpop.trf.xlu0
    %v2109 = vpop.trf.xlu0
    %v2110 = vpop.trf.xlu0
    %v2111 = vpop.trf.xlu0
    %v2112 = vpop.trf.xlu0
    %v2113 = vpop.trf.xlu0
    %v2114 = vpop.trf.xlu0
    %v2115 = vpop.trf.xlu0
    %v2118 = vunpack.c.l.b16 %v1269
    %v2119 = vunpack.c.l.b16 %v1270
    %v2120 = vpack.c.b16 %v2119, %v2118
    %v2123 = vsel %vm1313, %v2108, 0
    %v2126 = vsel %vm1313, %v2109, 0
    %v2129 = vsel %vm1313, %v2110, 0
    %v2132 = vsel %vm1313, %v2111, 0
    %v2135 = vsel %vm1313, %v2112, 0
    %v2138 = vsel %vm1313, %v2113, 0
    %v2141 = vsel %vm1313, %v2114, 0
    %v2144 = vsel %vm1313, %v2115, 0
    %2146 = vmatpush.bf16.msra.mxu0 0
    %2147 = vmatpush.bf16.msra.mxu0 0
    %2148 = vmatpush.bf16.msra.mxu0 0
    %2149 = vmatpush.bf16.msra.mxu0 0
    %2150 = vmatpush.bf16.msra.mxu0 0
    %2151 = vmatpush.bf16.msra.mxu0 0
    %2152 = vmatpush.bf16.msra.mxu0 0
    %2153 = vmatpush.bf16.msra.mxu0 %v2120
    %2154 = vmatmul.bf16.gmra.mxu0 %v2123
    %v2155 = vpop.f32.mrf.mxu0
    %v2156 = vadd.f32 0.0, %v2155
    %v2157 = vpop.f32.mrf.mxu0
    %v2158 = vadd.f32 0.0, %v2157
    %2159 = vmatmul.bf16.gmra.mxu0 %v2126
    %v2160 = vpop.f32.mrf.mxu0
    %v2161 = vadd.f32 0.0, %v2160
    %v2162 = vpop.f32.mrf.mxu0
    %v2163 = vadd.f32 0.0, %v2162
    %2164 = vmatmul.bf16.gmra.mxu0 %v2129
    %v2165 = vpop.f32.mrf.mxu0
    %v2166 = vadd.f32 0.0, %v2165
    %v2167 = vpop.f32.mrf.mxu0
    %v2168 = vadd.f32 0.0, %v2167
    %2169 = vmatmul.bf16.gmra.mxu0 %v2132
    %v2170 = vpop.f32.mrf.mxu0
    %v2171 = vadd.f32 0.0, %v2170
    %v2172 = vpop.f32.mrf.mxu0
    %v2173 = vadd.f32 0.0, %v2172
    %2174 = vmatmul.bf16.gmra.mxu0 %v2135
    %v2175 = vpop.f32.mrf.mxu0
    %v2176 = vadd.f32 0.0, %v2175
    %v2177 = vpop.f32.mrf.mxu0
    %v2178 = vadd.f32 0.0, %v2177
    %2179 = vmatmul.bf16.gmra.mxu0 %v2138
    %v2180 = vpop.f32.mrf.mxu0
    %v2181 = vadd.f32 0.0, %v2180
    %v2182 = vpop.f32.mrf.mxu0
    %v2183 = vadd.f32 0.0, %v2182
    %2184 = vmatmul.bf16.gmra.mxu0 %v2141
    %v2185 = vpop.f32.mrf.mxu0
    %v2186 = vadd.f32 0.0, %v2185
    %v2187 = vpop.f32.mrf.mxu0
    %v2188 = vadd.f32 0.0, %v2187
    %2189 = vmatmul.bf16.gmra.mxu0 %v2144
    %v2190 = vpop.f32.mrf.mxu0
    %v2191 = vadd.f32 0.0, %v2190
    %v2192 = vpop.f32.mrf.mxu0
    %v2193 = vadd.f32 0.0, %v2192
    %2194 = vdwg.mxu0
    %v2197 = vunpack.c.l.b16 %v1239
    %v2198 = vunpack.c.l.b16 %v1240
    %v2199 = vpack.c.b16 %v2198, %v2197
    %2201 = vxpose.xlu0.c.b16.start [1/8] %v2199, 128
    %2202 = vxpose.xlu0.c.b16.cont [2/8] 0, 128
    %2203 = vxpose.xlu0.c.b16.cont [3/8] 0, 128
    %2204 = vxpose.xlu0.c.b16.cont [4/8] 0, 128
    %2205 = vxpose.xlu0.c.b16.cont [5/8] 0, 128
    %2206 = vxpose.xlu0.c.b16.cont [6/8] 0, 128
    %2207 = vxpose.xlu0.c.b16.cont [7/8] 0, 128
    %2208 = vxpose.xlu0.c.b16.end [8/8] 0, 128
    %v2209 = vpop.trf.xlu0
    %v2210 = vpop.trf.xlu0
    %v2211 = vpop.trf.xlu0
    %v2212 = vpop.trf.xlu0
    %v2213 = vpop.trf.xlu0
    %v2214 = vpop.trf.xlu0
    %v2215 = vpop.trf.xlu0
    %v2216 = vpop.trf.xlu0
    %v2219 = vunpack.c.l.b16 %v1271
    %v2220 = vunpack.c.l.b16 %v1272
    %v2221 = vpack.c.b16 %v2220, %v2219
    %v2224 = vsel %vm1313, %v2209, 0
    %v2227 = vsel %vm1313, %v2210, 0
    %v2230 = vsel %vm1313, %v2211, 0
    %v2233 = vsel %vm1313, %v2212, 0
    %v2236 = vsel %vm1313, %v2213, 0
    %v2239 = vsel %vm1313, %v2214, 0
    %v2242 = vsel %vm1313, %v2215, 0
    %v2245 = vsel %vm1313, %v2216, 0
    %2247 = vmatpush.bf16.msra.mxu0 0
    %2248 = vmatpush.bf16.msra.mxu0 0
    %2249 = vmatpush.bf16.msra.mxu0 0
    %2250 = vmatpush.bf16.msra.mxu0 0
    %2251 = vmatpush.bf16.msra.mxu0 0
    %2252 = vmatpush.bf16.msra.mxu0 0
    %2253 = vmatpush.bf16.msra.mxu0 0
    %2254 = vmatpush.bf16.msra.mxu0 %v2221
    %2255 = vmatmul.bf16.gmra.mxu0 %v2224
    %v2256 = vpop.f32.mrf.mxu0
    %v2257 = vadd.f32 0.0, %v2256
    %v2258 = vpop.f32.mrf.mxu0
    %v2259 = vadd.f32 0.0, %v2258
    %2260 = vmatmul.bf16.gmra.mxu0 %v2227
    %v2261 = vpop.f32.mrf.mxu0
    %v2262 = vadd.f32 0.0, %v2261
    %v2263 = vpop.f32.mrf.mxu0
    %v2264 = vadd.f32 0.0, %v2263
    %2265 = vmatmul.bf16.gmra.mxu0 %v2230
    %v2266 = vpop.f32.mrf.mxu0
    %v2267 = vadd.f32 0.0, %v2266
    %v2268 = vpop.f32.mrf.mxu0
    %v2269 = vadd.f32 0.0, %v2268
    %2270 = vmatmul.bf16.gmra.mxu0 %v2233
    %v2271 = vpop.f32.mrf.mxu0
    %v2272 = vadd.f32 0.0, %v2271
    %v2273 = vpop.f32.mrf.mxu0
    %v2274 = vadd.f32 0.0, %v2273
    %2275 = vmatmul.bf16.gmra.mxu0 %v2236
    %v2276 = vpop.f32.mrf.mxu0
    %v2277 = vadd.f32 0.0, %v2276
    %v2278 = vpop.f32.mrf.mxu0
    %v2279 = vadd.f32 0.0, %v2278
    %2280 = vmatmul.bf16.gmra.mxu0 %v2239
    %v2281 = vpop.f32.mrf.mxu0
    %v2282 = vadd.f32 0.0, %v2281
    %v2283 = vpop.f32.mrf.mxu0
    %v2284 = vadd.f32 0.0, %v2283
    %2285 = vmatmul.bf16.gmra.mxu0 %v2242
    %v2286 = vpop.f32.mrf.mxu0
    %v2287 = vadd.f32 0.0, %v2286
    %v2288 = vpop.f32.mrf.mxu0
    %v2289 = vadd.f32 0.0, %v2288
    %2290 = vmatmul.bf16.gmra.mxu0 %v2245
    %v2291 = vpop.f32.mrf.mxu0
    %v2292 = vadd.f32 0.0, %v2291
    %v2293 = vpop.f32.mrf.mxu0
    %v2294 = vadd.f32 0.0, %v2293
    %2295 = vdwg.mxu0
    %v2298 = vunpack.c.l.b16 %v1241
    %v2299 = vunpack.c.l.b16 %v1242
    %v2300 = vpack.c.b16 %v2299, %v2298
    %2302 = vxpose.xlu0.c.b16.start [1/8] %v2300, 128
    %2303 = vxpose.xlu0.c.b16.cont [2/8] 0, 128
    %2304 = vxpose.xlu0.c.b16.cont [3/8] 0, 128
    %2305 = vxpose.xlu0.c.b16.cont [4/8] 0, 128
    %2306 = vxpose.xlu0.c.b16.cont [5/8] 0, 128
    %2307 = vxpose.xlu0.c.b16.cont [6/8] 0, 128
    %2308 = vxpose.xlu0.c.b16.cont [7/8] 0, 128
    %2309 = vxpose.xlu0.c.b16.end [8/8] 0, 128
    %v2310 = vpop.trf.xlu0
    %v2311 = vpop.trf.xlu0
    %v2312 = vpop.trf.xlu0
    %v2313 = vpop.trf.xlu0
    %v2314 = vpop.trf.xlu0
    %v2315 = vpop.trf.xlu0
    %v2316 = vpop.trf.xlu0
    %v2317 = vpop.trf.xlu0
    %v2320 = vunpack.c.l.b16 %v1273
    %v2321 = vunpack.c.l.b16 %v1274
    %v2322 = vpack.c.b16 %v2321, %v2320
    %v2325 = vsel %vm1313, %v2310, 0
    %v2328 = vsel %vm1313, %v2311, 0
    %v2331 = vsel %vm1313, %v2312, 0
    %v2334 = vsel %vm1313, %v2313, 0
    %v2337 = vsel %vm1313, %v2314, 0
    %v2340 = vsel %vm1313, %v2315, 0
    %v2343 = vsel %vm1313, %v2316, 0
    %v2346 = vsel %vm1313, %v2317, 0
    %2348 = vmatpush.bf16.msra.mxu0 0
    %2349 = vmatpush.bf16.msra.mxu0 0
    %2350 = vmatpush.bf16.msra.mxu0 0
    %2351 = vmatpush.bf16.msra.mxu0 0
    %2352 = vmatpush.bf16.msra.mxu0 0
    %2353 = vmatpush.bf16.msra.mxu0 0
    %2354 = vmatpush.bf16.msra.mxu0 0
    %2355 = vmatpush.bf16.msra.mxu0 %v2322
    %2356 = vmatmul.bf16.gmra.mxu0 %v2325
    %v2357 = vpop.f32.mrf.mxu0
    %v2358 = vadd.f32 0.0, %v2357
    %v2359 = vpop.f32.mrf.mxu0
    %v2360 = vadd.f32 0.0, %v2359
    %2361 = vmatmul.bf16.gmra.mxu0 %v2328
    %v2362 = vpop.f32.mrf.mxu0
    %v2363 = vadd.f32 0.0, %v2362
    %v2364 = vpop.f32.mrf.mxu0
    %v2365 = vadd.f32 0.0, %v2364
    %2366 = vmatmul.bf16.gmra.mxu0 %v2331
    %v2367 = vpop.f32.mrf.mxu0
    %v2368 = vadd.f32 0.0, %v2367
    %v2369 = vpop.f32.mrf.mxu0
    %v2370 = vadd.f32 0.0, %v2369
    %2371 = vmatmul.bf16.gmra.mxu0 %v2334
    %v2372 = vpop.f32.mrf.mxu0
    %v2373 = vadd.f32 0.0, %v2372
    %v2374 = vpop.f32.mrf.mxu0
    %v2375 = vadd.f32 0.0, %v2374
    %2376 = vmatmul.bf16.gmra.mxu0 %v2337
    %v2377 = vpop.f32.mrf.mxu0
    %v2378 = vadd.f32 0.0, %v2377
    %v2379 = vpop.f32.mrf.mxu0
    %v2380 = vadd.f32 0.0, %v2379
    %2381 = vmatmul.bf16.gmra.mxu0 %v2340
    %v2382 = vpop.f32.mrf.mxu0
    %v2383 = vadd.f32 0.0, %v2382
    %v2384 = vpop.f32.mrf.mxu0
    %v2385 = vadd.f32 0.0, %v2384
    %2386 = vmatmul.bf16.gmra.mxu0 %v2343
    %v2387 = vpop.f32.mrf.mxu0
    %v2388 = vadd.f32 0.0, %v2387
    %v2389 = vpop.f32.mrf.mxu0
    %v2390 = vadd.f32 0.0, %v2389
    %2391 = vmatmul.bf16.gmra.mxu0 %v2346
    %v2392 = vpop.f32.mrf.mxu0
    %v2393 = vadd.f32 0.0, %v2392
    %v2394 = vpop.f32.mrf.mxu0
    %v2395 = vadd.f32 0.0, %v2394
    %2396 = vdwg.mxu0
    %v2399 = vunpack.c.l.b16 %v1243
    %v2400 = vunpack.c.l.b16 %v1244
    %v2401 = vpack.c.b16 %v2400, %v2399
    %2403 = vxpose.xlu0.c.b16.start [1/8] %v2401, 128
    %2404 = vxpose.xlu0.c.b16.cont [2/8] 0, 128
    %2405 = vxpose.xlu0.c.b16.cont [3/8] 0, 128
    %2406 = vxpose.xlu0.c.b16.cont [4/8] 0, 128
    %2407 = vxpose.xlu0.c.b16.cont [5/8] 0, 128
    %2408 = vxpose.xlu0.c.b16.cont [6/8] 0, 128
    %2409 = vxpose.xlu0.c.b16.cont [7/8] 0, 128
    %2410 = vxpose.xlu0.c.b16.end [8/8] 0, 128
    %v2411 = vpop.trf.xlu0
    %v2412 = vpop.trf.xlu0
    %v2413 = vpop.trf.xlu0
    %v2414 = vpop.trf.xlu0
    %v2415 = vpop.trf.xlu0
    %v2416 = vpop.trf.xlu0
    %v2417 = vpop.trf.xlu0
    %v2418 = vpop.trf.xlu0
    %v2421 = vunpack.c.l.b16 %v1275
    %v2422 = vunpack.c.l.b16 %v1276
    %v2423 = vpack.c.b16 %v2422, %v2421
    %v2426 = vsel %vm1313, %v2411, 0
    %v2429 = vsel %vm1313, %v2412, 0
    %v2432 = vsel %vm1313, %v2413, 0
    %v2435 = vsel %vm1313, %v2414, 0
    %v2438 = vsel %vm1313, %v2415, 0
    %v2441 = vsel %vm1313, %v2416, 0
    %v2444 = vsel %vm1313, %v2417, 0
    %v2447 = vsel %vm1313, %v2418, 0
    %2449 = vmatpush.bf16.msra.mxu0 0
    %2450 = vmatpush.bf16.msra.mxu0 0
    %2451 = vmatpush.bf16.msra.mxu0 0
    %2452 = vmatpush.bf16.msra.mxu0 0
    %2453 = vmatpush.bf16.msra.mxu0 0
    %2454 = vmatpush.bf16.msra.mxu0 0
    %2455 = vmatpush.bf16.msra.mxu0 0
    %2456 = vmatpush.bf16.msra.mxu0 %v2423
    %2457 = vmatmul.bf16.gmra.mxu0 %v2426
    %v2458 = vpop.f32.mrf.mxu0
    %v2459 = vadd.f32 0.0, %v2458
    %v2460 = vpop.f32.mrf.mxu0
    %v2461 = vadd.f32 0.0, %v2460
    %2462 = vmatmul.bf16.gmra.mxu0 %v2429
    %v2463 = vpop.f32.mrf.mxu0
    %v2464 = vadd.f32 0.0, %v2463
    %v2465 = vpop.f32.mrf.mxu0
    %v2466 = vadd.f32 0.0, %v2465
    %2467 = vmatmul.bf16.gmra.mxu0 %v2432
    %v2468 = vpop.f32.mrf.mxu0
    %v2469 = vadd.f32 0.0, %v2468
    %v2470 = vpop.f32.mrf.mxu0
    %v2471 = vadd.f32 0.0, %v2470
    %2472 = vmatmul.bf16.gmra.mxu0 %v2435
    %v2473 = vpop.f32.mrf.mxu0
    %v2474 = vadd.f32 0.0, %v2473
    %v2475 = vpop.f32.mrf.mxu0
    %v2476 = vadd.f32 0.0, %v2475
    %2477 = vmatmul.bf16.gmra.mxu0 %v2438
    %v2478 = vpop.f32.mrf.mxu0
    %v2479 = vadd.f32 0.0, %v2478
    %v2480 = vpop.f32.mrf.mxu0
    %v2481 = vadd.f32 0.0, %v2480
    %2482 = vmatmul.bf16.gmra.mxu0 %v2441
    %v2483 = vpop.f32.mrf.mxu0
    %v2484 = vadd.f32 0.0, %v2483
    %v2485 = vpop.f32.mrf.mxu0
    %v2486 = vadd.f32 0.0, %v2485
    %2487 = vmatmul.bf16.gmra.mxu0 %v2444
    %v2488 = vpop.f32.mrf.mxu0
    %v2489 = vadd.f32 0.0, %v2488
    %v2490 = vpop.f32.mrf.mxu0
    %v2491 = vadd.f32 0.0, %v2490
    %2492 = vmatmul.bf16.gmra.mxu0 %v2447
    %v2493 = vpop.f32.mrf.mxu0
    %v2494 = vadd.f32 0.0, %v2493
    %v2495 = vpop.f32.mrf.mxu0
    %v2496 = vadd.f32 0.0, %v2495
    %2497 = vdwg.mxu0
    %v2500 = vunpack.c.l.b16 %v1245
    %v2501 = vunpack.c.l.b16 %v1246
    %v2502 = vpack.c.b16 %v2501, %v2500
    %2504 = vxpose.xlu0.c.b16.start [1/8] %v2502, 128
    %2505 = vxpose.xlu0.c.b16.cont [2/8] 0, 128
    %2506 = vxpose.xlu0.c.b16.cont [3/8] 0, 128
    %2507 = vxpose.xlu0.c.b16.cont [4/8] 0, 128
    %2508 = vxpose.xlu0.c.b16.cont [5/8] 0, 128
    %2509 = vxpose.xlu0.c.b16.cont [6/8] 0, 128
    %2510 = vxpose.xlu0.c.b16.cont [7/8] 0, 128
    %2511 = vxpose.xlu0.c.b16.end [8/8] 0, 128
    %v2512 = vpop.trf.xlu0
    %v2513 = vpop.trf.xlu0
    %v2514 = vpop.trf.xlu0
    %v2515 = vpop.trf.xlu0
    %v2516 = vpop.trf.xlu0
    %v2517 = vpop.trf.xlu0
    %v2518 = vpop.trf.xlu0
    %v2519 = vpop.trf.xlu0
    %v2522 = vunpack.c.l.b16 %v1277
    %v2523 = vunpack.c.l.b16 %v1278
    %v2524 = vpack.c.b16 %v2523, %v2522
    %v2527 = vsel %vm1313, %v2512, 0
    %v2530 = vsel %vm1313, %v2513, 0
    %v2533 = vsel %vm1313, %v2514, 0
    %v2536 = vsel %vm1313, %v2515, 0
    %v2539 = vsel %vm1313, %v2516, 0
    %v2542 = vsel %vm1313, %v2517, 0
    %v2545 = vsel %vm1313, %v2518, 0
    %v2548 = vsel %vm1313, %v2519, 0
    %2550 = vmatpush.bf16.msra.mxu0 0
    %2551 = vmatpush.bf16.msra.mxu0 0
    %2552 = vmatpush.bf16.msra.mxu0 0
    %2553 = vmatpush.bf16.msra.mxu0 0
    %2554 = vmatpush.bf16.msra.mxu0 0
    %2555 = vmatpush.bf16.msra.mxu0 0
    %2556 = vmatpush.bf16.msra.mxu0 0
    %2557 = vmatpush.bf16.msra.mxu0 %v2524
    %2558 = vmatmul.bf16.gmra.mxu0 %v2527
    %v2559 = vpop.f32.mrf.mxu0
    %v2560 = vadd.f32 0.0, %v2559
    %v2561 = vpop.f32.mrf.mxu0
    %v2562 = vadd.f32 0.0, %v2561
    %2563 = vmatmul.bf16.gmra.mxu0 %v2530
    %v2564 = vpop.f32.mrf.mxu0
    %v2565 = vadd.f32 0.0, %v2564
    %v2566 = vpop.f32.mrf.mxu0
    %v2567 = vadd.f32 0.0, %v2566
    %2568 = vmatmul.bf16.gmra.mxu0 %v2533
    %v2569 = vpop.f32.mrf.mxu0
    %v2570 = vadd.f32 0.0, %v2569
    %v2571 = vpop.f32.mrf.mxu0
    %v2572 = vadd.f32 0.0, %v2571
    %2573 = vmatmul.bf16.gmra.mxu0 %v2536
    %v2574 = vpop.f32.mrf.mxu0
    %v2575 = vadd.f32 0.0, %v2574
    %v2576 = vpop.f32.mrf.mxu0
    %v2577 = vadd.f32 0.0, %v2576
    %2578 = vmatmul.bf16.gmra.mxu0 %v2539
    %v2579 = vpop.f32.mrf.mxu0
    %v2580 = vadd.f32 0.0, %v2579
    %v2581 = vpop.f32.mrf.mxu0
    %v2582 = vadd.f32 0.0, %v2581
    %2583 = vmatmul.bf16.gmra.mxu0 %v2542
    %v2584 = vpop.f32.mrf.mxu0
    %v2585 = vadd.f32 0.0, %v2584
    %v2586 = vpop.f32.mrf.mxu0
    %v2587 = vadd.f32 0.0, %v2586
    %2588 = vmatmul.bf16.gmra.mxu0 %v2545
    %v2589 = vpop.f32.mrf.mxu0
    %v2590 = vadd.f32 0.0, %v2589
    %v2591 = vpop.f32.mrf.mxu0
    %v2592 = vadd.f32 0.0, %v2591
    %2593 = vmatmul.bf16.gmra.mxu0 %v2548
    %v2594 = vpop.f32.mrf.mxu0
    %v2595 = vadd.f32 0.0, %v2594
    %v2596 = vpop.f32.mrf.mxu0
    %v2597 = vadd.f32 0.0, %v2596
    %2598 = vdwg.mxu0
    %v2601 = vunpack.c.l.b16 %v1247
    %v2602 = vunpack.c.l.b16 %v1248
    %v2603 = vpack.c.b16 %v2602, %v2601
    %2605 = vxpose.xlu0.c.b16.start [1/8] %v2603, 128
    %2606 = vxpose.xlu0.c.b16.cont [2/8] 0, 128
    %2607 = vxpose.xlu0.c.b16.cont [3/8] 0, 128
    %2608 = vxpose.xlu0.c.b16.cont [4/8] 0, 128
    %2609 = vxpose.xlu0.c.b16.cont [5/8] 0, 128
    %2610 = vxpose.xlu0.c.b16.cont [6/8] 0, 128
    %2611 = vxpose.xlu0.c.b16.cont [7/8] 0, 128
    %2612 = vxpose.xlu0.c.b16.end [8/8] 0, 128
    %v2613 = vpop.trf.xlu0
    %v2614 = vpop.trf.xlu0
    %v2615 = vpop.trf.xlu0
    %v2616 = vpop.trf.xlu0
    %v2617 = vpop.trf.xlu0
    %v2618 = vpop.trf.xlu0
    %v2619 = vpop.trf.xlu0
    %v2620 = vpop.trf.xlu0
    %v2623 = vunpack.c.l.b16 %v1279
    %v2624 = vunpack.c.l.b16 %v1280
    %v2625 = vpack.c.b16 %v2624, %v2623
    %v2628 = vsel %vm1313, %v2613, 0
    %v2631 = vsel %vm1313, %v2614, 0
    %v2634 = vsel %vm1313, %v2615, 0
    %v2637 = vsel %vm1313, %v2616, 0
    %v2640 = vsel %vm1313, %v2617, 0
    %v2643 = vsel %vm1313, %v2618, 0
    %v2646 = vsel %vm1313, %v2619, 0
    %v2649 = vsel %vm1313, %v2620, 0
    %2651 = vmatpush.bf16.msra.mxu0 0
    %2652 = vmatpush.bf16.msra.mxu0 0
    %2653 = vmatpush.bf16.msra.mxu0 0
    %2654 = vmatpush.bf16.msra.mxu0 0
    %2655 = vmatpush.bf16.msra.mxu0 0
    %2656 = vmatpush.bf16.msra.mxu0 0
    %2657 = vmatpush.bf16.msra.mxu0 0
    %2658 = vmatpush.bf16.msra.mxu0 %v2625
    %2659 = vmatmul.bf16.gmra.mxu0 %v2628
    %v2660 = vpop.f32.mrf.mxu0
    %v2661 = vadd.f32 0.0, %v2660
    %v2662 = vpop.f32.mrf.mxu0
    %v2663 = vadd.f32 0.0, %v2662
    %2664 = vmatmul.bf16.gmra.mxu0 %v2631
    %v2665 = vpop.f32.mrf.mxu0
    %v2666 = vadd.f32 0.0, %v2665
    %v2667 = vpop.f32.mrf.mxu0
    %v2668 = vadd.f32 0.0, %v2667
    %2669 = vmatmul.bf16.gmra.mxu0 %v2634
    %v2670 = vpop.f32.mrf.mxu0
    %v2671 = vadd.f32 0.0, %v2670
    %v2672 = vpop.f32.mrf.mxu0
    %v2673 = vadd.f32 0.0, %v2672
    %2674 = vmatmul.bf16.gmra.mxu0 %v2637
    %v2675 = vpop.f32.mrf.mxu0
    %v2676 = vadd.f32 0.0, %v2675
    %v2677 = vpop.f32.mrf.mxu0
    %v2678 = vadd.f32 0.0, %v2677
    %2679 = vmatmul.bf16.gmra.mxu0 %v2640
    %v2680 = vpop.f32.mrf.mxu0
    %v2681 = vadd.f32 0.0, %v2680
    %v2682 = vpop.f32.mrf.mxu0
    %v2683 = vadd.f32 0.0, %v2682
    %2684 = vmatmul.bf16.gmra.mxu0 %v2643
    %v2685 = vpop.f32.mrf.mxu0
    %v2686 = vadd.f32 0.0, %v2685
    %v2687 = vpop.f32.mrf.mxu0
    %v2688 = vadd.f32 0.0, %v2687
    %2689 = vmatmul.bf16.gmra.mxu0 %v2646
    %v2690 = vpop.f32.mrf.mxu0
    %v2691 = vadd.f32 0.0, %v2690
    %v2692 = vpop.f32.mrf.mxu0
    %v2693 = vadd.f32 0.0, %v2692
    %2694 = vmatmul.bf16.gmra.mxu0 %v2649
    %v2695 = vpop.f32.mrf.mxu0
    %v2696 = vadd.f32 0.0, %v2695
    %v2697 = vpop.f32.mrf.mxu0
    %v2698 = vadd.f32 0.0, %v2697
    %2699 = vdwg.mxu0
    %v2702 = vunpack.c.l.b16 %v1249
    %v2703 = vunpack.c.l.b16 %v1250
    %v2704 = vpack.c.b16 %v2703, %v2702
    %2706 = vxpose.xlu0.c.b16.start [1/8] %v2704, 128
    %2707 = vxpose.xlu0.c.b16.cont [2/8] 0, 128
    %2708 = vxpose.xlu0.c.b16.cont [3/8] 0, 128
    %2709 = vxpose.xlu0.c.b16.cont [4/8] 0, 128
    %2710 = vxpose.xlu0.c.b16.cont [5/8] 0, 128
    %2711 = vxpose.xlu0.c.b16.cont [6/8] 0, 128
    %2712 = vxpose.xlu0.c.b16.cont [7/8] 0, 128
    %2713 = vxpose.xlu0.c.b16.end [8/8] 0, 128
    %v2714 = vpop.trf.xlu0
    %v2715 = vpop.trf.xlu0
    %v2716 = vpop.trf.xlu0
    %v2717 = vpop.trf.xlu0
    %v2718 = vpop.trf.xlu0
    %v2719 = vpop.trf.xlu0
    %v2720 = vpop.trf.xlu0
    %v2721 = vpop.trf.xlu0
    %v2724 = vunpack.c.l.b16 %v1281
    %v2725 = vunpack.c.l.b16 %v1282
    %v2726 = vpack.c.b16 %v2725, %v2724
    %v2729 = vsel %vm1313, %v2714, 0
    %v2732 = vsel %vm1313, %v2715, 0
    %v2735 = vsel %vm1313, %v2716, 0
    %v2738 = vsel %vm1313, %v2717, 0
    %v2741 = vsel %vm1313, %v2718, 0
    %v2744 = vsel %vm1313, %v2719, 0
    %v2747 = vsel %vm1313, %v2720, 0
    %v2750 = vsel %vm1313, %v2721, 0
    %2752 = vmatpush.bf16.msra.mxu0 0
    %2753 = vmatpush.bf16.msra.mxu0 0
    %2754 = vmatpush.bf16.msra.mxu0 0
    %2755 = vmatpush.bf16.msra.mxu0 0
    %2756 = vmatpush.bf16.msra.mxu0 0
    %2757 = vmatpush.bf16.msra.mxu0 0
    %2758 = vmatpush.bf16.msra.mxu0 0
    %2759 = vmatpush.bf16.msra.mxu0 %v2726
    %2760 = vmatmul.bf16.gmra.mxu0 %v2729
    %v2761 = vpop.f32.mrf.mxu0
    %v2762 = vadd.f32 0.0, %v2761
    %v2763 = vpop.f32.mrf.mxu0
    %v2764 = vadd.f32 0.0, %v2763
    %2765 = vmatmul.bf16.gmra.mxu0 %v2732
    %v2766 = vpop.f32.mrf.mxu0
    %v2767 = vadd.f32 0.0, %v2766
    %v2768 = vpop.f32.mrf.mxu0
    %v2769 = vadd.f32 0.0, %v2768
    %2770 = vmatmul.bf16.gmra.mxu0 %v2735
    %v2771 = vpop.f32.mrf.mxu0
    %v2772 = vadd.f32 0.0, %v2771
    %v2773 = vpop.f32.mrf.mxu0
    %v2774 = vadd.f32 0.0, %v2773
    %2775 = vmatmul.bf16.gmra.mxu0 %v2738
    %v2776 = vpop.f32.mrf.mxu0
    %v2777 = vadd.f32 0.0, %v2776
    %v2778 = vpop.f32.mrf.mxu0
    %v2779 = vadd.f32 0.0, %v2778
    %2780 = vmatmul.bf16.gmra.mxu0 %v2741
    %v2781 = vpop.f32.mrf.mxu0
    %v2782 = vadd.f32 0.0, %v2781
    %v2783 = vpop.f32.mrf.mxu0
    %v2784 = vadd.f32 0.0, %v2783
    %2785 = vmatmul.bf16.gmra.mxu0 %v2744
    %v2786 = vpop.f32.mrf.mxu0
    %v2787 = vadd.f32 0.0, %v2786
    %v2788 = vpop.f32.mrf.mxu0
    %v2789 = vadd.f32 0.0, %v2788
    %2790 = vmatmul.bf16.gmra.mxu0 %v2747
    %v2791 = vpop.f32.mrf.mxu0
    %v2792 = vadd.f32 0.0, %v2791
    %v2793 = vpop.f32.mrf.mxu0
    %v2794 = vadd.f32 0.0, %v2793
    %2795 = vmatmul.bf16.gmra.mxu0 %v2750
    %v2796 = vpop.f32.mrf.mxu0
    %v2797 = vadd.f32 0.0, %v2796
    %v2798 = vpop.f32.mrf.mxu0
    %v2799 = vadd.f32 0.0, %v2798
    %2800 = vdwg.mxu0
    %v2803 = vunpack.c.l.b16 %v1251
    %v2804 = vunpack.c.l.b16 %v1252
    %v2805 = vpack.c.b16 %v2804, %v2803
    %2807 = vxpose.xlu0.c.b16.start [1/8] %v2805, 128
    %2808 = vxpose.xlu0.c.b16.cont [2/8] 0, 128
    %2809 = vxpose.xlu0.c.b16.cont [3/8] 0, 128
    %2810 = vxpose.xlu0.c.b16.cont [4/8] 0, 128
    %2811 = vxpose.xlu0.c.b16.cont [5/8] 0, 128
    %2812 = vxpose.xlu0.c.b16.cont [6/8] 0, 128
    %2813 = vxpose.xlu0.c.b16.cont [7/8] 0, 128
    %2814 = vxpose.xlu0.c.b16.end [8/8] 0, 128
    %v2815 = vpop.trf.xlu0
    %v2816 = vpop.trf.xlu0
    %v2817 = vpop.trf.xlu0
    %v2818 = vpop.trf.xlu0
    %v2819 = vpop.trf.xlu0
    %v2820 = vpop.trf.xlu0
    %v2821 = vpop.trf.xlu0
    %v2822 = vpop.trf.xlu0
    %v2825 = vunpack.c.l.b16 %v1283
    %v2826 = vunpack.c.l.b16 %v1284
    %v2827 = vpack.c.b16 %v2826, %v2825
    %v2830 = vsel %vm1313, %v2815, 0
    %v2833 = vsel %vm1313, %v2816, 0
    %v2836 = vsel %vm1313, %v2817, 0
    %v2839 = vsel %vm1313, %v2818, 0
    %v2842 = vsel %vm1313, %v2819, 0
    %v2845 = vsel %vm1313, %v2820, 0
    %v2848 = vsel %vm1313, %v2821, 0
    %v2851 = vsel %vm1313, %v2822, 0
    %2853 = vmatpush.bf16.msra.mxu0 0
    %2854 = vmatpush.bf16.msra.mxu0 0
    %2855 = vmatpush.bf16.msra.mxu0 0
    %2856 = vmatpush.bf16.msra.mxu0 0
    %2857 = vmatpush.bf16.msra.mxu0 0
    %2858 = vmatpush.bf16.msra.mxu0 0
    %2859 = vmatpush.bf16.msra.mxu0 0
    %2860 = vmatpush.bf16.msra.mxu0 %v2827
    %2861 = vmatmul.bf16.gmra.mxu0 %v2830
    %v2862 = vpop.f32.mrf.mxu0
    %v2863 = vadd.f32 0.0, %v2862
    %v2864 = vpop.f32.mrf.mxu0
    %v2865 = vadd.f32 0.0, %v2864
    %2866 = vmatmul.bf16.gmra.mxu0 %v2833
    %v2867 = vpop.f32.mrf.mxu0
    %v2868 = vadd.f32 0.0, %v2867
    %v2869 = vpop.f32.mrf.mxu0
    %v2870 = vadd.f32 0.0, %v2869
    %2871 = vmatmul.bf16.gmra.mxu0 %v2836
    %v2872 = vpop.f32.mrf.mxu0
    %v2873 = vadd.f32 0.0, %v2872
    %v2874 = vpop.f32.mrf.mxu0
    %v2875 = vadd.f32 0.0, %v2874
    %2876 = vmatmul.bf16.gmra.mxu0 %v2839
    %v2877 = vpop.f32.mrf.mxu0
    %v2878 = vadd.f32 0.0, %v2877
    %v2879 = vpop.f32.mrf.mxu0
    %v2880 = vadd.f32 0.0, %v2879
    %2881 = vmatmul.bf16.gmra.mxu0 %v2842
    %v2882 = vpop.f32.mrf.mxu0
    %v2883 = vadd.f32 0.0, %v2882
    %v2884 = vpop.f32.mrf.mxu0
    %v2885 = vadd.f32 0.0, %v2884
    %2886 = vmatmul.bf16.gmra.mxu0 %v2845
    %v2887 = vpop.f32.mrf.mxu0
    %v2888 = vadd.f32 0.0, %v2887
    %v2889 = vpop.f32.mrf.mxu0
    %v2890 = vadd.f32 0.0, %v2889
    %2891 = vmatmul.bf16.gmra.mxu0 %v2848
    %v2892 = vpop.f32.mrf.mxu0
    %v2893 = vadd.f32 0.0, %v2892
    %v2894 = vpop.f32.mrf.mxu0
    %v2895 = vadd.f32 0.0, %v2894
    %2896 = vmatmul.bf16.gmra.mxu0 %v2851
    %v2897 = vpop.f32.mrf.mxu0
    %v2898 = vadd.f32 0.0, %v2897
    %v2899 = vpop.f32.mrf.mxu0
    %v2900 = vadd.f32 0.0, %v2899
    %2901 = vdwg.mxu0
    %v2902 = vld [vmem:[#allocation9] sm:$0xff]
    %v2903 = vld [vmem:[#allocation9 + $0x8] sm:$0xff]
    %v2904 = vld [vmem:[#allocation9 + $0x10] sm:$0xff]
    %v2905 = vld [vmem:[#allocation9 + $0x18] sm:$0xff]
    %v2906 = vld [vmem:[#allocation9 + $0x20] sm:$0xff]
    %v2907 = vld [vmem:[#allocation9 + $0x28] sm:$0xff]
    %v2908 = vld [vmem:[#allocation9 + $0x30] sm:$0xff]
    %v2909 = vld [vmem:[#allocation9 + $0x38] sm:$0xff]
    %v2910 = vld [vmem:[#allocation9 + $0x40] sm:$0xff]
    %v2911 = vld [vmem:[#allocation9 + $0x48] sm:$0xff]
    %v2912 = vld [vmem:[#allocation9 + $0x50] sm:$0xff]
    %v2913 = vld [vmem:[#allocation9 + $0x58] sm:$0xff]
    %v2914 = vld [vmem:[#allocation9 + $0x60] sm:$0xff]
    %v2915 = vld [vmem:[#allocation9 + $0x68] sm:$0xff]
    %v2916 = vld [vmem:[#allocation9 + $0x70] sm:$0xff]
    %v2917 = vld [vmem:[#allocation9 + $0x78] sm:$0xff]
    %v2918 = vmul.f32 %v1348, %v2902
    %v2919 = vmul.f32 %v1350, %v2903
    %v2920 = vmul.f32 %v1353, %v2904
    %v2921 = vmul.f32 %v1355, %v2905
    %v2922 = vmul.f32 %v1358, %v2906
    %v2923 = vmul.f32 %v1360, %v2907
    %v2924 = vmul.f32 %v1363, %v2908
    %v2925 = vmul.f32 %v1365, %v2909
    %v2926 = vmul.f32 %v1368, %v2910
    %v2927 = vmul.f32 %v1370, %v2911
    %v2928 = vmul.f32 %v1373, %v2912
    %v2929 = vmul.f32 %v1375, %v2913
    %v2930 = vmul.f32 %v1378, %v2914
    %v2931 = vmul.f32 %v1380, %v2915
    %v2932 = vmul.f32 %v1383, %v2916
    %v2933 = vmul.f32 %v1385, %v2917
    %v2934 = vmul.f32 %v1449, %v2902
    %v2935 = vmul.f32 %v1451, %v2903
    %v2936 = vmul.f32 %v1454, %v2904
    %v2937 = vmul.f32 %v1456, %v2905
    %v2938 = vmul.f32 %v1459, %v2906
    %v2939 = vmul.f32 %v1461, %v2907
    %v2940 = vmul.f32 %v1464, %v2908
    %v2941 = vmul.f32 %v1466, %v2909
    %v2942 = vmul.f32 %v1469, %v2910
    %v2943 = vmul.f32 %v1471, %v2911
    %v2944 = vmul.f32 %v1474, %v2912
    %v2945 = vmul.f32 %v1476, %v2913
    %v2946 = vmul.f32 %v1479, %v2914
    %v2947 = vmul.f32 %v1481, %v2915
    %v2948 = vmul.f32 %v1484, %v2916
    %v2949 = vmul.f32 %v1486, %v2917
    %v2950 = vmul.f32 %v1550, %v2902
    %v2951 = vmul.f32 %v1552, %v2903
    %v2952 = vmul.f32 %v1555, %v2904
    %v2953 = vmul.f32 %v1557, %v2905
    %v2954 = vmul.f32 %v1560, %v2906
    %v2955 = vmul.f32 %v1562, %v2907
    %v2956 = vmul.f32 %v1565, %v2908
    %v2957 = vmul.f32 %v1567, %v2909
    %v2958 = vmul.f32 %v1570, %v2910
    %v2959 = vmul.f32 %v1572, %v2911
    %v2960 = vmul.f32 %v1575, %v2912
    %v2961 = vmul.f32 %v1577, %v2913
    %v2962 = vmul.f32 %v1580, %v2914
    %v2963 = vmul.f32 %v1582, %v2915
    %v2964 = vmul.f32 %v1585, %v2916
    %v2965 = vmul.f32 %v1587, %v2917
    %v2966 = vmul.f32 %v1651, %v2902
    %v2967 = vmul.f32 %v1653, %v2903
    %v2968 = vmul.f32 %v1656, %v2904
    %v2969 = vmul.f32 %v1658, %v2905
    %v2970 = vmul.f32 %v1661, %v2906
    %v2971 = vmul.f32 %v1663, %v2907
    %v2972 = vmul.f32 %v1666, %v2908
    %v2973 = vmul.f32 %v1668, %v2909
    %v2974 = vmul.f32 %v1671, %v2910
    %v2975 = vmul.f32 %v1673, %v2911
    %v2976 = vmul.f32 %v1676, %v2912
    %v2977 = vmul.f32 %v1678, %v2913
    %v2978 = vmul.f32 %v1681, %v2914
    %v2979 = vmul.f32 %v1683, %v2915
    %v2980 = vmul.f32 %v1686, %v2916
    %v2981 = vmul.f32 %v1688, %v2917
    %v2982 = vmul.f32 %v1752, %v2902
    %v2983 = vmul.f32 %v1754, %v2903
    %v2984 = vmul.f32 %v1757, %v2904
    %v2985 = vmul.f32 %v1759, %v2905
    %v2986 = vmul.f32 %v1762, %v2906
    %v2987 = vmul.f32 %v1764, %v2907
    %v2988 = vmul.f32 %v1767, %v2908
    %v2989 = vmul.f32 %v1769, %v2909
    %v2990 = vmul.f32 %v1772, %v2910
    %v2991 = vmul.f32 %v1774, %v2911
    %v2992 = vmul.f32 %v1777, %v2912
    %v2993 = vmul.f32 %v1779, %v2913
    %v2994 = vmul.f32 %v1782, %v2914
    %v2995 = vmul.f32 %v1784, %v2915
    %v2996 = vmul.f32 %v1787, %v2916
    %v2997 = vmul.f32 %v1789, %v2917
    %v2998 = vmul.f32 %v1853, %v2902
    %v2999 = vmul.f32 %v1855, %v2903
    %v3000 = vmul.f32 %v1858, %v2904
    %v3001 = vmul.f32 %v1860, %v2905
    %v3002 = vmul.f32 %v1863, %v2906
    %v3003 = vmul.f32 %v1865, %v2907
    %v3004 = vmul.f32 %v1868, %v2908
    %v3005 = vmul.f32 %v1870, %v2909
    %v3006 = vmul.f32 %v1873, %v2910
    %v3007 = vmul.f32 %v1875, %v2911
    %v3008 = vmul.f32 %v1878, %v2912
    %v3009 = vmul.f32 %v1880, %v2913
    %v3010 = vmul.f32 %v1883, %v2914
    %v3011 = vmul.f32 %v1885, %v2915
    %v3012 = vmul.f32 %v1888, %v2916
    %v3013 = vmul.f32 %v1890, %v2917
    %v3014 = vmul.f32 %v1954, %v2902
    %v3015 = vmul.f32 %v1956, %v2903
    %v3016 = vmul.f32 %v1959, %v2904
    %v3017 = vmul.f32 %v1961, %v2905
    %v3018 = vmul.f32 %v1964, %v2906
    %v3019 = vmul.f32 %v1966, %v2907
    %v3020 = vmul.f32 %v1969, %v2908
    %v3021 = vmul.f32 %v1971, %v2909
    %v3022 = vmul.f32 %v1974, %v2910
    %v3023 = vmul.f32 %v1976, %v2911
    %v3024 = vmul.f32 %v1979, %v2912
    %v3025 = vmul.f32 %v1981, %v2913
    %v3026 = vmul.f32 %v1984, %v2914
    %v3027 = vmul.f32 %v1986, %v2915
    %v3028 = vmul.f32 %v1989, %v2916
    %v3029 = vmul.f32 %v1991, %v2917
    %v3030 = vmul.f32 %v2055, %v2902
    %v3031 = vmul.f32 %v2057, %v2903
    %v3032 = vmul.f32 %v2060, %v2904
    %v3033 = vmul.f32 %v2062, %v2905
    %v3034 = vmul.f32 %v2065, %v2906
    %v3035 = vmul.f32 %v2067, %v2907
    %v3036 = vmul.f32 %v2070, %v2908
    %v3037 = vmul.f32 %v2072, %v2909
    %v3038 = vmul.f32 %v2075, %v2910
    %v3039 = vmul.f32 %v2077, %v2911
    %v3040 = vmul.f32 %v2080, %v2912
    %v3041 = vmul.f32 %v2082, %v2913
    %v3042 = vmul.f32 %v2085, %v2914
    %v3043 = vmul.f32 %v2087, %v2915
    %v3044 = vmul.f32 %v2090, %v2916
    %v3045 = vmul.f32 %v2092, %v2917
    %v3046 = vmul.f32 %v2156, %v2902
    %v3047 = vmul.f32 %v2158, %v2903
    %v3048 = vmul.f32 %v2161, %v2904
    %v3049 = vmul.f32 %v2163, %v2905
    %v3050 = vmul.f32 %v2166, %v2906
    %v3051 = vmul.f32 %v2168, %v2907
    %v3052 = vmul.f32 %v2171, %v2908
    %v3053 = vmul.f32 %v2173, %v2909
    %v3054 = vmul.f32 %v2176, %v2910
    %v3055 = vmul.f32 %v2178, %v2911
    %v3056 = vmul.f32 %v2181, %v2912
    %v3057 = vmul.f32 %v2183, %v2913
    %v3058 = vmul.f32 %v2186, %v2914
    %v3059 = vmul.f32 %v2188, %v2915
    %v3060 = vmul.f32 %v2191, %v2916
    %v3061 = vmul.f32 %v2193, %v2917
    %v3062 = vmul.f32 %v2257, %v2902
    %v3063 = vmul.f32 %v2259, %v2903
    %v3064 = vmul.f32 %v2262, %v2904
    %v3065 = vmul.f32 %v2264, %v2905
    %v3066 = vmul.f32 %v2267, %v2906
    %v3067 = vmul.f32 %v2269, %v2907
    %v3068 = vmul.f32 %v2272, %v2908
    %v3069 = vmul.f32 %v2274, %v2909
    %v3070 = vmul.f32 %v2277, %v2910
    %v3071 = vmul.f32 %v2279, %v2911
    %v3072 = vmul.f32 %v2282, %v2912
    %v3073 = vmul.f32 %v2284, %v2913
    %v3074 = vmul.f32 %v2287, %v2914
    %v3075 = vmul.f32 %v2289, %v2915
    %v3076 = vmul.f32 %v2292, %v2916
    %v3077 = vmul.f32 %v2294, %v2917
    %v3078 = vmul.f32 %v2358, %v2902
    %v3079 = vmul.f32 %v2360, %v2903
    %v3080 = vmul.f32 %v2363, %v2904
    %v3081 = vmul.f32 %v2365, %v2905
    %v3082 = vmul.f32 %v2368, %v2906
    %v3083 = vmul.f32 %v2370, %v2907
    %v3084 = vmul.f32 %v2373, %v2908
    %v3085 = vmul.f32 %v2375, %v2909
    %v3086 = vmul.f32 %v2378, %v2910
    %v3087 = vmul.f32 %v2380, %v2911
    %v3088 = vmul.f32 %v2383, %v2912
    %v3089 = vmul.f32 %v2385, %v2913
    %v3090 = vmul.f32 %v2388, %v2914
    %v3091 = vmul.f32 %v2390, %v2915
    %v3092 = vmul.f32 %v2393, %v2916
    %v3093 = vmul.f32 %v2395, %v2917
    %v3094 = vmul.f32 %v2459, %v2902
    %v3095 = vmul.f32 %v2461, %v2903
    %v3096 = vmul.f32 %v2464, %v2904
    %v3097 = vmul.f32 %v2466, %v2905
    %v3098 = vmul.f32 %v2469, %v2906
    %v3099 = vmul.f32 %v2471, %v2907
    %v3100 = vmul.f32 %v2474, %v2908
    %v3101 = vmul.f32 %v2476, %v2909
    %v3102 = vmul.f32 %v2479, %v2910
    %v3103 = vmul.f32 %v2481, %v2911
    %v3104 = vmul.f32 %v2484, %v2912
    %v3105 = vmul.f32 %v2486, %v2913
    %v3106 = vmul.f32 %v2489, %v2914
    %v3107 = vmul.f32 %v2491, %v2915
    %v3108 = vmul.f32 %v2494, %v2916
    %v3109 = vmul.f32 %v2496, %v2917
    %v3110 = vmul.f32 %v2560, %v2902
    %v3111 = vmul.f32 %v2562, %v2903
    %v3112 = vmul.f32 %v2565, %v2904
    %v3113 = vmul.f32 %v2567, %v2905
    %v3114 = vmul.f32 %v2570, %v2906
    %v3115 = vmul.f32 %v2572, %v2907
    %v3116 = vmul.f32 %v2575, %v2908
    %v3117 = vmul.f32 %v2577, %v2909
    %v3118 = vmul.f32 %v2580, %v2910
    %v3119 = vmul.f32 %v2582, %v2911
    %v3120 = vmul.f32 %v2585, %v2912
    %v3121 = vmul.f32 %v2587, %v2913
    %v3122 = vmul.f32 %v2590, %v2914
    %v3123 = vmul.f32 %v2592, %v2915
    %v3124 = vmul.f32 %v2595, %v2916
    %v3125 = vmul.f32 %v2597, %v2917
    %v3126 = vmul.f32 %v2661, %v2902
    %v3127 = vmul.f32 %v2663, %v2903
    %v3128 = vmul.f32 %v2666, %v2904
    %v3129 = vmul.f32 %v2668, %v2905
    %v3130 = vmul.f32 %v2671, %v2906
    %v3131 = vmul.f32 %v2673, %v2907
    %v3132 = vmul.f32 %v2676, %v2908
    %v3133 = vmul.f32 %v2678, %v2909
    %v3134 = vmul.f32 %v2681, %v2910
    %v3135 = vmul.f32 %v2683, %v2911
    %v3136 = vmul.f32 %v2686, %v2912
    %v3137 = vmul.f32 %v2688, %v2913
    %v3138 = vmul.f32 %v2691, %v2914
    %v3139 = vmul.f32 %v2693, %v2915
    %v3140 = vmul.f32 %v2696, %v2916
    %v3141 = vmul.f32 %v2698, %v2917
    %v3142 = vmul.f32 %v2762, %v2902
    %v3143 = vmul.f32 %v2764, %v2903
    %v3144 = vmul.f32 %v2767, %v2904
    %v3145 = vmul.f32 %v2769, %v2905
    %v3146 = vmul.f32 %v2772, %v2906
    %v3147 = vmul.f32 %v2774, %v2907
    %v3148 = vmul.f32 %v2777, %v2908
    %v3149 = vmul.f32 %v2779, %v2909
    %v3150 = vmul.f32 %v2782, %v2910
    %v3151 = vmul.f32 %v2784, %v2911
    %v3152 = vmul.f32 %v2787, %v2912
    %v3153 = vmul.f32 %v2789, %v2913
    %v3154 = vmul.f32 %v2792, %v2914
    %v3155 = vmul.f32 %v2794, %v2915
    %v3156 = vmul.f32 %v2797, %v2916
    %v3157 = vmul.f32 %v2799, %v2917
    %v3158 = vmul.f32 %v2863, %v2902
    %v3159 = vmul.f32 %v2865, %v2903
    %v3160 = vmul.f32 %v2868, %v2904
    %v3161 = vmul.f32 %v2870, %v2905
    %v3162 = vmul.f32 %v2873, %v2906
    %v3163 = vmul.f32 %v2875, %v2907
    %v3164 = vmul.f32 %v2878, %v2908
    %v3165 = vmul.f32 %v2880, %v2909
    %v3166 = vmul.f32 %v2883, %v2910
    %v3167 = vmul.f32 %v2885, %v2911
    %v3168 = vmul.f32 %v2888, %v2912
    %v3169 = vmul.f32 %v2890, %v2913
    %v3170 = vmul.f32 %v2893, %v2914
    %v3171 = vmul.f32 %v2895, %v2915
    %v3172 = vmul.f32 %v2898, %v2916
    %v3173 = vmul.f32 %v2900, %v2917
    %v3174 = vadd.f32 %v1189, %v1190
    %v3175 = vrot.slane %v3174, 4
    %v3176 = vadd.f32 %v3174, %v3175
    %v3177 = vrot.slane %v3176, 2
    %v3178 = vadd.f32 %v3176, %v3177
    %v3179 = vrot.slane %v3178, 1
    %v3180 = vadd.f32 %v3178, %v3179
    %v3181 = vadd.f32 %v1191, %v1192
    %v3182 = vrot.slane %v3181, 4
    %v3183 = vadd.f32 %v3181, %v3182
    %v3184 = vrot.slane %v3183, 2
    %v3185 = vadd.f32 %v3183, %v3184
    %v3186 = vrot.slane %v3185, 1
    %v3187 = vadd.f32 %v3185, %v3186
    %v3188 = vadd.f32 %v1193, %v1194
    %v3189 = vrot.slane %v3188, 4
    %v3190 = vadd.f32 %v3188, %v3189
    %v3191 = vrot.slane %v3190, 2
    %v3192 = vadd.f32 %v3190, %v3191
    %v3193 = vrot.slane %v3192, 1
    %v3194 = vadd.f32 %v3192, %v3193
    %v3195 = vadd.f32 %v1195, %v1196
    %v3196 = vrot.slane %v3195, 4
    %v3197 = vadd.f32 %v3195, %v3196
    %v3198 = vrot.slane %v3197, 2
    %v3199 = vadd.f32 %v3197, %v3198
    %v3200 = vrot.slane %v3199, 1
    %v3201 = vadd.f32 %v3199, %v3200
    %v3202 = vadd.f32 %v1197, %v1198
    %v3203 = vrot.slane %v3202, 4
    %v3204 = vadd.f32 %v3202, %v3203
    %v3205 = vrot.slane %v3204, 2
    %v3206 = vadd.f32 %v3204, %v3205
    %v3207 = vrot.slane %v3206, 1
    %v3208 = vadd.f32 %v3206, %v3207
    %v3209 = vadd.f32 %v1199, %v1200
    %v3210 = vrot.slane %v3209, 4
    %v3211 = vadd.f32 %v3209, %v3210
    %v3212 = vrot.slane %v3211, 2
    %v3213 = vadd.f32 %v3211, %v3212
    %v3214 = vrot.slane %v3213, 1
    %v3215 = vadd.f32 %v3213, %v3214
    %v3216 = vadd.f32 %v1201, %v1202
    %v3217 = vrot.slane %v3216, 4
    %v3218 = vadd.f32 %v3216, %v3217
    %v3219 = vrot.slane %v3218, 2
    %v3220 = vadd.f32 %v3218, %v3219
    %v3221 = vrot.slane %v3220, 1
    %v3222 = vadd.f32 %v3220, %v3221
    %v3223 = vadd.f32 %v1203, %v1204
    %v3224 = vrot.slane %v3223, 4
    %v3225 = vadd.f32 %v3223, %v3224
    %v3226 = vrot.slane %v3225, 2
    %v3227 = vadd.f32 %v3225, %v3226
    %v3228 = vrot.slane %v3227, 1
    %v3229 = vadd.f32 %v3227, %v3228
    %v3230 = vadd.f32 %v1205, %v1206
    %v3231 = vrot.slane %v3230, 4
    %v3232 = vadd.f32 %v3230, %v3231
    %v3233 = vrot.slane %v3232, 2
    %v3234 = vadd.f32 %v3232, %v3233
    %v3235 = vrot.slane %v3234, 1
    %v3236 = vadd.f32 %v3234, %v3235
    %v3237 = vadd.f32 %v1207, %v1208
    %v3238 = vrot.slane %v3237, 4
    %v3239 = vadd.f32 %v3237, %v3238
    %v3240 = vrot.slane %v3239, 2
    %v3241 = vadd.f32 %v3239, %v3240
    %v3242 = vrot.slane %v3241, 1
    %v3243 = vadd.f32 %v3241, %v3242
    %v3244 = vadd.f32 %v1209, %v1210
    %v3245 = vrot.slane %v3244, 4
    %v3246 = vadd.f32 %v3244, %v3245
    %v3247 = vrot.slane %v3246, 2
    %v3248 = vadd.f32 %v3246, %v3247
    %v3249 = vrot.slane %v3248, 1
    %v3250 = vadd.f32 %v3248, %v3249
    %v3251 = vadd.f32 %v1211, %v1212
    %v3252 = vrot.slane %v3251, 4
    %v3253 = vadd.f32 %v3251, %v3252
    %v3254 = vrot.slane %v3253, 2
    %v3255 = vadd.f32 %v3253, %v3254
    %v3256 = vrot.slane %v3255, 1
    %v3257 = vadd.f32 %v3255, %v3256
    %v3258 = vadd.f32 %v1213, %v1214
    %v3259 = vrot.slane %v3258, 4
    %v3260 = vadd.f32 %v3258, %v3259
    %v3261 = vrot.slane %v3260, 2
    %v3262 = vadd.f32 %v3260, %v3261
    %v3263 = vrot.slane %v3262, 1
    %v3264 = vadd.f32 %v3262, %v3263
    %v3265 = vadd.f32 %v1215, %v1216
    %v3266 = vrot.slane %v3265, 4
    %v3267 = vadd.f32 %v3265, %v3266
    %v3268 = vrot.slane %v3267, 2
    %v3269 = vadd.f32 %v3267, %v3268
    %v3270 = vrot.slane %v3269, 1
    %v3271 = vadd.f32 %v3269, %v3270
    %v3272 = vadd.f32 %v1217, %v1218
    %v3273 = vrot.slane %v3272, 4
    %v3274 = vadd.f32 %v3272, %v3273
    %v3275 = vrot.slane %v3274, 2
    %v3276 = vadd.f32 %v3274, %v3275
    %v3277 = vrot.slane %v3276, 1
    %v3278 = vadd.f32 %v3276, %v3277
    %v3279 = vadd.f32 %v1219, %v1220
    %v3280 = vrot.slane %v3279, 4
    %v3281 = vadd.f32 %v3279, %v3280
    %v3282 = vrot.slane %v3281, 2
    %v3283 = vadd.f32 %v3281, %v3282
    %v3284 = vrot.slane %v3283, 1
    %v3285 = vadd.f32 %v3283, %v3284
    %v3286 = vpack.c.bf16 %v2918, %v2918
    %v3287 = vpack.c.bf16 %v2919, %v2919
    %v3288 = vpack.c.bf16 %v2920, %v2920
    %v3289 = vpack.c.bf16 %v2921, %v2921
    %v3290 = vpack.c.bf16 %v2922, %v2922
    %v3291 = vpack.c.bf16 %v2923, %v2923
    %v3292 = vpack.c.bf16 %v2924, %v2924
    %v3293 = vpack.c.bf16 %v2925, %v2925
    %v3294 = vpack.c.bf16 %v2926, %v2926
    %v3295 = vpack.c.bf16 %v2927, %v2927
    %v3296 = vpack.c.bf16 %v2928, %v2928
    %v3297 = vpack.c.bf16 %v2929, %v2929
    %v3298 = vpack.c.bf16 %v2930, %v2930
    %v3299 = vpack.c.bf16 %v2931, %v2931
    %v3300 = vpack.c.bf16 %v2932, %v2932
    %v3301 = vpack.c.bf16 %v2933, %v2933
    %v3302 = vpack.c.bf16 %v2934, %v2934
    %v3303 = vpack.c.bf16 %v2935, %v2935
    %v3304 = vpack.c.bf16 %v2936, %v2936
    %v3305 = vpack.c.bf16 %v2937, %v2937
    %v3306 = vpack.c.bf16 %v2938, %v2938
    %v3307 = vpack.c.bf16 %v2939, %v2939
    %v3308 = vpack.c.bf16 %v2940, %v2940
    %v3309 = vpack.c.bf16 %v2941, %v2941
    %v3310 = vpack.c.bf16 %v2942, %v2942
    %v3311 = vpack.c.bf16 %v2943, %v2943
    %v3312 = vpack.c.bf16 %v2944, %v2944
    %v3313 = vpack.c.bf16 %v2945, %v2945
    %v3314 = vpack.c.bf16 %v2946, %v2946
    %v3315 = vpack.c.bf16 %v2947, %v2947
    %v3316 = vpack.c.bf16 %v2948, %v2948
    %v3317 = vpack.c.bf16 %v2949, %v2949
    %v3318 = vpack.c.bf16 %v2950, %v2950
    %v3319 = vpack.c.bf16 %v2951, %v2951
    %v3320 = vpack.c.bf16 %v2952, %v2952
    %v3321 = vpack.c.bf16 %v2953, %v2953
    %v3322 = vpack.c.bf16 %v2954, %v2954
    %v3323 = vpack.c.bf16 %v2955, %v2955
    %v3324 = vpack.c.bf16 %v2956, %v2956
    %v3325 = vpack.c.bf16 %v2957, %v2957
    %v3326 = vpack.c.bf16 %v2958, %v2958
    %v3327 = vpack.c.bf16 %v2959, %v2959
    %v3328 = vpack.c.bf16 %v2960, %v2960
    %v3329 = vpack.c.bf16 %v2961, %v2961
    %v3330 = vpack.c.bf16 %v2962, %v2962
    %v3331 = vpack.c.bf16 %v2963, %v2963
    %v3332 = vpack.c.bf16 %v2964, %v2964
    %v3333 = vpack.c.bf16 %v2965, %v2965
    %v3334 = vpack.c.bf16 %v2966, %v2966
    %v3335 = vpack.c.bf16 %v2967, %v2967
    %v3336 = vpack.c.bf16 %v2968, %v2968
    %v3337 = vpack.c.bf16 %v2969, %v2969
    %v3338 = vpack.c.bf16 %v2970, %v2970
    %v3339 = vpack.c.bf16 %v2971, %v2971
    %v3340 = vpack.c.bf16 %v2972, %v2972
    %v3341 = vpack.c.bf16 %v2973, %v2973
    %v3342 = vpack.c.bf16 %v2974, %v2974
    %v3343 = vpack.c.bf16 %v2975, %v2975
    %v3344 = vpack.c.bf16 %v2976, %v2976
    %v3345 = vpack.c.bf16 %v2977, %v2977
    %v3346 = vpack.c.bf16 %v2978, %v2978
    %v3347 = vpack.c.bf16 %v2979, %v2979
    %v3348 = vpack.c.bf16 %v2980, %v2980
    %v3349 = vpack.c.bf16 %v2981, %v2981
    %v3350 = vpack.c.bf16 %v2982, %v2982
    %v3351 = vpack.c.bf16 %v2983, %v2983
    %v3352 = vpack.c.bf16 %v2984, %v2984
    %v3353 = vpack.c.bf16 %v2985, %v2985
    %v3354 = vpack.c.bf16 %v2986, %v2986
    %v3355 = vpack.c.bf16 %v2987, %v2987
    %v3356 = vpack.c.bf16 %v2988, %v2988
    %v3357 = vpack.c.bf16 %v2989, %v2989
    %v3358 = vpack.c.bf16 %v2990, %v2990
    %v3359 = vpack.c.bf16 %v2991, %v2991
    %v3360 = vpack.c.bf16 %v2992, %v2992
    %v3361 = vpack.c.bf16 %v2993, %v2993
    %v3362 = vpack.c.bf16 %v2994, %v2994
    %v3363 = vpack.c.bf16 %v2995, %v2995
    %v3364 = vpack.c.bf16 %v2996, %v2996
    %v3365 = vpack.c.bf16 %v2997, %v2997
    %v3366 = vpack.c.bf16 %v2998, %v2998
    %v3367 = vpack.c.bf16 %v2999, %v2999
    %v3368 = vpack.c.bf16 %v3000, %v3000
    %v3369 = vpack.c.bf16 %v3001, %v3001
    %v3370 = vpack.c.bf16 %v3002, %v3002
    %v3371 = vpack.c.bf16 %v3003, %v3003
    %v3372 = vpack.c.bf16 %v3004, %v3004
    %v3373 = vpack.c.bf16 %v3005, %v3005
    %v3374 = vpack.c.bf16 %v3006, %v3006
    %v3375 = vpack.c.bf16 %v3007, %v3007
    %v3376 = vpack.c.bf16 %v3008, %v3008
    %v3377 = vpack.c.bf16 %v3009, %v3009
    %v3378 = vpack.c.bf16 %v3010, %v3010
    %v3379 = vpack.c.bf16 %v3011, %v3011
    %v3380 = vpack.c.bf16 %v3012, %v3012
    %v3381 = vpack.c.bf16 %v3013, %v3013
    %v3382 = vpack.c.bf16 %v3014, %v3014
    %v3383 = vpack.c.bf16 %v3015, %v3015
    %v3384 = vpack.c.bf16 %v3016, %v3016
    %v3385 = vpack.c.bf16 %v3017, %v3017
    %v3386 = vpack.c.bf16 %v3018, %v3018
    %v3387 = vpack.c.bf16 %v3019, %v3019
    %v3388 = vpack.c.bf16 %v3020, %v3020
    %v3389 = vpack.c.bf16 %v3021, %v3021
    %v3390 = vpack.c.bf16 %v3022, %v3022
    %v3391 = vpack.c.bf16 %v3023, %v3023
    %v3392 = vpack.c.bf16 %v3024, %v3024
    %v3393 = vpack.c.bf16 %v3025, %v3025
    %v3394 = vpack.c.bf16 %v3026, %v3026
    %v3395 = vpack.c.bf16 %v3027, %v3027
    %v3396 = vpack.c.bf16 %v3028, %v3028
    %v3397 = vpack.c.bf16 %v3029, %v3029
    %v3398 = vpack.c.bf16 %v3030, %v3030
    %v3399 = vpack.c.bf16 %v3031, %v3031
    %v3400 = vpack.c.bf16 %v3032, %v3032
    %v3401 = vpack.c.bf16 %v3033, %v3033
    %v3402 = vpack.c.bf16 %v3034, %v3034
    %v3403 = vpack.c.bf16 %v3035, %v3035
    %v3404 = vpack.c.bf16 %v3036, %v3036
    %v3405 = vpack.c.bf16 %v3037, %v3037
    %v3406 = vpack.c.bf16 %v3038, %v3038
    %v3407 = vpack.c.bf16 %v3039, %v3039
    %v3408 = vpack.c.bf16 %v3040, %v3040
    %v3409 = vpack.c.bf16 %v3041, %v3041
    %v3410 = vpack.c.bf16 %v3042, %v3042
    %v3411 = vpack.c.bf16 %v3043, %v3043
    %v3412 = vpack.c.bf16 %v3044, %v3044
    %v3413 = vpack.c.bf16 %v3045, %v3045
    %v3414 = vpack.c.bf16 %v3046, %v3046
    %v3415 = vpack.c.bf16 %v3047, %v3047
    %v3416 = vpack.c.bf16 %v3048, %v3048
    %v3417 = vpack.c.bf16 %v3049, %v3049
    %v3418 = vpack.c.bf16 %v3050, %v3050
    %v3419 = vpack.c.bf16 %v3051, %v3051
    %v3420 = vpack.c.bf16 %v3052, %v3052
    %v3421 = vpack.c.bf16 %v3053, %v3053
    %v3422 = vpack.c.bf16 %v3054, %v3054
    %v3423 = vpack.c.bf16 %v3055, %v3055
    %v3424 = vpack.c.bf16 %v3056, %v3056
    %v3425 = vpack.c.bf16 %v3057, %v3057
    %v3426 = vpack.c.bf16 %v3058, %v3058
    %v3427 = vpack.c.bf16 %v3059, %v3059
    %v3428 = vpack.c.bf16 %v3060, %v3060
    %v3429 = vpack.c.bf16 %v3061, %v3061
    %v3430 = vpack.c.bf16 %v3062, %v3062
    %v3431 = vpack.c.bf16 %v3063, %v3063
    %v3432 = vpack.c.bf16 %v3064, %v3064
    %v3433 = vpack.c.bf16 %v3065, %v3065
    %v3434 = vpack.c.bf16 %v3066, %v3066
    %v3435 = vpack.c.bf16 %v3067, %v3067
    %v3436 = vpack.c.bf16 %v3068, %v3068
    %v3437 = vpack.c.bf16 %v3069, %v3069
    %v3438 = vpack.c.bf16 %v3070, %v3070
    %v3439 = vpack.c.bf16 %v3071, %v3071
    %v3440 = vpack.c.bf16 %v3072, %v3072
    %v3441 = vpack.c.bf16 %v3073, %v3073
    %v3442 = vpack.c.bf16 %v3074, %v3074
    %v3443 = vpack.c.bf16 %v3075, %v3075
    %v3444 = vpack.c.bf16 %v3076, %v3076
    %v3445 = vpack.c.bf16 %v3077, %v3077
    %v3446 = vpack.c.bf16 %v3078, %v3078
    %v3447 = vpack.c.bf16 %v3079, %v3079
    %v3448 = vpack.c.bf16 %v3080, %v3080
    %v3449 = vpack.c.bf16 %v3081, %v3081
    %v3450 = vpack.c.bf16 %v3082, %v3082
    %v3451 = vpack.c.bf16 %v3083, %v3083
    %v3452 = vpack.c.bf16 %v3084, %v3084
    %v3453 = vpack.c.bf16 %v3085, %v3085
    %v3454 = vpack.c.bf16 %v3086, %v3086
    %v3455 = vpack.c.bf16 %v3087, %v3087
    %v3456 = vpack.c.bf16 %v3088, %v3088
    %v3457 = vpack.c.bf16 %v3089, %v3089
    %v3458 = vpack.c.bf16 %v3090, %v3090
    %v3459 = vpack.c.bf16 %v3091, %v3091
    %v3460 = vpack.c.bf16 %v3092, %v3092
    %v3461 = vpack.c.bf16 %v3093, %v3093
    %v3462 = vpack.c.bf16 %v3094, %v3094
    %v3463 = vpack.c.bf16 %v3095, %v3095
    %v3464 = vpack.c.bf16 %v3096, %v3096
    %v3465 = vpack.c.bf16 %v3097, %v3097
    %v3466 = vpack.c.bf16 %v3098, %v3098
    %v3467 = vpack.c.bf16 %v3099, %v3099
    %v3468 = vpack.c.bf16 %v3100, %v3100
    %v3469 = vpack.c.bf16 %v3101, %v3101
    %v3470 = vpack.c.bf16 %v3102, %v3102
    %v3471 = vpack.c.bf16 %v3103, %v3103
    %v3472 = vpack.c.bf16 %v3104, %v3104
    %v3473 = vpack.c.bf16 %v3105, %v3105
    %v3474 = vpack.c.bf16 %v3106, %v3106
    %v3475 = vpack.c.bf16 %v3107, %v3107
    %v3476 = vpack.c.bf16 %v3108, %v3108
    %v3477 = vpack.c.bf16 %v3109, %v3109
    %v3478 = vpack.c.bf16 %v3110, %v3110
    %v3479 = vpack.c.bf16 %v3111, %v3111
    %v3480 = vpack.c.bf16 %v3112, %v3112
    %v3481 = vpack.c.bf16 %v3113, %v3113
    %v3482 = vpack.c.bf16 %v3114, %v3114
    %v3483 = vpack.c.bf16 %v3115, %v3115
    %v3484 = vpack.c.bf16 %v3116, %v3116
    %v3485 = vpack.c.bf16 %v3117, %v3117
    %v3486 = vpack.c.bf16 %v3118, %v3118
    %v3487 = vpack.c.bf16 %v3119, %v3119
    %v3488 = vpack.c.bf16 %v3120, %v3120
    %v3489 = vpack.c.bf16 %v3121, %v3121
    %v3490 = vpack.c.bf16 %v3122, %v3122
    %v3491 = vpack.c.bf16 %v3123, %v3123
    %v3492 = vpack.c.bf16 %v3124, %v3124
    %v3493 = vpack.c.bf16 %v3125, %v3125
    %v3494 = vpack.c.bf16 %v3126, %v3126
    %v3495 = vpack.c.bf16 %v3127, %v3127
    %v3496 = vpack.c.bf16 %v3128, %v3128
    %v3497 = vpack.c.bf16 %v3129, %v3129
    %v3498 = vpack.c.bf16 %v3130, %v3130
    %v3499 = vpack.c.bf16 %v3131, %v3131
    %v3500 = vpack.c.bf16 %v3132, %v3132
    %v3501 = vpack.c.bf16 %v3133, %v3133
    %v3502 = vpack.c.bf16 %v3134, %v3134
    %v3503 = vpack.c.bf16 %v3135, %v3135
    %v3504 = vpack.c.bf16 %v3136, %v3136
    %v3505 = vpack.c.bf16 %v3137, %v3137
    %v3506 = vpack.c.bf16 %v3138, %v3138
    %v3507 = vpack.c.bf16 %v3139, %v3139
    %v3508 = vpack.c.bf16 %v3140, %v3140
    %v3509 = vpack.c.bf16 %v3141, %v3141
    %v3510 = vpack.c.bf16 %v3142, %v3142
    %v3511 = vpack.c.bf16 %v3143, %v3143
    %v3512 = vpack.c.bf16 %v3144, %v3144
    %v3513 = vpack.c.bf16 %v3145, %v3145
    %v3514 = vpack.c.bf16 %v3146, %v3146
    %v3515 = vpack.c.bf16 %v3147, %v3147
    %v3516 = vpack.c.bf16 %v3148, %v3148
    %v3517 = vpack.c.bf16 %v3149, %v3149
    %v3518 = vpack.c.bf16 %v3150, %v3150
    %v3519 = vpack.c.bf16 %v3151, %v3151
    %v3520 = vpack.c.bf16 %v3152, %v3152
    %v3521 = vpack.c.bf16 %v3153, %v3153
    %v3522 = vpack.c.bf16 %v3154, %v3154
    %v3523 = vpack.c.bf16 %v3155, %v3155
    %v3524 = vpack.c.bf16 %v3156, %v3156
    %v3525 = vpack.c.bf16 %v3157, %v3157
    %v3526 = vpack.c.bf16 %v3158, %v3158
    %v3527 = vpack.c.bf16 %v3159, %v3159
    %v3528 = vpack.c.bf16 %v3160, %v3160
    %v3529 = vpack.c.bf16 %v3161, %v3161
    %v3530 = vpack.c.bf16 %v3162, %v3162
    %v3531 = vpack.c.bf16 %v3163, %v3163
    %v3532 = vpack.c.bf16 %v3164, %v3164
    %v3533 = vpack.c.bf16 %v3165, %v3165
    %v3534 = vpack.c.bf16 %v3166, %v3166
    %v3535 = vpack.c.bf16 %v3167, %v3167
    %v3536 = vpack.c.bf16 %v3168, %v3168
    %v3537 = vpack.c.bf16 %v3169, %v3169
    %v3538 = vpack.c.bf16 %v3170, %v3170
    %v3539 = vpack.c.bf16 %v3171, %v3171
    %v3540 = vpack.c.bf16 %v3172, %v3172
    %v3541 = vpack.c.bf16 %v3173, %v3173
    %3542 = vst [vmem:[#allocation12] sm:$0xf] %v3286
    %3543 = vst [vmem:[#allocation12 + $0x4] sm:$0xf] %v3287
    %3544 = vst [vmem:[#allocation12 + $0x8] sm:$0xf] %v3288
    %3545 = vst [vmem:[#allocation12 + $0xc] sm:$0xf] %v3289
    %3546 = vst [vmem:[#allocation12 + $0x10] sm:$0xf] %v3290
    %3547 = vst [vmem:[#allocation12 + $0x14] sm:$0xf] %v3291
    %3548 = vst [vmem:[#allocation12 + $0x18] sm:$0xf] %v3292
    %3549 = vst [vmem:[#allocation12 + $0x1c] sm:$0xf] %v3293
    %3550 = vst [vmem:[#allocation12 + $0x20] sm:$0xf] %v3294
    %3551 = vst [vmem:[#allocation12 + $0x24] sm:$0xf] %v3295
    %3552 = vst [vmem:[#allocation12 + $0x28] sm:$0xf] %v3296
    %3553 = vst [vmem:[#allocation12 + $0x2c] sm:$0xf] %v3297
    %3554 = vst [vmem:[#allocation12 + $0x30] sm:$0xf] %v3298
    %3555 = vst [vmem:[#allocation12 + $0x34] sm:$0xf] %v3299
    %3556 = vst [vmem:[#allocation12 + $0x38] sm:$0xf] %v3300
    %3557 = vst [vmem:[#allocation12 + $0x3c] sm:$0xf] %v3301
    %3558 = vst [vmem:[#allocation12 + $0x48] sm:$0xf] %v3302
    %3559 = vst [vmem:[#allocation12 + $0x4c] sm:$0xf] %v3303
    %3560 = vst [vmem:[#allocation12 + $0x50] sm:$0xf] %v3304
    %3561 = vst [vmem:[#allocation12 + $0x54] sm:$0xf] %v3305
    %3562 = vst [vmem:[#allocation12 + $0x58] sm:$0xf] %v3306
    %3563 = vst [vmem:[#allocation12 + $0x5c] sm:$0xf] %v3307
    %3564 = vst [vmem:[#allocation12 + $0x60] sm:$0xf] %v3308
    %3565 = vst [vmem:[#allocation12 + $0x64] sm:$0xf] %v3309
    %3566 = vst [vmem:[#allocation12 + $0x68] sm:$0xf] %v3310
    %3567 = vst [vmem:[#allocation12 + $0x6c] sm:$0xf] %v3311
    %3568 = vst [vmem:[#allocation12 + $0x70] sm:$0xf] %v3312
    %3569 = vst [vmem:[#allocation12 + $0x74] sm:$0xf] %v3313
    %3570 = vst [vmem:[#allocation12 + $0x78] sm:$0xf] %v3314
    %3571 = vst [vmem:[#allocation12 + $0x7c] sm:$0xf] %v3315
    %3572 = vst [vmem:[#allocation12 + $0x80] sm:$0xf] %v3316
    %3573 = vst [vmem:[#allocation12 + $0x84] sm:$0xf] %v3317
    %3574 = vst [vmem:[#allocation12 + $0x90] sm:$0xf] %v3318
    %3575 = vst [vmem:[#allocation12 + $0x94] sm:$0xf] %v3319
    %3576 = vst [vmem:[#allocation12 + $0x98] sm:$0xf] %v3320
    %3577 = vst [vmem:[#allocation12 + $0x9c] sm:$0xf] %v3321
    %3578 = vst [vmem:[#allocation12 + $0xa0] sm:$0xf] %v3322
    %3579 = vst [vmem:[#allocation12 + $0xa4] sm:$0xf] %v3323
    %3580 = vst [vmem:[#allocation12 + $0xa8] sm:$0xf] %v3324
    %3581 = vst [vmem:[#allocation12 + $0xac] sm:$0xf] %v3325
    %3582 = vst [vmem:[#allocation12 + $0xb0] sm:$0xf] %v3326
    %3583 = vst [vmem:[#allocation12 + $0xb4] sm:$0xf] %v3327
    %3584 = vst [vmem:[#allocation12 + $0xb8] sm:$0xf] %v3328
    %3585 = vst [vmem:[#allocation12 + $0xbc] sm:$0xf] %v3329
    %3586 = vst [vmem:[#allocation12 + $0xc0] sm:$0xf] %v3330
    %3587 = vst [vmem:[#allocation12 + $0xc4] sm:$0xf] %v3331
    %3588 = vst [vmem:[#allocation12 + $0xc8] sm:$0xf] %v3332
    %3589 = vst [vmem:[#allocation12 + $0xcc] sm:$0xf] %v3333
    %3590 = vst [vmem:[#allocation12 + $0xd8] sm:$0xf] %v3334
    %3591 = vst [vmem:[#allocation12 + $0xdc] sm:$0xf] %v3335
    %3592 = vst [vmem:[#allocation12 + $0xe0] sm:$0xf] %v3336
    %3593 = vst [vmem:[#allocation12 + $0xe4] sm:$0xf] %v3337
    %3594 = vst [vmem:[#allocation12 + $0xe8] sm:$0xf] %v3338
    %3595 = vst [vmem:[#allocation12 + $0xec] sm:$0xf] %v3339
    %3596 = vst [vmem:[#allocation12 + $0xf0] sm:$0xf] %v3340
    %3597 = vst [vmem:[#allocation12 + $0xf4] sm:$0xf] %v3341
    %3598 = vst [vmem:[#allocation12 + $0xf8] sm:$0xf] %v3342
    %3599 = vst [vmem:[#allocation12 + $0xfc] sm:$0xf] %v3343
    %3600 = vst [vmem:[#allocation12 + $0x100] sm:$0xf] %v3344
    %3601 = vst [vmem:[#allocation12 + $0x104] sm:$0xf] %v3345
    %3602 = vst [vmem:[#allocation12 + $0x108] sm:$0xf] %v3346
    %3603 = vst [vmem:[#allocation12 + $0x10c] sm:$0xf] %v3347
    %3604 = vst [vmem:[#allocation12 + $0x110] sm:$0xf] %v3348
    %3605 = vst [vmem:[#allocation12 + $0x114] sm:$0xf] %v3349
    %3606 = vst [vmem:[#allocation12 + $0x120] sm:$0xf] %v3350
    %3607 = vst [vmem:[#allocation12 + $0x124] sm:$0xf] %v3351
    %3608 = vst [vmem:[#allocation12 + $0x128] sm:$0xf] %v3352
    %3609 = vst [vmem:[#allocation12 + $0x12c] sm:$0xf] %v3353
    %3610 = vst [vmem:[#allocation12 + $0x130] sm:$0xf] %v3354
    %3611 = vst [vmem:[#allocation12 + $0x134] sm:$0xf] %v3355
    %3612 = vst [vmem:[#allocation12 + $0x138] sm:$0xf] %v3356
    %3613 = vst [vmem:[#allocation12 + $0x13c] sm:$0xf] %v3357
    %3614 = vst [vmem:[#allocation12 + $0x140] sm:$0xf] %v3358
    %3615 = vst [vmem:[#allocation12 + $0x144] sm:$0xf] %v3359
    %3616 = vst [vmem:[#allocation12 + $0x148] sm:$0xf] %v3360
    %3617 = vst [vmem:[#allocation12 + $0x14c] sm:$0xf] %v3361
    %3618 = vst [vmem:[#allocation12 + $0x150] sm:$0xf] %v3362
    %3619 = vst [vmem:[#allocation12 + $0x154] sm:$0xf] %v3363
    %3620 = vst [vmem:[#allocation12 + $0x158] sm:$0xf] %v3364
    %3621 = vst [vmem:[#allocation12 + $0x15c] sm:$0xf] %v3365
    %3622 = vst [vmem:[#allocation12 + $0x168] sm:$0xf] %v3366
    %3623 = vst [vmem:[#allocation12 + $0x16c] sm:$0xf] %v3367
    %3624 = vst [vmem:[#allocation12 + $0x170] sm:$0xf] %v3368
    %3625 = vst [vmem:[#allocation12 + $0x174] sm:$0xf] %v3369
    %3626 = vst [vmem:[#allocation12 + $0x178] sm:$0xf] %v3370
    %3627 = vst [vmem:[#allocation12 + $0x17c] sm:$0xf] %v3371
    %3628 = vst [vmem:[#allocation12 + $0x180] sm:$0xf] %v3372
    %3629 = vst [vmem:[#allocation12 + $0x184] sm:$0xf] %v3373
    %3630 = vst [vmem:[#allocation12 + $0x188] sm:$0xf] %v3374
    %3631 = vst [vmem:[#allocation12 + $0x18c] sm:$0xf] %v3375
    %3632 = vst [vmem:[#allocation12 + $0x190] sm:$0xf] %v3376
    %3633 = vst [vmem:[#allocation12 + $0x194] sm:$0xf] %v3377
    %3634 = vst [vmem:[#allocation12 + $0x198] sm:$0xf] %v3378
    %3635 = vst [vmem:[#allocation12 + $0x19c] sm:$0xf] %v3379
    %3636 = vst [vmem:[#allocation12 + $0x1a0] sm:$0xf] %v3380
    %3637 = vst [vmem:[#allocation12 + $0x1a4] sm:$0xf] %v3381
    %3638 = vst [vmem:[#allocation12 + $0x1b0] sm:$0xf] %v3382
    %3639 = vst [vmem:[#allocation12 + $0x1b4] sm:$0xf] %v3383
    %3640 = vst [vmem:[#allocation12 + $0x1b8] sm:$0xf] %v3384
    %3641 = vst [vmem:[#allocation12 + $0x1bc] sm:$0xf] %v3385
    %3642 = vst [vmem:[#allocation12 + $0x1c0] sm:$0xf] %v3386
    %3643 = vst [vmem:[#allocation12 + $0x1c4] sm:$0xf] %v3387
    %3644 = vst [vmem:[#allocation12 + $0x1c8] sm:$0xf] %v3388
    %3645 = vst [vmem:[#allocation12 + $0x1cc] sm:$0xf] %v3389
    %3646 = vst [vmem:[#allocation12 + $0x1d0] sm:$0xf] %v3390
    %3647 = vst [vmem:[#allocation12 + $0x1d4] sm:$0xf] %v3391
    %3648 = vst [vmem:[#allocation12 + $0x1d8] sm:$0xf] %v3392
    %3649 = vst [vmem:[#allocation12 + $0x1dc] sm:$0xf] %v3393
    %3650 = vst [vmem:[#allocation12 + $0x1e0] sm:$0xf] %v3394
    %3651 = vst [vmem:[#allocation12 + $0x1e4] sm:$0xf] %v3395
    %3652 = vst [vmem:[#allocation12 + $0x1e8] sm:$0xf] %v3396
    %3653 = vst [vmem:[#allocation12 + $0x1ec] sm:$0xf] %v3397
    %3654 = vst [vmem:[#allocation12 + $0x1f8] sm:$0xf] %v3398
    %3655 = vst [vmem:[#allocation12 + $0x1fc] sm:$0xf] %v3399
    %3656 = vst [vmem:[#allocation12 + $0x200] sm:$0xf] %v3400
    %3657 = vst [vmem:[#allocation12 + $0x204] sm:$0xf] %v3401
    %3658 = vst [vmem:[#allocation12 + $0x208] sm:$0xf] %v3402
    %3659 = vst [vmem:[#allocation12 + $0x20c] sm:$0xf] %v3403
    %3660 = vst [vmem:[#allocation12 + $0x210] sm:$0xf] %v3404
    %3661 = vst [vmem:[#allocation12 + $0x214] sm:$0xf] %v3405
    %3662 = vst [vmem:[#allocation12 + $0x218] sm:$0xf] %v3406
    %3663 = vst [vmem:[#allocation12 + $0x21c] sm:$0xf] %v3407
    %3664 = vst [vmem:[#allocation12 + $0x220] sm:$0xf] %v3408
    %3665 = vst [vmem:[#allocation12 + $0x224] sm:$0xf] %v3409
    %3666 = vst [vmem:[#allocation12 + $0x228] sm:$0xf] %v3410
    %3667 = vst [vmem:[#allocation12 + $0x22c] sm:$0xf] %v3411
    %3668 = vst [vmem:[#allocation12 + $0x230] sm:$0xf] %v3412
    %3669 = vst [vmem:[#allocation12 + $0x234] sm:$0xf] %v3413
    %3670 = vst [vmem:[#allocation12 + $0x240] sm:$0xf] %v3414
    %3671 = vst [vmem:[#allocation12 + $0x244] sm:$0xf] %v3415
    %3672 = vst [vmem:[#allocation12 + $0x248] sm:$0xf] %v3416
    %3673 = vst [vmem:[#allocation12 + $0x24c] sm:$0xf] %v3417
    %3674 = vst [vmem:[#allocation12 + $0x250] sm:$0xf] %v3418
    %3675 = vst [vmem:[#allocation12 + $0x254] sm:$0xf] %v3419
    %3676 = vst [vmem:[#allocation12 + $0x258] sm:$0xf] %v3420
    %3677 = vst [vmem:[#allocation12 + $0x25c] sm:$0xf] %v3421
    %3678 = vst [vmem:[#allocation12 + $0x260] sm:$0xf] %v3422
    %3679 = vst [vmem:[#allocation12 + $0x264] sm:$0xf] %v3423
    %3680 = vst [vmem:[#allocation12 + $0x268] sm:$0xf] %v3424
    %3681 = vst [vmem:[#allocation12 + $0x26c] sm:$0xf] %v3425
    %3682 = vst [vmem:[#allocation12 + $0x270] sm:$0xf] %v3426
    %3683 = vst [vmem:[#allocation12 + $0x274] sm:$0xf] %v3427
    %3684 = vst [vmem:[#allocation12 + $0x278] sm:$0xf] %v3428
    %3685 = vst [vmem:[#allocation12 + $0x27c] sm:$0xf] %v3429
    %3686 = vst [vmem:[#allocation12 + $0x288] sm:$0xf] %v3430
    %3687 = vst [vmem:[#allocation12 + $0x28c] sm:$0xf] %v3431
    %3688 = vst [vmem:[#allocation12 + $0x290] sm:$0xf] %v3432
    %3689 = vst [vmem:[#allocation12 + $0x294] sm:$0xf] %v3433
    %3690 = vst [vmem:[#allocation12 + $0x298] sm:$0xf] %v3434
    %3691 = vst [vmem:[#allocation12 + $0x29c] sm:$0xf] %v3435
    %3692 = vst [vmem:[#allocation12 + $0x2a0] sm:$0xf] %v3436
    %3693 = vst [vmem:[#allocation12 + $0x2a4] sm:$0xf] %v3437
    %3694 = vst [vmem:[#allocation12 + $0x2a8] sm:$0xf] %v3438
    %3695 = vst [vmem:[#allocation12 + $0x2ac] sm:$0xf] %v3439
    %3696 = vst [vmem:[#allocation12 + $0x2b0] sm:$0xf] %v3440
    %3697 = vst [vmem:[#allocation12 + $0x2b4] sm:$0xf] %v3441
    %3698 = vst [vmem:[#allocation12 + $0x2b8] sm:$0xf] %v3442
    %3699 = vst [vmem:[#allocation12 + $0x2bc] sm:$0xf] %v3443
    %3700 = vst [vmem:[#allocation12 + $0x2c0] sm:$0xf] %v3444
    %3701 = vst [vmem:[#allocation12 + $0x2c4] sm:$0xf] %v3445
    %3702 = vst [vmem:[#allocation12 + $0x2d0] sm:$0xf] %v3446
    %3703 = vst [vmem:[#allocation12 + $0x2d4] sm:$0xf] %v3447
    %3704 = vst [vmem:[#allocation12 + $0x2d8] sm:$0xf] %v3448
    %3705 = vst [vmem:[#allocation12 + $0x2dc] sm:$0xf] %v3449
    %3706 = vst [vmem:[#allocation12 + $0x2e0] sm:$0xf] %v3450
    %3707 = vst [vmem:[#allocation12 + $0x2e4] sm:$0xf] %v3451
    %3708 = vst [vmem:[#allocation12 + $0x2e8] sm:$0xf] %v3452
    %3709 = vst [vmem:[#allocation12 + $0x2ec] sm:$0xf] %v3453
    %3710 = vst [vmem:[#allocation12 + $0x2f0] sm:$0xf] %v3454
    %3711 = vst [vmem:[#allocation12 + $0x2f4] sm:$0xf] %v3455
    %3712 = vst [vmem:[#allocation12 + $0x2f8] sm:$0xf] %v3456
    %3713 = vst [vmem:[#allocation12 + $0x2fc] sm:$0xf] %v3457
    %3714 = vst [vmem:[#allocation12 + $0x300] sm:$0xf] %v3458
    %3715 = vst [vmem:[#allocation12 + $0x304] sm:$0xf] %v3459
    %3716 = vst [vmem:[#allocation12 + $0x308] sm:$0xf] %v3460
    %3717 = vst [vmem:[#allocation12 + $0x30c] sm:$0xf] %v3461
    %3718 = vst [vmem:[#allocation12 + $0x318] sm:$0xf] %v3462
    %3719 = vst [vmem:[#allocation12 + $0x31c] sm:$0xf] %v3463
    %3720 = vst [vmem:[#allocation12 + $0x320] sm:$0xf] %v3464
    %3721 = vst [vmem:[#allocation12 + $0x324] sm:$0xf] %v3465
    %3722 = vst [vmem:[#allocation12 + $0x328] sm:$0xf] %v3466
    %3723 = vst [vmem:[#allocation12 + $0x32c] sm:$0xf] %v3467
    %3724 = vst [vmem:[#allocation12 + $0x330] sm:$0xf] %v3468
    %3725 = vst [vmem:[#allocation12 + $0x334] sm:$0xf] %v3469
    %3726 = vst [vmem:[#allocation12 + $0x338] sm:$0xf] %v3470
    %3727 = vst [vmem:[#allocation12 + $0x33c] sm:$0xf] %v3471
    %3728 = vst [vmem:[#allocation12 + $0x340] sm:$0xf] %v3472
    %3729 = vst [vmem:[#allocation12 + $0x344] sm:$0xf] %v3473
    %3730 = vst [vmem:[#allocation12 + $0x348] sm:$0xf] %v3474
    %3731 = vst [vmem:[#allocation12 + $0x34c] sm:$0xf] %v3475
    %3732 = vst [vmem:[#allocation12 + $0x350] sm:$0xf] %v3476
    %3733 = vst [vmem:[#allocation12 + $0x354] sm:$0xf] %v3477
    %3734 = vst [vmem:[#allocation12 + $0x360] sm:$0xf] %v3478
    %3735 = vst [vmem:[#allocation12 + $0x364] sm:$0xf] %v3479
    %3736 = vst [vmem:[#allocation12 + $0x368] sm:$0xf] %v3480
    %3737 = vst [vmem:[#allocation12 + $0x36c] sm:$0xf] %v3481
    %3738 = vst [vmem:[#allocation12 + $0x370] sm:$0xf] %v3482
    %3739 = vst [vmem:[#allocation12 + $0x374] sm:$0xf] %v3483
    %3740 = vst [vmem:[#allocation12 + $0x378] sm:$0xf] %v3484
    %3741 = vst [vmem:[#allocation12 + $0x37c] sm:$0xf] %v3485
    %3742 = vst [vmem:[#allocation12 + $0x380] sm:$0xf] %v3486
    %3743 = vst [vmem:[#allocation12 + $0x384] sm:$0xf] %v3487
    %3744 = vst [vmem:[#allocation12 + $0x388] sm:$0xf] %v3488
    %3745 = vst [vmem:[#allocation12 + $0x38c] sm:$0xf] %v3489
    %3746 = vst [vmem:[#allocation12 + $0x390] sm:$0xf] %v3490
    %3747 = vst [vmem:[#allocation12 + $0x394] sm:$0xf] %v3491
    %3748 = vst [vmem:[#allocation12 + $0x398] sm:$0xf] %v3492
    %3749 = vst [vmem:[#allocation12 + $0x39c] sm:$0xf] %v3493
    %3750 = vst [vmem:[#allocation12 + $0x3a8] sm:$0xf] %v3494
    %3751 = vst [vmem:[#allocation12 + $0x3ac] sm:$0xf] %v3495
    %3752 = vst [vmem:[#allocation12 + $0x3b0] sm:$0xf] %v3496
    %3753 = vst [vmem:[#allocation12 + $0x3b4] sm:$0xf] %v3497
    %3754 = vst [vmem:[#allocation12 + $0x3b8] sm:$0xf] %v3498
    %3755 = vst [vmem:[#allocation12 + $0x3bc] sm:$0xf] %v3499
    %3756 = vst [vmem:[#allocation12 + $0x3c0] sm:$0xf] %v3500
    %3757 = vst [vmem:[#allocation12 + $0x3c4] sm:$0xf] %v3501
    %3758 = vst [vmem:[#allocation12 + $0x3c8] sm:$0xf] %v3502
    %3759 = vst [vmem:[#allocation12 + $0x3cc] sm:$0xf] %v3503
    %3760 = vst [vmem:[#allocation12 + $0x3d0] sm:$0xf] %v3504
    %3761 = vst [vmem:[#allocation12 + $0x3d4] sm:$0xf] %v3505
    %3762 = vst [vmem:[#allocation12 + $0x3d8] sm:$0xf] %v3506
    %3763 = vst [vmem:[#allocation12 + $0x3dc] sm:$0xf] %v3507
    %3764 = vst [vmem:[#allocation12 + $0x3e0] sm:$0xf] %v3508
    %3765 = vst [vmem:[#allocation12 + $0x3e4] sm:$0xf] %v3509
    %3766 = vst [vmem:[#allocation12 + $0x3f0] sm:$0xf] %v3510
    %3767 = vst [vmem:[#allocation12 + $0x3f4] sm:$0xf] %v3511
    %3768 = vst [vmem:[#allocation12 + $0x3f8] sm:$0xf] %v3512
    %3769 = vst [vmem:[#allocation12 + $0x3fc] sm:$0xf] %v3513
    %3770 = vst [vmem:[#allocation12 + $0x400] sm:$0xf] %v3514
    %3771 = vst [vmem:[#allocation12 + $0x404] sm:$0xf] %v3515
    %3772 = vst [vmem:[#allocation12 + $0x408] sm:$0xf] %v3516
    %3773 = vst [vmem:[#allocation12 + $0x40c] sm:$0xf] %v3517
    %3774 = vst [vmem:[#allocation12 + $0x410] sm:$0xf] %v3518
    %3775 = vst [vmem:[#allocation12 + $0x414] sm:$0xf] %v3519
    %3776 = vst [vmem:[#allocation12 + $0x418] sm:$0xf] %v3520
    %3777 = vst [vmem:[#allocation12 + $0x41c] sm:$0xf] %v3521
    %3778 = vst [vmem:[#allocation12 + $0x420] sm:$0xf] %v3522
    %3779 = vst [vmem:[#allocation12 + $0x424] sm:$0xf] %v3523
    %3780 = vst [vmem:[#allocation12 + $0x428] sm:$0xf] %v3524
    %3781 = vst [vmem:[#allocation12 + $0x42c] sm:$0xf] %v3525
    %3782 = vst [vmem:[#allocation12 + $0x438] sm:$0xf] %v3526
    %3783 = vst [vmem:[#allocation12 + $0x43c] sm:$0xf] %v3527
    %3784 = vst [vmem:[#allocation12 + $0x440] sm:$0xf] %v3528
    %3785 = vst [vmem:[#allocation12 + $0x444] sm:$0xf] %v3529
    %3786 = vst [vmem:[#allocation12 + $0x448] sm:$0xf] %v3530
    %3787 = vst [vmem:[#allocation12 + $0x44c] sm:$0xf] %v3531
    %3788 = vst [vmem:[#allocation12 + $0x450] sm:$0xf] %v3532
    %3789 = vst [vmem:[#allocation12 + $0x454] sm:$0xf] %v3533
    %3790 = vst [vmem:[#allocation12 + $0x458] sm:$0xf] %v3534
    %3791 = vst [vmem:[#allocation12 + $0x45c] sm:$0xf] %v3535
    %3792 = vst [vmem:[#allocation12 + $0x460] sm:$0xf] %v3536
    %3793 = vst [vmem:[#allocation12 + $0x464] sm:$0xf] %v3537
    %3794 = vst [vmem:[#allocation12 + $0x468] sm:$0xf] %v3538
    %3795 = vst [vmem:[#allocation12 + $0x46c] sm:$0xf] %v3539
    %3796 = vst [vmem:[#allocation12 + $0x470] sm:$0xf] %v3540
    %3797 = vst [vmem:[#allocation12 + $0x474] sm:$0xf] %v3541
    %v3798 = vpack.c.bf16 %v3180, %v3180
    %v3799 = vpack.c.bf16 %v3187, %v3187
    %v3800 = vpack.c.bf16 %v3194, %v3194
    %v3801 = vpack.c.bf16 %v3201, %v3201
    %v3802 = vpack.c.bf16 %v3208, %v3208
    %v3803 = vpack.c.bf16 %v3215, %v3215
    %v3804 = vpack.c.bf16 %v3222, %v3222
    %v3805 = vpack.c.bf16 %v3229, %v3229
    %v3806 = vpack.c.bf16 %v3236, %v3236
    %v3807 = vpack.c.bf16 %v3243, %v3243
    %v3808 = vpack.c.bf16 %v3250, %v3250
    %v3809 = vpack.c.bf16 %v3257, %v3257
    %v3810 = vpack.c.bf16 %v3264, %v3264
    %v3811 = vpack.c.bf16 %v3271, %v3271
    %v3812 = vpack.c.bf16 %v3278, %v3278
    %v3813 = vpack.c.bf16 %v3285, %v3285
    %3814 = vst [vmem:[#allocation12 + $0x40] sm:$0xf] %v3798
    %3815 = vst [vmem:[#allocation12 + $0x44] sm:$0xf] %v3798
    %3816 = vst [vmem:[#allocation12 + $0x88] sm:$0xf] %v3799
    %3817 = vst [vmem:[#allocation12 + $0x8c] sm:$0xf] %v3799
    %3818 = vst [vmem:[#allocation12 + $0xd0] sm:$0xf] %v3800
    %3819 = vst [vmem:[#allocation12 + $0xd4] sm:$0xf] %v3800
    %3820 = vst [vmem:[#allocation12 + $0x118] sm:$0xf] %v3801
    %3821 = vst [vmem:[#allocation12 + $0x11c] sm:$0xf] %v3801
    %3822 = vst [vmem:[#allocation12 + $0x160] sm:$0xf] %v3802
    %3823 = vst [vmem:[#allocation12 + $0x164] sm:$0xf] %v3802
    %3824 = vst [vmem:[#allocation12 + $0x1a8] sm:$0xf] %v3803
    %3825 = vst [vmem:[#allocation12 + $0x1ac] sm:$0xf] %v3803
    %3826 = vst [vmem:[#allocation12 + $0x1f0] sm:$0xf] %v3804
    %3827 = vst [vmem:[#allocation12 + $0x1f4] sm:$0xf] %v3804
    %3828 = vst [vmem:[#allocation12 + $0x238] sm:$0xf] %v3805
    %3829 = vst [vmem:[#allocation12 + $0x23c] sm:$0xf] %v3805
    %3830 = vst [vmem:[#allocation12 + $0x280] sm:$0xf] %v3806
    %3831 = vst [vmem:[#allocation12 + $0x284] sm:$0xf] %v3806
    %3832 = vst [vmem:[#allocation12 + $0x2c8] sm:$0xf] %v3807
    %3833 = vst [vmem:[#allocation12 + $0x2cc] sm:$0xf] %v3807
    %3834 = vst [vmem:[#allocation12 + $0x310] sm:$0xf] %v3808
    %3835 = vst [vmem:[#allocation12 + $0x314] sm:$0xf] %v3808
    %3836 = vst [vmem:[#allocation12 + $0x358] sm:$0xf] %v3809
    %3837 = vst [vmem:[#allocation12 + $0x35c] sm:$0xf] %v3809
    %3838 = vst [vmem:[#allocation12 + $0x3a0] sm:$0xf] %v3810
    %3839 = vst [vmem:[#allocation12 + $0x3a4] sm:$0xf] %v3810
    %3840 = vst [vmem:[#allocation12 + $0x3e8] sm:$0xf] %v3811
    %3841 = vst [vmem:[#allocation12 + $0x3ec] sm:$0xf] %v3811
    %3842 = vst [vmem:[#allocation12 + $0x430] sm:$0xf] %v3812
    %3843 = vst [vmem:[#allocation12 + $0x434] sm:$0xf] %v3812
    %3844 = vst [vmem:[#allocation12 + $0x478] sm:$0xf] %v3813
    %3845 = vst [vmem:[#allocation12 + $0x47c] sm:$0xf] %v3813
    %v3846 = vpack.c.bf16 %v1157, %v1157
    %v3847 = vpack.c.bf16 %v1158, %v1158
    %v3848 = vpack.c.bf16 %v1159, %v1159
    %v3849 = vpack.c.bf16 %v1160, %v1160
    %v3850 = vpack.c.bf16 %v1161, %v1161
    %v3851 = vpack.c.bf16 %v1162, %v1162
    %v3852 = vpack.c.bf16 %v1163, %v1163
    %v3853 = vpack.c.bf16 %v1164, %v1164
    %v3854 = vpack.c.bf16 %v1165, %v1165
    %v3855 = vpack.c.bf16 %v1166, %v1166
    %v3856 = vpack.c.bf16 %v1167, %v1167
    %v3857 = vpack.c.bf16 %v1168, %v1168
    %v3858 = vpack.c.bf16 %v1169, %v1169
    %v3859 = vpack.c.bf16 %v1170, %v1170
    %v3860 = vpack.c.bf16 %v1171, %v1171
    %v3861 = vpack.c.bf16 %v1172, %v1172
    %v3862 = vpack.c.bf16 %v1173, %v1173
    %v3863 = vpack.c.bf16 %v1174, %v1174
    %v3864 = vpack.c.bf16 %v1175, %v1175
    %v3865 = vpack.c.bf16 %v1176, %v1176
    %v3866 = vpack.c.bf16 %v1177, %v1177
    %v3867 = vpack.c.bf16 %v1178, %v1178
    %v3868 = vpack.c.bf16 %v1179, %v1179
    %v3869 = vpack.c.bf16 %v1180, %v1180
    %v3870 = vpack.c.bf16 %v1181, %v1181
    %v3871 = vpack.c.bf16 %v1182, %v1182
    %v3872 = vpack.c.bf16 %v1183, %v1183
    %v3873 = vpack.c.bf16 %v1184, %v1184
    %v3874 = vpack.c.bf16 %v1185, %v1185
    %v3875 = vpack.c.bf16 %v1186, %v1186
    %v3876 = vpack.c.bf16 %v1187, %v1187
    %v3877 = vpack.c.bf16 %v1188, %v1188
    %3878 = vst [vmem:[#allocation11] sm:$0xf] %v3846
    %3879 = vst [vmem:[#allocation11 + $0x4] sm:$0xf] %v3847
    %3880 = vst [vmem:[#allocation11 + $0x8] sm:$0xf] %v3848
    %3881 = vst [vmem:[#allocation11 + $0xc] sm:$0xf] %v3849
    %3882 = vst [vmem:[#allocation11 + $0x10] sm:$0xf] %v3850
    %3883 = vst [vmem:[#allocation11 + $0x14] sm:$0xf] %v3851
    %3884 = vst [vmem:[#allocation11 + $0x18] sm:$0xf] %v3852
    %3885 = vst [vmem:[#allocation11 + $0x1c] sm:$0xf] %v3853
    %3886 = vst [vmem:[#allocation11 + $0x20] sm:$0xf] %v3854
    %3887 = vst [vmem:[#allocation11 + $0x24] sm:$0xf] %v3855
    %3888 = vst [vmem:[#allocation11 + $0x28] sm:$0xf] %v3856
    %3889 = vst [vmem:[#allocation11 + $0x2c] sm:$0xf] %v3857
    %3890 = vst [vmem:[#allocation11 + $0x30] sm:$0xf] %v3858
    %3891 = vst [vmem:[#allocation11 + $0x34] sm:$0xf] %v3859
    %3892 = vst [vmem:[#allocation11 + $0x38] sm:$0xf] %v3860
    %3893 = vst [vmem:[#allocation11 + $0x3c] sm:$0xf] %v3861
    %3894 = vst [vmem:[#allocation11 + $0x40] sm:$0xf] %v3862
    %3895 = vst [vmem:[#allocation11 + $0x44] sm:$0xf] %v3863
    %3896 = vst [vmem:[#allocation11 + $0x48] sm:$0xf] %v3864
    %3897 = vst [vmem:[#allocation11 + $0x4c] sm:$0xf] %v3865
    %3898 = vst [vmem:[#allocation11 + $0x50] sm:$0xf] %v3866
    %3899 = vst [vmem:[#allocation11 + $0x54] sm:$0xf] %v3867
    %3900 = vst [vmem:[#allocation11 + $0x58] sm:$0xf] %v3868
    %3901 = vst [vmem:[#allocation11 + $0x5c] sm:$0xf] %v3869
    %3902 = vst [vmem:[#allocation11 + $0x60] sm:$0xf] %v3870
    %3903 = vst [vmem:[#allocation11 + $0x64] sm:$0xf] %v3871
    %3904 = vst [vmem:[#allocation11 + $0x68] sm:$0xf] %v3872
    %3905 = vst [vmem:[#allocation11 + $0x6c] sm:$0xf] %v3873
    %3906 = vst [vmem:[#allocation11 + $0x70] sm:$0xf] %v3874
    %3907 = vst [vmem:[#allocation11 + $0x74] sm:$0xf] %v3875
    %3908 = vst [vmem:[#allocation11 + $0x78] sm:$0xf] %v3876
    %3909 = vst [vmem:[#allocation11 + $0x7c] sm:$0xf] %v3877
    // Predicated region
    $region90: #{tpu_custom_call.1} parent=1 // pred_check
      _
    $region91: #{tpu_custom_call.1} parent=1 // pred_check_branch
      %3911 = sbr.rel (0) target = $region93
    $region92: #{tpu_custom_call.1} parent=1 // pred_region
      %3913 = vsyncadd [#allocation8], 0
      %s3914 = sshll.u32 [#allocation11], 4
      %s3915 = int_to_ptr.vmem [resolvable:$true] %s3914
      %s3916 = sshll.u32 %s6, 4
      %s3917 = int_to_ptr.hbm [resolvable:$true] %s3916
      %3922 = dma.vmem_to_hbm [thread:$0]  %s3915, 2048, %s3917, [#allocation8], 64, 64, 4
    $region93: #{tpu_custom_call.1} parent=1 // pred_fallthru
      _
    // Predicated region
    $region94: #{tpu_custom_call.1} parent=1 // pred_check
      _
    $region95: #{tpu_custom_call.1} parent=1 // pred_check_branch
      %3924 = sbr.rel (0) target = $region97
    $region96: #{tpu_custom_call.1} parent=1 // pred_region
      %3926 = vsyncadd [#allocation13], 0
      %s3927 = sshll.u32 [#allocation12], 4
      %s3928 = int_to_ptr.vmem [resolvable:$true] %s3927
      %s3929 = sshll.u32 %s7, 4
      %s3930 = int_to_ptr.hbm [resolvable:$true] %s3929
      %3935 = dma.vmem_to_hbm [thread:$0]  %s3928, 18432, %s3930, [#allocation13], 64, 64, 4
    $region97: #{tpu_custom_call.1} parent=1 // pred_fallthru
      _
    // Predicated region
    $region98: #{tpu_custom_call.1} parent=1 // pred_check
      _
    $region99: #{tpu_custom_call.1} parent=1 // pred_check_branch
      %3937 = sbr.rel (0) target = $region101
    $region100: #{tpu_custom_call.1} parent=1 // pred_region
      %3939 = dma.done [#allocation8], 2048
    $region101: #{tpu_custom_call.1} parent=1 // pred_fallthru
      _
    // Predicated region
    $region102: #{tpu_custom_call.1} parent=1 // pred_check
      _
    $region103: #{tpu_custom_call.1} parent=1 // pred_check_branch
      %3941 = sbr.rel (0) target = $region105
    $region104: #{tpu_custom_call.1} parent=1 // pred_region
      %3943 = dma.done [#allocation13], 18432
    $region105: #{tpu_custom_call.1} parent=1 // pred_fallthru
      _
    %3944 = vsyncpa [#allocation7], 1
    %3945 = vsyncpa [#allocation10], 1
    %3946 = vsyncpa [#allocation8], 1
    %3947 = vsyncpa [#allocation13], 1
  %3948 = vsyncmov [#allocation3]
  %s3949 = vpop.sfrf %3948
  %p3950 = scmp.eq.s32.totalorder %s3949, 0
  %p3951 = pneg %p3950
  %3953 = shalt.err (%p3951)
  %s3954 = scalar_lea.sflag [#allocation3], 1
  %3955 = vsyncmov %s3954
  %s3956 = vpop.sfrf %3955
  %p3957 = scmp.eq.s32.totalorder %s3956, 0
  %p3958 = pneg %p3957
  %3960 = shalt.err (%p3958)
  %s3961 = scalar_lea.sflag [#allocation3], 2
  %3962 = vsyncmov %s3961
  %s3963 = vpop.sfrf %3962
  %p3964 = scmp.eq.s32.totalorder %s3963, 0
  %p3965 = pneg %p3964
  %3967 = shalt.err (%p3965)
  %s3968 = scalar_lea.sflag [#allocation3], 3
  %3969 = vsyncmov %s3968
  %s3970 = vpop.sfrf %3969
  %p3971 = scmp.eq.s32.totalorder %s3970, 0
  %p3972 = pneg %p3971
  %3974 = shalt.err (%p3972)
  %s3975 = scalar_lea.sflag [#allocation3], 4
  %3976 = vsyncmov %s3975
  %s3977 = vpop.sfrf %3976
  %p3978 = scmp.eq.s32.totalorder %s3977, 0
  %p3979 = pneg %p3978
  %3981 = shalt.err (%p3979)
  %s3982 = scalar_lea.sflag [#allocation3], 5
  %3983 = vsyncmov %s3982
  %s3984 = vpop.sfrf %3983
  %p3985 = scmp.eq.s32.totalorder %s3984, 0
  %p3986 = pneg %p3985
  %3988 = shalt.err (%p3986)
  %s3989 = scalar_lea.sflag [#allocation3], 6
  %3990 = vsyncmov %s3989
  %s3991 = vpop.sfrf %3990
  %p3992 = scmp.eq.s32.totalorder %s3991, 0
  %p3993 = pneg %p3992
  %3995 = shalt.err (%p3993)
  %s3996 = scalar_lea.sflag [#allocation3], 7
  %3997 = vsyncmov %s3996
  %s3998 = vpop.sfrf %3997
  %p3999 = scmp.eq.s32.totalorder %s3998, 0
  %p4000 = pneg %p3999
  %4002 = shalt.err (%p4000)
  %s4003 = scalar_lea.sflag [#allocation3], 8
  %4004 = vsyncmov %s4003
  %s4005 = vpop.sfrf %4004
  %p4006 = scmp.eq.s32.totalorder %s4005, 0
  %p4007 = pneg %p4006
  %4009 = shalt.err (%p4007)
  %s4010 = scalar_lea.sflag [#allocation3], 9
  %4011 = vsyncmov %s4010
  %s4012 = vpop.sfrf %4011
  %p4013 = scmp.eq.s32.totalorder %s4012, 0
  %p4014 = pneg %p4013
  %4016 = shalt.err (%p4014)
  %s4017 = scalar_lea.sflag [#allocation3], 10
  %4018 = vsyncmov %s4017
  %s4019 = vpop.sfrf %4018
  %p4020 = scmp.eq.s32.totalorder %s4019, 0
  %p4021 = pneg %p4020
  %4023 = shalt.err (%p4021)
  %s4024 = scalar_lea.sflag [#allocation3], 11
  %4025 = vsyncmov %s4024
  %s4026 = vpop.sfrf %4025
  %p4027 = scmp.eq.s32.totalorder %s4026, 0
  %p4028 = pneg %p4027
  %4030 = shalt.err (%p4028)
  %s4031 = scalar_lea.sflag [#allocation3], 12
  %4032 = vsyncmov %s4031
  %s4033 = vpop.sfrf %4032
  %p4034 = scmp.eq.s32.totalorder %s4033, 0
  %p4035 = pneg %p4034
  %4037 = shalt.err (%p4035)
  %s4038 = scalar_lea.sflag [#allocation3], 13
  %4039 = vsyncmov %s4038
  %s4040 = vpop.sfrf %4039
  %p4041 = scmp.eq.s32.totalorder %s4040, 0
  %p4042 = pneg %p4041
  %4044 = shalt.err (%p4042)
  %s4045 = scalar_lea.sflag [#allocation3], 14
  %4046 = vsyncmov %s4045
  %s4047 = vpop.sfrf %4046
  %p4048 = scmp.eq.s32.totalorder %s4047, 0
  %p4049 = pneg %p4048
  %4051 = shalt.err (%p4049)
  %s4052 = scalar_lea.sflag [#allocation3], 15
  %4053 = vsyncmov %s4052
  %s4054 = vpop.sfrf %4053
  %p4055 = scmp.eq.s32.totalorder %s4054, 0
  %p4056 = pneg %p4055
  %4058 = shalt.err (%p4056)

</llo_original>
